<compile_context>
chip_gen: v5e
topology: v5e:2x2
jax: 0.10.0
libtpu: 0.0.40
codegen_flags: <defaults>
</compile_context>

<pallas_src>
import functools
import math

import jax
import jax.numpy as jnp
from jax import lax
from jax.experimental import pallas as pl
from jax.experimental.pallas import tpu as pltpu

LANE = 128                    # per-gate padded lane width (one vreg lane group)
_GATE_PERM = (0, 1, 3, 2)     # kernel gate order (i, f, o, g) <- PyTorch (i, f, g, o)


def _round_up(x, m):
  return ((x + m - 1) // m) * m


def _make_encoder_kernel(num_layers, seq_len, hidden_dims, k_hh, hp):
  """Fused multi-layer LSTM encoder kernel (all layers, one grid-less call).

  Ref layout: (x, [wih_l, whh_l, bias_l] * num_layers, y).
    x    : (T, hp)        f32   input, features zero-padded to hp lanes
    wih_l: (hp, 4*hp)     bf16  W_ih^T, gate blocks (i,f,o,g) padded to hp lanes
    whh_l: (k_hh[l], 4*hp) bf16 W_hh^T, contraction dim kept at the REAL hidden
                                 width (rounded to 8) -- no 128-row K padding
    b_l  : (1, 4*hp)      f32   b_ih + b_hh, same padded gate layout
    y    : (T, hp)        f32   last layer's ReLU'd sequence (real in [:H_last])
  """

  def kernel(*refs):
    x_ref = refs[0]
    y_ref = refs[-1]

    seq = x_ref[...]                                    # (T, hp) f32
    h = jnp.zeros((1, hp), jnp.float32)
    c = jnp.zeros((1, hp), jnp.float32)
    lane = lax.broadcasted_iota(jnp.int32, (1, hp), 1)

    for l in range(num_layers):
      wih = refs[1 + 3 * l][...]                        # (hp, 4*hp) bf16
      whh = refs[2 + 3 * l][...]                        # (k_hh[l], 4*hp) bf16
      b = refs[3 + 3 * l][...]                          # (1, 4*hp) f32
      kh = k_hh[l]

      # Hoisted input projection + bias: one dense bf16 MXU matmul per layer.
      gates_x = jnp.dot(seq.astype(jnp.bfloat16), wih,
                        preferred_element_type=jnp.float32) + b

      # Serial recurrence, statically unrolled (T is small).  Only the (1, kh)
      # slice of h hits the MXU each step, so the per-step weight push is
      # kh (= real hidden size) rows, not 128.
      for t in range(seq_len):
        g = gates_x[t:t + 1, :] + jnp.dot(
            h[:, :kh].astype(jnp.bfloat16), whh,
            preferred_element_type=jnp.float32)
        sfm = jax.nn.sigmoid(g[:, :3 * hp])             # i | f | o in one pass
        g_g = jnp.tanh(g[:, 3 * hp:])                   # candidate gate
        c = sfm[:, hp:2 * hp] * c + sfm[:, :hp] * g_g
        h = sfm[:, 2 * hp:3 * hp] * jnp.tanh(c)
        y_ref[t:t + 1, :] = h                           # row store, off chain

      # ReLU the whole (T, hp) slab once (padded lanes provably stay zero).
      seq = jnp.maximum(y_ref[...], 0.0)
      # TODO(synk): inter-layer dropout is identity here (inference mode).

      if l < num_layers - 1:
        # PyTorch forward hands the previous layer's final (un-ReLU'd) states,
        # truncated to half width, to the next LSTM as its initial state.
        half = hidden_dims[l] // 2
        h = jnp.where(lane < half, h, 0.0)
        c = jnp.where(lane < half, c, 0.0)

    y_ref[...] = seq                                    # single lane-dense store

  return kernel


def _pad_gates(mat_t, hp, pad_rows):
  """(rows, 4H) gate-major matrix -> (pad_rows, 4*hp) in kernel gate order
  (i, f, o, g); gate block d's real H columns land at [d*hp, d*hp+H)."""
  rows, four_h = mat_t.shape
  h = four_h // 4
  out = jnp.zeros((pad_rows, 4 * hp), jnp.float32)
  for dst, src in enumerate(_GATE_PERM):
    out = out.at[:rows, dst * hp:dst * hp + h].set(mat_t[:, src * h:(src + 1) * h])
  return out


def init_encoder_params(key, n_features, embedding_dim, num_layers, hp=LANE):
  """Deterministic PyTorch-style LSTM init, pre-padded to the kernel layout."""
  params = []
  hidden_dims = []
  k_hh = []
  in_dim = n_features
  hidden = embedding_dim
  for layer in range(num_layers):
    if layer > 0:
      in_dim = hidden            # previous layer's hidden size
      hidden = hidden // 2
    assert hidden <= hp, f"hidden size {hidden} exceeds per-gate lane width {hp}"
    assert in_dim <= hp, f"input size {in_dim} exceeds per-gate lane width {hp}"
    hidden_dims.append(hidden)
    kh = max(8, _round_up(hidden, 8))     # real contraction width of W_hh
    k_hh.append(kh)

    bound = 1.0 / math.sqrt(hidden)
    key, k1, k2, k3, k4 = jax.random.split(key, 5)
    w_ih = jax.random.uniform(k1, (4 * hidden, in_dim), jnp.float32, -bound, bound)
    w_hh = jax.random.uniform(k2, (4 * hidden, hidden), jnp.float32, -bound, bound)
    b_ih = jax.random.uniform(k3, (4 * hidden,), jnp.float32, -bound, bound)
    b_hh = jax.random.uniform(k4, (4 * hidden,), jnp.float32, -bound, bound)

    params.append({
        "wih": _pad_gates(w_ih.T, hp, hp).astype(jnp.bfloat16),       # (hp, 4hp)
        "whh": _pad_gates(w_hh.T, hp, kh).astype(jnp.bfloat16),       # (kh, 4hp)
        "bias": _pad_gates((b_ih + b_hh).reshape(1, -1), hp, 1),      # (1, 4hp) f32
    })
  return params, hidden_dims, k_hh


def build_encoder_forward(params, hidden_dims, k_hh, seq_len, n_features, hp=LANE):
  """Returns a jitted forward: x (seq, n_features) -> (seq, hidden_dims[-1])."""
  num_layers = len(params)
  kernel = _make_encoder_kernel(num_layers, seq_len, tuple(hidden_dims),
                                tuple(k_hh), hp)

  vmem_spec = functools.partial(pl.BlockSpec, memory_space=pltpu.MemorySpace.VMEM)
  in_specs = [vmem_spec()]
  flat_weights = []
  for p in params:
    in_specs += [vmem_spec(), vmem_spec(), vmem_spec()]
    flat_weights += [p["wih"], p["whh"], p["bias"]]

  call = pl.pallas_call(
      kernel,
      out_shape=jax.ShapeDtypeStruct((seq_len, hp), jnp.float32),
      in_specs=in_specs,
      out_specs=vmem_spec(),
  )

  @jax.jit
  def forward(x):
    x_pad = jnp.zeros((seq_len, hp), jnp.float32).at[:, :n_features].set(x)
    y_pad = call(x_pad, *flat_weights)
    return y_pad[:, :hidden_dims[-1]]

  return forward


if __name__ == "__main__":
  # Small shapes consistent with the module.
  SEQ = 8
  N_FEATURES = 4
  EMBEDDING_DIM = 32
  NUM_LAYERS = 2
  DROPOUT_RATE = 0.1  # identity at inference

  key = jax.random.PRNGKey(0)
  key, xkey = jax.random.split(key)
  x = jax.random.normal(xkey, (SEQ, N_FEATURES), jnp.float32)

  params, hidden_dims, k_hh = init_encoder_params(
      key, N_FEATURES, EMBEDDING_DIM, NUM_LAYERS)
  forward = build_encoder_forward(params, hidden_dims, k_hh, SEQ, N_FEATURES)

  encoded = jax.block_until_ready(forward(x))

  expected_out_dim = EMBEDDING_DIM // (2 ** (NUM_LAYERS - 1))
  assert encoded.shape == (SEQ, expected_out_dim), encoded.shape
  assert bool(jnp.all(encoded >= 0.0)), "ReLU output must be non-negative"
  assert bool(jnp.all(jnp.isfinite(encoded))), "non-finite output"
  print("KERNEL_OK")
</pallas_src>

<mosaic_0001>
module attributes {stable_mosaic.version = 11 : i64} {
  func.func @kernel(%arg0: memref<8x128xf32, #tpu.memory_space<vmem>>, %arg1: memref<128x512xbf16, #tpu.memory_space<vmem>>, %arg2: memref<32x512xbf16, #tpu.memory_space<vmem>>, %arg3: memref<1x512xf32, #tpu.memory_space<vmem>>, %arg4: memref<128x512xbf16, #tpu.memory_space<vmem>>, %arg5: memref<16x512xbf16, #tpu.memory_space<vmem>>, %arg6: memref<1x512xf32, #tpu.memory_space<vmem>>, %arg7: memref<8x128xf32, #tpu.memory_space<vmem>>) attributes {dimension_semantics = [], scalar_prefetch = 0 : i64, scratch_operands = 0 : i64, tpu.core_type = #tpu.core_type<tc>} {
    %c0 = arith.constant 0 : index
    %c0_0 = arith.constant 0 : index
    %0 = vector.load %arg0[%c0, %c0_0] : memref<8x128xf32, #tpu.memory_space<vmem>>, vector<8x128xf32>
    %cst = arith.constant 0.000000e+00 : f32
    %1 = vector.broadcast %cst : f32 to vector<1x128xf32>
    %cst_1 = arith.constant 0.000000e+00 : f32
    %2 = vector.broadcast %cst_1 : f32 to vector<1x128xf32>
    %3 = tpu.iota {dimensions = array<i32: 1>} : vector<1x128xi32>
    %c0_2 = arith.constant 0 : index
    %c0_3 = arith.constant 0 : index
    %4 = vector.load %arg1[%c0_2, %c0_3] : memref<128x512xbf16, #tpu.memory_space<vmem>>, vector<128x512xbf16>
    %c0_4 = arith.constant 0 : index
    %c0_5 = arith.constant 0 : index
    %5 = vector.load %arg2[%c0_4, %c0_5] : memref<32x512xbf16, #tpu.memory_space<vmem>>, vector<32x512xbf16>
    %c0_6 = arith.constant 0 : index
    %c0_7 = arith.constant 0 : index
    %6 = vector.load %arg3[%c0_6, %c0_7] : memref<1x512xf32, #tpu.memory_space<vmem>>, vector<1x512xf32>
    %7 = arith.truncf %0 : vector<8x128xf32> to vector<8x128xbf16>
    %cst_8 = arith.constant dense<0.000000e+00> : vector<8x512xf32>
    %8 = tpu.matmul %7, %4, %cst_8 {dimension_numbers = #tpu.dot_dimension_numbers<[1], [0], [0], [1], [0, 0, 1, 1], [], []>} : vector<8x128xbf16>, vector<128x512xbf16>, vector<8x512xf32> -> vector<8x512xf32>
    %9 = vector.broadcast %6 : vector<1x512xf32> to vector<8x512xf32>
    %10 = arith.addf %8, %9 : vector<8x512xf32>
    %11 = vector.extract_strided_slice %10 {offsets = [0, 0], sizes = [1, 512], strides = [1, 1]} : vector<8x512xf32> to vector<1x512xf32>
    %12 = vector.extract_strided_slice %1 {offsets = [0, 0], sizes = [1, 32], strides = [1, 1]} : vector<1x128xf32> to vector<1x32xf32>
    %13 = arith.truncf %12 : vector<1x32xf32> to vector<1x32xbf16>
    %cst_9 = arith.constant dense<0.000000e+00> : vector<1x512xf32>
    %14 = tpu.matmul %13, %5, %cst_9 {dimension_numbers = #tpu.dot_dimension_numbers<[1], [0], [0], [1], [0, 0, 1, 1], [], []>} : vector<1x32xbf16>, vector<32x512xbf16>, vector<1x512xf32> -> vector<1x512xf32>
    %15 = arith.addf %11, %14 : vector<1x512xf32>
    %16 = vector.extract_strided_slice %15 {offsets = [0, 0], sizes = [1, 384], strides = [1, 1]} : vector<1x512xf32> to vector<1x384xf32>
    %17 = arith.negf %16 : vector<1x384xf32>
    %18 = math.exp %17 : vector<1x384xf32>
    %cst_10 = arith.constant 1.000000e+00 : f32
    %19 = vector.broadcast %cst_10 : f32 to vector<1x384xf32>
    %20 = arith.addf %19, %18 : vector<1x384xf32>
    %21 = arith.divf %19, %20 : vector<1x384xf32>
    %22 = vector.extract_strided_slice %15 {offsets = [0, 384], sizes = [1, 128], strides = [1, 1]} : vector<1x512xf32> to vector<1x128xf32>
    %23 = math.tanh %22 : vector<1x128xf32>
    %24 = vector.extract_strided_slice %21 {offsets = [0, 128], sizes = [1, 128], strides = [1, 1]} : vector<1x384xf32> to vector<1x128xf32>
    %25 = arith.mulf %24, %2 : vector<1x128xf32>
    %26 = vector.extract_strided_slice %21 {offsets = [0, 0], sizes = [1, 128], strides = [1, 1]} : vector<1x384xf32> to vector<1x128xf32>
    %27 = arith.mulf %26, %23 : vector<1x128xf32>
    %28 = arith.addf %25, %27 : vector<1x128xf32>
    %29 = vector.extract_strided_slice %21 {offsets = [0, 256], sizes = [1, 128], strides = [1, 1]} : vector<1x384xf32> to vector<1x128xf32>
    %30 = math.tanh %28 : vector<1x128xf32>
    %31 = arith.mulf %29, %30 : vector<1x128xf32>
    %c0_11 = arith.constant 0 : index
    %c0_12 = arith.constant 0 : index
    %32 = vector.load %arg7[%c0_11, %c0_12] : memref<8x128xf32, #tpu.memory_space<vmem>>, vector<1x128xf32>
    tpu.vector_store %arg7[%c0_11, %c0_12], %31 {strides = array<i32>} : memref<8x128xf32, #tpu.memory_space<vmem>>, vector<1x128xf32>,
    %33 = vector.extract_strided_slice %10 {offsets = [1, 0], sizes = [1, 512], strides = [1, 1]} : vector<8x512xf32> to vector<1x512xf32>
    %34 = vector.extract_strided_slice %31 {offsets = [0, 0], sizes = [1, 32], strides = [1, 1]} : vector<1x128xf32> to vector<1x32xf32>
    %35 = arith.truncf %34 : vector<1x32xf32> to vector<1x32xbf16>
    %cst_13 = arith.constant dense<0.000000e+00> : vector<1x512xf32>
    %36 = tpu.matmul %35, %5, %cst_13 {dimension_numbers = #tpu.dot_dimension_numbers<[1], [0], [0], [1], [0, 0, 1, 1], [], []>} : vector<1x32xbf16>, vector<32x512xbf16>, vector<1x512xf32> -> vector<1x512xf32>
    %37 = arith.addf %33, %36 : vector<1x512xf32>
    %38 = vector.extract_strided_slice %37 {offsets = [0, 0], sizes = [1, 384], strides = [1, 1]} : vector<1x512xf32> to vector<1x384xf32>
    %39 = arith.negf %38 : vector<1x384xf32>
    %40 = math.exp %39 : vector<1x384xf32>
    %cst_14 = arith.constant 1.000000e+00 : f32
    %41 = vector.broadcast %cst_14 : f32 to vector<1x384xf32>
    %42 = arith.addf %41, %40 : vector<1x384xf32>
    %43 = arith.divf %41, %42 : vector<1x384xf32>
    %44 = vector.extract_strided_slice %37 {offsets = [0, 384], sizes = [1, 128], strides = [1, 1]} : vector<1x512xf32> to vector<1x128xf32>
    %45 = math.tanh %44 : vector<1x128xf32>
    %46 = vector.extract_strided_slice %43 {offsets = [0, 128], sizes = [1, 128], strides = [1, 1]} : vector<1x384xf32> to vector<1x128xf32>
    %47 = arith.mulf %46, %28 : vector<1x128xf32>
    %48 = vector.extract_strided_slice %43 {offsets = [0, 0], sizes = [1, 128], strides = [1, 1]} : vector<1x384xf32> to vector<1x128xf32>
    %49 = arith.mulf %48, %45 : vector<1x128xf32>
    %50 = arith.addf %47, %49 : vector<1x128xf32>
    %51 = vector.extract_strided_slice %43 {offsets = [0, 256], sizes = [1, 128], strides = [1, 1]} : vector<1x384xf32> to vector<1x128xf32>
    %52 = math.tanh %50 : vector<1x128xf32>
    %53 = arith.mulf %51, %52 : vector<1x128xf32>
    %c1 = arith.constant 1 : index
    %c0_15 = arith.constant 0 : index
    %54 = vector.load %arg7[%c1, %c0_15] : memref<8x128xf32, #tpu.memory_space<vmem>>, vector<1x128xf32>
    tpu.vector_store %arg7[%c1, %c0_15], %53 {strides = array<i32>} : memref<8x128xf32, #tpu.memory_space<vmem>>, vector<1x128xf32>,
    %55 = vector.extract_strided_slice %10 {offsets = [2, 0], sizes = [1, 512], strides = [1, 1]} : vector<8x512xf32> to vector<1x512xf32>
    %56 = vector.extract_strided_slice %53 {offsets = [0, 0], sizes = [1, 32], strides = [1, 1]} : vector<1x128xf32> to vector<1x32xf32>
    %57 = arith.truncf %56 : vector<1x32xf32> to vector<1x32xbf16>
    %cst_16 = arith.constant dense<0.000000e+00> : vector<1x512xf32>
    %58 = tpu.matmul %57, %5, %cst_16 {dimension_numbers = #tpu.dot_dimension_numbers<[1], [0], [0], [1], [0, 0, 1, 1], [], []>} : vector<1x32xbf16>, vector<32x512xbf16>, vector<1x512xf32> -> vector<1x512xf32>
    %59 = arith.addf %55, %58 : vector<1x512xf32>
    %60 = vector.extract_strided_slice %59 {offsets = [0, 0], sizes = [1, 384], strides = [1, 1]} : vector<1x512xf32> to vector<1x384xf32>
    %61 = arith.negf %60 : vector<1x384xf32>
    %62 = math.exp %61 : vector<1x384xf32>
    %cst_17 = arith.constant 1.000000e+00 : f32
    %63 = vector.broadcast %cst_17 : f32 to vector<1x384xf32>
    %64 = arith.addf %63, %62 : vector<1x384xf32>
    %65 = arith.divf %63, %64 : vector<1x384xf32>
    %66 = vector.extract_strided_slice %59 {offsets = [0, 384], sizes = [1, 128], strides = [1, 1]} : vector<1x512xf32> to vector<1x128xf32>
    %67 = math.tanh %66 : vector<1x128xf32>
    %68 = vector.extract_strided_slice %65 {offsets = [0, 128], sizes = [1, 128], strides = [1, 1]} : vector<1x384xf32> to vector<1x128xf32>
    %69 = arith.mulf %68, %50 : vector<1x128xf32>
    %70 = vector.extract_strided_slice %65 {offsets = [0, 0], sizes = [1, 128], strides = [1, 1]} : vector<1x384xf32> to vector<1x128xf32>
    %71 = arith.mulf %70, %67 : vector<1x128xf32>
    %72 = arith.addf %69, %71 : vector<1x128xf32>
    %73 = vector.extract_strided_slice %65 {offsets = [0, 256], sizes = [1, 128], strides = [1, 1]} : vector<1x384xf32> to vector<1x128xf32>
    %74 = math.tanh %72 : vector<1x128xf32>
    %75 = arith.mulf %73, %74 : vector<1x128xf32>
    %c2 = arith.constant 2 : index
    %c0_18 = arith.constant 0 : index
    %76 = vector.load %arg7[%c2, %c0_18] : memref<8x128xf32, #tpu.memory_space<vmem>>, vector<1x128xf32>
    tpu.vector_store %arg7[%c2, %c0_18], %75 {strides = array<i32>} : memref<8x128xf32, #tpu.memory_space<vmem>>, vector<1x128xf32>,
    %77 = vector.extract_strided_slice %10 {offsets = [3, 0], sizes = [1, 512], strides = [1, 1]} : vector<8x512xf32> to vector<1x512xf32>
    %78 = vector.extract_strided_slice %75 {offsets = [0, 0], sizes = [1, 32], strides = [1, 1]} : vector<1x128xf32> to vector<1x32xf32>
    %79 = arith.truncf %78 : vector<1x32xf32> to vector<1x32xbf16>
    %cst_19 = arith.constant dense<0.000000e+00> : vector<1x512xf32>
    %80 = tpu.matmul %79, %5, %cst_19 {dimension_numbers = #tpu.dot_dimension_numbers<[1], [0], [0], [1], [0, 0, 1, 1], [], []>} : vector<1x32xbf16>, vector<32x512xbf16>, vector<1x512xf32> -> vector<1x512xf32>
    %81 = arith.addf %77, %80 : vector<1x512xf32>
    %82 = vector.extract_strided_slice %81 {offsets = [0, 0], sizes = [1, 384], strides = [1, 1]} : vector<1x512xf32> to vector<1x384xf32>
    %83 = arith.negf %82 : vector<1x384xf32>
    %84 = math.exp %83 : vector<1x384xf32>
    %cst_20 = arith.constant 1.000000e+00 : f32
    %85 = vector.broadcast %cst_20 : f32 to vector<1x384xf32>
    %86 = arith.addf %85, %84 : vector<1x384xf32>
    %87 = arith.divf %85, %86 : vector<1x384xf32>
    %88 = vector.extract_strided_slice %81 {offsets = [0, 384], sizes = [1, 128], strides = [1, 1]} : vector<1x512xf32> to vector<1x128xf32>
    %89 = math.tanh %88 : vector<1x128xf32>
    %90 = vector.extract_strided_slice %87 {offsets = [0, 128], sizes = [1, 128], strides = [1, 1]} : vector<1x384xf32> to vector<1x128xf32>
    %91 = arith.mulf %90, %72 : vector<1x128xf32>
    %92 = vector.extract_strided_slice %87 {offsets = [0, 0], sizes = [1, 128], strides = [1, 1]} : vector<1x384xf32> to vector<1x128xf32>
    %93 = arith.mulf %92, %89 : vector<1x128xf32>
    %94 = arith.addf %91, %93 : vector<1x128xf32>
    %95 = vector.extract_strided_slice %87 {offsets = [0, 256], sizes = [1, 128], strides = [1, 1]} : vector<1x384xf32> to vector<1x128xf32>
    %96 = math.tanh %94 : vector<1x128xf32>
    %97 = arith.mulf %95, %96 : vector<1x128xf32>
    %c3 = arith.constant 3 : index
    %c0_21 = arith.constant 0 : index
    %98 = vector.load %arg7[%c3, %c0_21] : memref<8x128xf32, #tpu.memory_space<vmem>>, vector<1x128xf32>
    tpu.vector_store %arg7[%c3, %c0_21], %97 {strides = array<i32>} : memref<8x128xf32, #tpu.memory_space<vmem>>, vector<1x128xf32>,
    %99 = vector.extract_strided_slice %10 {offsets = [4, 0], sizes = [1, 512], strides = [1, 1]} : vector<8x512xf32> to vector<1x512xf32>
    %100 = vector.extract_strided_slice %97 {offsets = [0, 0], sizes = [1, 32], strides = [1, 1]} : vector<1x128xf32> to vector<1x32xf32>
    %101 = arith.truncf %100 : vector<1x32xf32> to vector<1x32xbf16>
    %cst_22 = arith.constant dense<0.000000e+00> : vector<1x512xf32>
    %102 = tpu.matmul %101, %5, %cst_22 {dimension_numbers = #tpu.dot_dimension_numbers<[1], [0], [0], [1], [0, 0, 1, 1], [], []>} : vector<1x32xbf16>, vector<32x512xbf16>, vector<1x512xf32> -> vector<1x512xf32>
    %103 = arith.addf %99, %102 : vector<1x512xf32>
    %104 = vector.extract_strided_slice %103 {offsets = [0, 0], sizes = [1, 384], strides = [1, 1]} : vector<1x512xf32> to vector<1x384xf32>
    %105 = arith.negf %104 : vector<1x384xf32>
    %106 = math.exp %105 : vector<1x384xf32>
    %cst_23 = arith.constant 1.000000e+00 : f32
    %107 = vector.broadcast %cst_23 : f32 to vector<1x384xf32>
    %108 = arith.addf %107, %106 : vector<1x384xf32>
    %109 = arith.divf %107, %108 : vector<1x384xf32>
    %110 = vector.extract_strided_slice %103 {offsets = [0, 384], sizes = [1, 128], strides = [1, 1]} : vector<1x512xf32> to vector<1x128xf32>
    %111 = math.tanh %110 : vector<1x128xf32>
    %112 = vector.extract_strided_slice %109 {offsets = [0, 128], sizes = [1, 128], strides = [1, 1]} : vector<1x384xf32> to vector<1x128xf32>
    %113 = arith.mulf %112, %94 : vector<1x128xf32>
    %114 = vector.extract_strided_slice %109 {offsets = [0, 0], sizes = [1, 128], strides = [1, 1]} : vector<1x384xf32> to vector<1x128xf32>
    %115 = arith.mulf %114, %111 : vector<1x128xf32>
    %116 = arith.addf %113, %115 : vector<1x128xf32>
    %117 = vector.extract_strided_slice %109 {offsets = [0, 256], sizes = [1, 128], strides = [1, 1]} : vector<1x384xf32> to vector<1x128xf32>
    %118 = math.tanh %116 : vector<1x128xf32>
    %119 = arith.mulf %117, %118 : vector<1x128xf32>
    %c4 = arith.constant 4 : index
    %c0_24 = arith.constant 0 : index
    %120 = vector.load %arg7[%c4, %c0_24] : memref<8x128xf32, #tpu.memory_space<vmem>>, vector<1x128xf32>
    tpu.vector_store %arg7[%c4, %c0_24], %119 {strides = array<i32>} : memref<8x128xf32, #tpu.memory_space<vmem>>, vector<1x128xf32>,
    %121 = vector.extract_strided_slice %10 {offsets = [5, 0], sizes = [1, 512], strides = [1, 1]} : vector<8x512xf32> to vector<1x512xf32>
    %122 = vector.extract_strided_slice %119 {offsets = [0, 0], sizes = [1, 32], strides = [1, 1]} : vector<1x128xf32> to vector<1x32xf32>
    %123 = arith.truncf %122 : vector<1x32xf32> to vector<1x32xbf16>
    %cst_25 = arith.constant dense<0.000000e+00> : vector<1x512xf32>
    %124 = tpu.matmul %123, %5, %cst_25 {dimension_numbers = #tpu.dot_dimension_numbers<[1], [0], [0], [1], [0, 0, 1, 1], [], []>} : vector<1x32xbf16>, vector<32x512xbf16>, vector<1x512xf32> -> vector<1x512xf32>
    %125 = arith.addf %121, %124 : vector<1x512xf32>
    %126 = vector.extract_strided_slice %125 {offsets = [0, 0], sizes = [1, 384], strides = [1, 1]} : vector<1x512xf32> to vector<1x384xf32>
    %127 = arith.negf %126 : vector<1x384xf32>
    %128 = math.exp %127 : vector<1x384xf32>
    %cst_26 = arith.constant 1.000000e+00 : f32
    %129 = vector.broadcast %cst_26 : f32 to vector<1x384xf32>
    %130 = arith.addf %129, %128 : vector<1x384xf32>
    %131 = arith.divf %129, %130 : vector<1x384xf32>
    %132 = vector.extract_strided_slice %125 {offsets = [0, 384], sizes = [1, 128], strides = [1, 1]} : vector<1x512xf32> to vector<1x128xf32>
    %133 = math.tanh %132 : vector<1x128xf32>
    %134 = vector.extract_strided_slice %131 {offsets = [0, 128], sizes = [1, 128], strides = [1, 1]} : vector<1x384xf32> to vector<1x128xf32>
    %135 = arith.mulf %134, %116 : vector<1x128xf32>
    %136 = vector.extract_strided_slice %131 {offsets = [0, 0], sizes = [1, 128], strides = [1, 1]} : vector<1x384xf32> to vector<1x128xf32>
    %137 = arith.mulf %136, %133 : vector<1x128xf32>
    %138 = arith.addf %135, %137 : vector<1x128xf32>
    %139 = vector.extract_strided_slice %131 {offsets = [0, 256], sizes = [1, 128], strides = [1, 1]} : vector<1x384xf32> to vector<1x128xf32>
    %140 = math.tanh %138 : vector<1x128xf32>
    %141 = arith.mulf %139, %140 : vector<1x128xf32>
    %c5 = arith.constant 5 : index
    %c0_27 = arith.constant 0 : index
    %142 = vector.load %arg7[%c5, %c0_27] : memref<8x128xf32, #tpu.memory_space<vmem>>, vector<1x128xf32>
    tpu.vector_store %arg7[%c5, %c0_27], %141 {strides = array<i32>} : memref<8x128xf32, #tpu.memory_space<vmem>>, vector<1x128xf32>,
    %143 = vector.extract_strided_slice %10 {offsets = [6, 0], sizes = [1, 512], strides = [1, 1]} : vector<8x512xf32> to vector<1x512xf32>
    %144 = vector.extract_strided_slice %141 {offsets = [0, 0], sizes = [1, 32], strides = [1, 1]} : vector<1x128xf32> to vector<1x32xf32>
    %145 = arith.truncf %144 : vector<1x32xf32> to vector<1x32xbf16>
    %cst_28 = arith.constant dense<0.000000e+00> : vector<1x512xf32>
    %146 = tpu.matmul %145, %5, %cst_28 {dimension_numbers = #tpu.dot_dimension_numbers<[1], [0], [0], [1], [0, 0, 1, 1], [], []>} : vector<1x32xbf16>, vector<32x512xbf16>, vector<1x512xf32> -> vector<1x512xf32>
    %147 = arith.addf %143, %146 : vector<1x512xf32>
    %148 = vector.extract_strided_slice %147 {offsets = [0, 0], sizes = [1, 384], strides = [1, 1]} : vector<1x512xf32> to vector<1x384xf32>
    %149 = arith.negf %148 : vector<1x384xf32>
    %150 = math.exp %149 : vector<1x384xf32>
    %cst_29 = arith.constant 1.000000e+00 : f32
    %151 = vector.broadcast %cst_29 : f32 to vector<1x384xf32>
    %152 = arith.addf %151, %150 : vector<1x384xf32>
    %153 = arith.divf %151, %152 : vector<1x384xf32>
    %154 = vector.extract_strided_slice %147 {offsets = [0, 384], sizes = [1, 128], strides = [1, 1]} : vector<1x512xf32> to vector<1x128xf32>
    %155 = math.tanh %154 : vector<1x128xf32>
    %156 = vector.extract_strided_slice %153 {offsets = [0, 128], sizes = [1, 128], strides = [1, 1]} : vector<1x384xf32> to vector<1x128xf32>
    %157 = arith.mulf %156, %138 : vector<1x128xf32>
    %158 = vector.extract_strided_slice %153 {offsets = [0, 0], sizes = [1, 128], strides = [1, 1]} : vector<1x384xf32> to vector<1x128xf32>
    %159 = arith.mulf %158, %155 : vector<1x128xf32>
    %160 = arith.addf %157, %159 : vector<1x128xf32>
    %161 = vector.extract_strided_slice %153 {offsets = [0, 256], sizes = [1, 128], strides = [1, 1]} : vector<1x384xf32> to vector<1x128xf32>
    %162 = math.tanh %160 : vector<1x128xf32>
    %163 = arith.mulf %161, %162 : vector<1x128xf32>
    %c6 = arith.constant 6 : index
    %c0_30 = arith.constant 0 : index
    %164 = vector.load %arg7[%c6, %c0_30] : memref<8x128xf32, #tpu.memory_space<vmem>>, vector<1x128xf32>
    tpu.vector_store %arg7[%c6, %c0_30], %163 {strides = array<i32>} : memref<8x128xf32, #tpu.memory_space<vmem>>, vector<1x128xf32>,
    %165 = vector.extract_strided_slice %10 {offsets = [7, 0], sizes = [1, 512], strides = [1, 1]} : vector<8x512xf32> to vector<1x512xf32>
    %166 = vector.extract_strided_slice %163 {offsets = [0, 0], sizes = [1, 32], strides = [1, 1]} : vector<1x128xf32> to vector<1x32xf32>
    %167 = arith.truncf %166 : vector<1x32xf32> to vector<1x32xbf16>
    %cst_31 = arith.constant dense<0.000000e+00> : vector<1x512xf32>
    %168 = tpu.matmul %167, %5, %cst_31 {dimension_numbers = #tpu.dot_dimension_numbers<[1], [0], [0], [1], [0, 0, 1, 1], [], []>} : vector<1x32xbf16>, vector<32x512xbf16>, vector<1x512xf32> -> vector<1x512xf32>
    %169 = arith.addf %165, %168 : vector<1x512xf32>
    %170 = vector.extract_strided_slice %169 {offsets = [0, 0], sizes = [1, 384], strides = [1, 1]} : vector<1x512xf32> to vector<1x384xf32>
    %171 = arith.negf %170 : vector<1x384xf32>
    %172 = math.exp %171 : vector<1x384xf32>
    %cst_32 = arith.constant 1.000000e+00 : f32
    %173 = vector.broadcast %cst_32 : f32 to vector<1x384xf32>
    %174 = arith.addf %173, %172 : vector<1x384xf32>
    %175 = arith.divf %173, %174 : vector<1x384xf32>
    %176 = vector.extract_strided_slice %169 {offsets = [0, 384], sizes = [1, 128], strides = [1, 1]} : vector<1x512xf32> to vector<1x128xf32>
    %177 = math.tanh %176 : vector<1x128xf32>
    %178 = vector.extract_strided_slice %175 {offsets = [0, 128], sizes = [1, 128], strides = [1, 1]} : vector<1x384xf32> to vector<1x128xf32>
    %179 = arith.mulf %178, %160 : vector<1x128xf32>
    %180 = vector.extract_strided_slice %175 {offsets = [0, 0], sizes = [1, 128], strides = [1, 1]} : vector<1x384xf32> to vector<1x128xf32>
    %181 = arith.mulf %180, %177 : vector<1x128xf32>
    %182 = arith.addf %179, %181 : vector<1x128xf32>
    %183 = vector.extract_strided_slice %175 {offsets = [0, 256], sizes = [1, 128], strides = [1, 1]} : vector<1x384xf32> to vector<1x128xf32>
    %184 = math.tanh %182 : vector<1x128xf32>
    %185 = arith.mulf %183, %184 : vector<1x128xf32>
    %c7 = arith.constant 7 : index
    %c0_33 = arith.constant 0 : index
    %186 = vector.load %arg7[%c7, %c0_33] : memref<8x128xf32, #tpu.memory_space<vmem>>, vector<1x128xf32>
    tpu.vector_store %arg7[%c7, %c0_33], %185 {strides = array<i32>} : memref<8x128xf32, #tpu.memory_space<vmem>>, vector<1x128xf32>,
    %c0_34 = arith.constant 0 : index
    %c0_35 = arith.constant 0 : index
    %187 = vector.load %arg7[%c0_34, %c0_35] : memref<8x128xf32, #tpu.memory_space<vmem>>, vector<8x128xf32>
    %cst_36 = arith.constant 0.000000e+00 : f32
    %188 = vector.broadcast %cst_36 : f32 to vector<8x128xf32>
    %189 = arith.maximumf %187, %188 : vector<8x128xf32>
    %c16_i32 = arith.constant 16 : i32
    %190 = vector.broadcast %c16_i32 : i32 to vector<1x128xi32>
    %191 = arith.cmpi slt, %3, %190 : vector<1x128xi32>
    %cst_37 = arith.constant 0.000000e+00 : f32
    %192 = vector.broadcast %cst_37 : f32 to vector<1x128xf32>
    %193 = arith.select %191, %185, %192 : vector<1x128xi1>, vector<1x128xf32>
    %c16_i32_38 = arith.constant 16 : i32
    %194 = vector.broadcast %c16_i32_38 : i32 to vector<1x128xi32>
    %195 = arith.cmpi slt, %3, %194 : vector<1x128xi32>
    %cst_39 = arith.constant 0.000000e+00 : f32
    %196 = vector.broadcast %cst_39 : f32 to vector<1x128xf32>
    %197 = arith.select %195, %182, %196 : vector<1x128xi1>, vector<1x128xf32>
    %c0_40 = arith.constant 0 : index
    %c0_41 = arith.constant 0 : index
    %198 = vector.load %arg4[%c0_40, %c0_41] : memref<128x512xbf16, #tpu.memory_space<vmem>>, vector<128x512xbf16>
    %c0_42 = arith.constant 0 : index
    %c0_43 = arith.constant 0 : index
    %199 = vector.load %arg5[%c0_42, %c0_43] : memref<16x512xbf16, #tpu.memory_space<vmem>>, vector<16x512xbf16>
    %c0_44 = arith.constant 0 : index
    %c0_45 = arith.constant 0 : index
    %200 = vector.load %arg6[%c0_44, %c0_45] : memref<1x512xf32, #tpu.memory_space<vmem>>, vector<1x512xf32>
    %201 = arith.truncf %189 : vector<8x128xf32> to vector<8x128xbf16>
    %cst_46 = arith.constant dense<0.000000e+00> : vector<8x512xf32>
    %202 = tpu.matmul %201, %198, %cst_46 {dimension_numbers = #tpu.dot_dimension_numbers<[1], [0], [0], [1], [0, 0, 1, 1], [], []>} : vector<8x128xbf16>, vector<128x512xbf16>, vector<8x512xf32> -> vector<8x512xf32>
    %203 = vector.broadcast %200 : vector<1x512xf32> to vector<8x512xf32>
    %204 = arith.addf %202, %203 : vector<8x512xf32>
    %205 = vector.extract_strided_slice %204 {offsets = [0, 0], sizes = [1, 512], strides = [1, 1]} : vector<8x512xf32> to vector<1x512xf32>
    %206 = vector.extract_strided_slice %193 {offsets = [0, 0], sizes = [1, 16], strides = [1, 1]} : vector<1x128xf32> to vector<1x16xf32>
    %207 = arith.truncf %206 : vector<1x16xf32> to vector<1x16xbf16>
    %cst_47 = arith.constant dense<0.000000e+00> : vector<1x512xf32>
    %208 = tpu.matmul %207, %199, %cst_47 {dimension_numbers = #tpu.dot_dimension_numbers<[1], [0], [0], [1], [0, 0, 1, 1], [], []>} : vector<1x16xbf16>, vector<16x512xbf16>, vector<1x512xf32> -> vector<1x512xf32>
    %209 = arith.addf %205, %208 : vector<1x512xf32>
    %210 = vector.extract_strided_slice %209 {offsets = [0, 0], sizes = [1, 384], strides = [1, 1]} : vector<1x512xf32> to vector<1x384xf32>
    %211 = arith.negf %210 : vector<1x384xf32>
    %212 = math.exp %211 : vector<1x384xf32>
    %cst_48 = arith.constant 1.000000e+00 : f32
    %213 = vector.broadcast %cst_48 : f32 to vector<1x384xf32>
    %214 = arith.addf %213, %212 : vector<1x384xf32>
    %215 = arith.divf %213, %214 : vector<1x384xf32>
    %216 = vector.extract_strided_slice %209 {offsets = [0, 384], sizes = [1, 128], strides = [1, 1]} : vector<1x512xf32> to vector<1x128xf32>
    %217 = math.tanh %216 : vector<1x128xf32>
    %218 = vector.extract_strided_slice %215 {offsets = [0, 128], sizes = [1, 128], strides = [1, 1]} : vector<1x384xf32> to vector<1x128xf32>
    %219 = arith.mulf %218, %197 : vector<1x128xf32>
    %220 = vector.extract_strided_slice %215 {offsets = [0, 0], sizes = [1, 128], strides = [1, 1]} : vector<1x384xf32> to vector<1x128xf32>
    %221 = arith.mulf %220, %217 : vector<1x128xf32>
    %222 = arith.addf %219, %221 : vector<1x128xf32>
    %223 = vector.extract_strided_slice %215 {offsets = [0, 256], sizes = [1, 128], strides = [1, 1]} : vector<1x384xf32> to vector<1x128xf32>
    %224 = math.tanh %222 : vector<1x128xf32>
    %225 = arith.mulf %223, %224 : vector<1x128xf32>
    %c0_49 = arith.constant 0 : index
    %c0_50 = arith.constant 0 : index
    %226 = vector.load %arg7[%c0_49, %c0_50] : memref<8x128xf32, #tpu.memory_space<vmem>>, vector<1x128xf32>
    tpu.vector_store %arg7[%c0_49, %c0_50], %225 {strides = array<i32>} : memref<8x128xf32, #tpu.memory_space<vmem>>, vector<1x128xf32>,
    %227 = vector.extract_strided_slice %204 {offsets = [1, 0], sizes = [1, 512], strides = [1, 1]} : vector<8x512xf32> to vector<1x512xf32>
    %228 = vector.extract_strided_slice %225 {offsets = [0, 0], sizes = [1, 16], strides = [1, 1]} : vector<1x128xf32> to vector<1x16xf32>
    %229 = arith.truncf %228 : vector<1x16xf32> to vector<1x16xbf16>
    %cst_51 = arith.constant dense<0.000000e+00> : vector<1x512xf32>
    %230 = tpu.matmul %229, %199, %cst_51 {dimension_numbers = #tpu.dot_dimension_numbers<[1], [0], [0], [1], [0, 0, 1, 1], [], []>} : vector<1x16xbf16>, vector<16x512xbf16>, vector<1x512xf32> -> vector<1x512xf32>
    %231 = arith.addf %227, %230 : vector<1x512xf32>
    %232 = vector.extract_strided_slice %231 {offsets = [0, 0], sizes = [1, 384], strides = [1, 1]} : vector<1x512xf32> to vector<1x384xf32>
    %233 = arith.negf %232 : vector<1x384xf32>
    %234 = math.exp %233 : vector<1x384xf32>
    %cst_52 = arith.constant 1.000000e+00 : f32
    %235 = vector.broadcast %cst_52 : f32 to vector<1x384xf32>
    %236 = arith.addf %235, %234 : vector<1x384xf32>
    %237 = arith.divf %235, %236 : vector<1x384xf32>
    %238 = vector.extract_strided_slice %231 {offsets = [0, 384], sizes = [1, 128], strides = [1, 1]} : vector<1x512xf32> to vector<1x128xf32>
    %239 = math.tanh %238 : vector<1x128xf32>
    %240 = vector.extract_strided_slice %237 {offsets = [0, 128], sizes = [1, 128], strides = [1, 1]} : vector<1x384xf32> to vector<1x128xf32>
    %241 = arith.mulf %240, %222 : vector<1x128xf32>
    %242 = vector.extract_strided_slice %237 {offsets = [0, 0], sizes = [1, 128], strides = [1, 1]} : vector<1x384xf32> to vector<1x128xf32>
    %243 = arith.mulf %242, %239 : vector<1x128xf32>
    %244 = arith.addf %241, %243 : vector<1x128xf32>
    %245 = vector.extract_strided_slice %237 {offsets = [0, 256], sizes = [1, 128], strides = [1, 1]} : vector<1x384xf32> to vector<1x128xf32>
    %246 = math.tanh %244 : vector<1x128xf32>
    %247 = arith.mulf %245, %246 : vector<1x128xf32>
    %c1_53 = arith.constant 1 : index
    %c0_54 = arith.constant 0 : index
    %248 = vector.load %arg7[%c1_53, %c0_54] : memref<8x128xf32, #tpu.memory_space<vmem>>, vector<1x128xf32>
    tpu.vector_store %arg7[%c1_53, %c0_54], %247 {strides = array<i32>} : memref<8x128xf32, #tpu.memory_space<vmem>>, vector<1x128xf32>,
    %249 = vector.extract_strided_slice %204 {offsets = [2, 0], sizes = [1, 512], strides = [1, 1]} : vector<8x512xf32> to vector<1x512xf32>
    %250 = vector.extract_strided_slice %247 {offsets = [0, 0], sizes = [1, 16], strides = [1, 1]} : vector<1x128xf32> to vector<1x16xf32>
    %251 = arith.truncf %250 : vector<1x16xf32> to vector<1x16xbf16>
    %cst_55 = arith.constant dense<0.000000e+00> : vector<1x512xf32>
    %252 = tpu.matmul %251, %199, %cst_55 {dimension_numbers = #tpu.dot_dimension_numbers<[1], [0], [0], [1], [0, 0, 1, 1], [], []>} : vector<1x16xbf16>, vector<16x512xbf16>, vector<1x512xf32> -> vector<1x512xf32>
    %253 = arith.addf %249, %252 : vector<1x512xf32>
    %254 = vector.extract_strided_slice %253 {offsets = [0, 0], sizes = [1, 384], strides = [1, 1]} : vector<1x512xf32> to vector<1x384xf32>
    %255 = arith.negf %254 : vector<1x384xf32>
    %256 = math.exp %255 : vector<1x384xf32>
    %cst_56 = arith.constant 1.000000e+00 : f32
    %257 = vector.broadcast %cst_56 : f32 to vector<1x384xf32>
    %258 = arith.addf %257, %256 : vector<1x384xf32>
    %259 = arith.divf %257, %258 : vector<1x384xf32>
    %260 = vector.extract_strided_slice %253 {offsets = [0, 384], sizes = [1, 128], strides = [1, 1]} : vector<1x512xf32> to vector<1x128xf32>
    %261 = math.tanh %260 : vector<1x128xf32>
    %262 = vector.extract_strided_slice %259 {offsets = [0, 128], sizes = [1, 128], strides = [1, 1]} : vector<1x384xf32> to vector<1x128xf32>
    %263 = arith.mulf %262, %244 : vector<1x128xf32>
    %264 = vector.extract_strided_slice %259 {offsets = [0, 0], sizes = [1, 128], strides = [1, 1]} : vector<1x384xf32> to vector<1x128xf32>
    %265 = arith.mulf %264, %261 : vector<1x128xf32>
    %266 = arith.addf %263, %265 : vector<1x128xf32>
    %267 = vector.extract_strided_slice %259 {offsets = [0, 256], sizes = [1, 128], strides = [1, 1]} : vector<1x384xf32> to vector<1x128xf32>
    %268 = math.tanh %266 : vector<1x128xf32>
    %269 = arith.mulf %267, %268 : vector<1x128xf32>
    %c2_57 = arith.constant 2 : index
    %c0_58 = arith.constant 0 : index
    %270 = vector.load %arg7[%c2_57, %c0_58] : memref<8x128xf32, #tpu.memory_space<vmem>>, vector<1x128xf32>
    tpu.vector_store %arg7[%c2_57, %c0_58], %269 {strides = array<i32>} : memref<8x128xf32, #tpu.memory_space<vmem>>, vector<1x128xf32>,
    %271 = vector.extract_strided_slice %204 {offsets = [3, 0], sizes = [1, 512], strides = [1, 1]} : vector<8x512xf32> to vector<1x512xf32>
    %272 = vector.extract_strided_slice %269 {offsets = [0, 0], sizes = [1, 16], strides = [1, 1]} : vector<1x128xf32> to vector<1x16xf32>
    %273 = arith.truncf %272 : vector<1x16xf32> to vector<1x16xbf16>
    %cst_59 = arith.constant dense<0.000000e+00> : vector<1x512xf32>
    %274 = tpu.matmul %273, %199, %cst_59 {dimension_numbers = #tpu.dot_dimension_numbers<[1], [0], [0], [1], [0, 0, 1, 1], [], []>} : vector<1x16xbf16>, vector<16x512xbf16>, vector<1x512xf32> -> vector<1x512xf32>
    %275 = arith.addf %271, %274 : vector<1x512xf32>
    %276 = vector.extract_strided_slice %275 {offsets = [0, 0], sizes = [1, 384], strides = [1, 1]} : vector<1x512xf32> to vector<1x384xf32>
    %277 = arith.negf %276 : vector<1x384xf32>
    %278 = math.exp %277 : vector<1x384xf32>
    %cst_60 = arith.constant 1.000000e+00 : f32
    %279 = vector.broadcast %cst_60 : f32 to vector<1x384xf32>
    %280 = arith.addf %279, %278 : vector<1x384xf32>
    %281 = arith.divf %279, %280 : vector<1x384xf32>
    %282 = vector.extract_strided_slice %275 {offsets = [0, 384], sizes = [1, 128], strides = [1, 1]} : vector<1x512xf32> to vector<1x128xf32>
    %283 = math.tanh %282 : vector<1x128xf32>
    %284 = vector.extract_strided_slice %281 {offsets = [0, 128], sizes = [1, 128], strides = [1, 1]} : vector<1x384xf32> to vector<1x128xf32>
    %285 = arith.mulf %284, %266 : vector<1x128xf32>
    %286 = vector.extract_strided_slice %281 {offsets = [0, 0], sizes = [1, 128], strides = [1, 1]} : vector<1x384xf32> to vector<1x128xf32>
    %287 = arith.mulf %286, %283 : vector<1x128xf32>
    %288 = arith.addf %285, %287 : vector<1x128xf32>
    %289 = vector.extract_strided_slice %281 {offsets = [0, 256], sizes = [1, 128], strides = [1, 1]} : vector<1x384xf32> to vector<1x128xf32>
    %290 = math.tanh %288 : vector<1x128xf32>
    %291 = arith.mulf %289, %290 : vector<1x128xf32>
    %c3_61 = arith.constant 3 : index
    %c0_62 = arith.constant 0 : index
    %292 = vector.load %arg7[%c3_61, %c0_62] : memref<8x128xf32, #tpu.memory_space<vmem>>, vector<1x128xf32>
    tpu.vector_store %arg7[%c3_61, %c0_62], %291 {strides = array<i32>} : memref<8x128xf32, #tpu.memory_space<vmem>>, vector<1x128xf32>,
    %293 = vector.extract_strided_slice %204 {offsets = [4, 0], sizes = [1, 512], strides = [1, 1]} : vector<8x512xf32> to vector<1x512xf32>
    %294 = vector.extract_strided_slice %291 {offsets = [0, 0], sizes = [1, 16], strides = [1, 1]} : vector<1x128xf32> to vector<1x16xf32>
    %295 = arith.truncf %294 : vector<1x16xf32> to vector<1x16xbf16>
    %cst_63 = arith.constant dense<0.000000e+00> : vector<1x512xf32>
    %296 = tpu.matmul %295, %199, %cst_63 {dimension_numbers = #tpu.dot_dimension_numbers<[1], [0], [0], [1], [0, 0, 1, 1], [], []>} : vector<1x16xbf16>, vector<16x512xbf16>, vector<1x512xf32> -> vector<1x512xf32>
    %297 = arith.addf %293, %296 : vector<1x512xf32>
    %298 = vector.extract_strided_slice %297 {offsets = [0, 0], sizes = [1, 384], strides = [1, 1]} : vector<1x512xf32> to vector<1x384xf32>
    %299 = arith.negf %298 : vector<1x384xf32>
    %300 = math.exp %299 : vector<1x384xf32>
    %cst_64 = arith.constant 1.000000e+00 : f32
    %301 = vector.broadcast %cst_64 : f32 to vector<1x384xf32>
    %302 = arith.addf %301, %300 : vector<1x384xf32>
    %303 = arith.divf %301, %302 : vector<1x384xf32>
    %304 = vector.extract_strided_slice %297 {offsets = [0, 384], sizes = [1, 128], strides = [1, 1]} : vector<1x512xf32> to vector<1x128xf32>
    %305 = math.tanh %304 : vector<1x128xf32>
    %306 = vector.extract_strided_slice %303 {offsets = [0, 128], sizes = [1, 128], strides = [1, 1]} : vector<1x384xf32> to vector<1x128xf32>
    %307 = arith.mulf %306, %288 : vector<1x128xf32>
    %308 = vector.extract_strided_slice %303 {offsets = [0, 0], sizes = [1, 128], strides = [1, 1]} : vector<1x384xf32> to vector<1x128xf32>
    %309 = arith.mulf %308, %305 : vector<1x128xf32>
    %310 = arith.addf %307, %309 : vector<1x128xf32>
    %311 = vector.extract_strided_slice %303 {offsets = [0, 256], sizes = [1, 128], strides = [1, 1]} : vector<1x384xf32> to vector<1x128xf32>
    %312 = math.tanh %310 : vector<1x128xf32>
    %313 = arith.mulf %311, %312 : vector<1x128xf32>
    %c4_65 = arith.constant 4 : index
    %c0_66 = arith.constant 0 : index
    %314 = vector.load %arg7[%c4_65, %c0_66] : memref<8x128xf32, #tpu.memory_space<vmem>>, vector<1x128xf32>
    tpu.vector_store %arg7[%c4_65, %c0_66], %313 {strides = array<i32>} : memref<8x128xf32, #tpu.memory_space<vmem>>, vector<1x128xf32>,
    %315 = vector.extract_strided_slice %204 {offsets = [5, 0], sizes = [1, 512], strides = [1, 1]} : vector<8x512xf32> to vector<1x512xf32>
    %316 = vector.extract_strided_slice %313 {offsets = [0, 0], sizes = [1, 16], strides = [1, 1]} : vector<1x128xf32> to vector<1x16xf32>
    %317 = arith.truncf %316 : vector<1x16xf32> to vector<1x16xbf16>
    %cst_67 = arith.constant dense<0.000000e+00> : vector<1x512xf32>
    %318 = tpu.matmul %317, %199, %cst_67 {dimension_numbers = #tpu.dot_dimension_numbers<[1], [0], [0], [1], [0, 0, 1, 1], [], []>} : vector<1x16xbf16>, vector<16x512xbf16>, vector<1x512xf32> -> vector<1x512xf32>
    %319 = arith.addf %315, %318 : vector<1x512xf32>
    %320 = vector.extract_strided_slice %319 {offsets = [0, 0], sizes = [1, 384], strides = [1, 1]} : vector<1x512xf32> to vector<1x384xf32>
    %321 = arith.negf %320 : vector<1x384xf32>
    %322 = math.exp %321 : vector<1x384xf32>
    %cst_68 = arith.constant 1.000000e+00 : f32
    %323 = vector.broadcast %cst_68 : f32 to vector<1x384xf32>
    %324 = arith.addf %323, %322 : vector<1x384xf32>
    %325 = arith.divf %323, %324 : vector<1x384xf32>
    %326 = vector.extract_strided_slice %319 {offsets = [0, 384], sizes = [1, 128], strides = [1, 1]} : vector<1x512xf32> to vector<1x128xf32>
    %327 = math.tanh %326 : vector<1x128xf32>
    %328 = vector.extract_strided_slice %325 {offsets = [0, 128], sizes = [1, 128], strides = [1, 1]} : vector<1x384xf32> to vector<1x128xf32>
    %329 = arith.mulf %328, %310 : vector<1x128xf32>
    %330 = vector.extract_strided_slice %325 {offsets = [0, 0], sizes = [1, 128], strides = [1, 1]} : vector<1x384xf32> to vector<1x128xf32>
    %331 = arith.mulf %330, %327 : vector<1x128xf32>
    %332 = arith.addf %329, %331 : vector<1x128xf32>
    %333 = vector.extract_strided_slice %325 {offsets = [0, 256], sizes = [1, 128], strides = [1, 1]} : vector<1x384xf32> to vector<1x128xf32>
    %334 = math.tanh %332 : vector<1x128xf32>
    %335 = arith.mulf %333, %334 : vector<1x128xf32>
    %c5_69 = arith.constant 5 : index
    %c0_70 = arith.constant 0 : index
    %336 = vector.load %arg7[%c5_69, %c0_70] : memref<8x128xf32, #tpu.memory_space<vmem>>, vector<1x128xf32>
    tpu.vector_store %arg7[%c5_69, %c0_70], %335 {strides = array<i32>} : memref<8x128xf32, #tpu.memory_space<vmem>>, vector<1x128xf32>,
    %337 = vector.extract_strided_slice %204 {offsets = [6, 0], sizes = [1, 512], strides = [1, 1]} : vector<8x512xf32> to vector<1x512xf32>
    %338 = vector.extract_strided_slice %335 {offsets = [0, 0], sizes = [1, 16], strides = [1, 1]} : vector<1x128xf32> to vector<1x16xf32>
    %339 = arith.truncf %338 : vector<1x16xf32> to vector<1x16xbf16>
    %cst_71 = arith.constant dense<0.000000e+00> : vector<1x512xf32>
    %340 = tpu.matmul %339, %199, %cst_71 {dimension_numbers = #tpu.dot_dimension_numbers<[1], [0], [0], [1], [0, 0, 1, 1], [], []>} : vector<1x16xbf16>, vector<16x512xbf16>, vector<1x512xf32> -> vector<1x512xf32>
    %341 = arith.addf %337, %340 : vector<1x512xf32>
    %342 = vector.extract_strided_slice %341 {offsets = [0, 0], sizes = [1, 384], strides = [1, 1]} : vector<1x512xf32> to vector<1x384xf32>
    %343 = arith.negf %342 : vector<1x384xf32>
    %344 = math.exp %343 : vector<1x384xf32>
    %cst_72 = arith.constant 1.000000e+00 : f32
    %345 = vector.broadcast %cst_72 : f32 to vector<1x384xf32>
    %346 = arith.addf %345, %344 : vector<1x384xf32>
    %347 = arith.divf %345, %346 : vector<1x384xf32>
    %348 = vector.extract_strided_slice %341 {offsets = [0, 384], sizes = [1, 128], strides = [1, 1]} : vector<1x512xf32> to vector<1x128xf32>
    %349 = math.tanh %348 : vector<1x128xf32>
    %350 = vector.extract_strided_slice %347 {offsets = [0, 128], sizes = [1, 128], strides = [1, 1]} : vector<1x384xf32> to vector<1x128xf32>
    %351 = arith.mulf %350, %332 : vector<1x128xf32>
    %352 = vector.extract_strided_slice %347 {offsets = [0, 0], sizes = [1, 128], strides = [1, 1]} : vector<1x384xf32> to vector<1x128xf32>
    %353 = arith.mulf %352, %349 : vector<1x128xf32>
    %354 = arith.addf %351, %353 : vector<1x128xf32>
    %355 = vector.extract_strided_slice %347 {offsets = [0, 256], sizes = [1, 128], strides = [1, 1]} : vector<1x384xf32> to vector<1x128xf32>
    %356 = math.tanh %354 : vector<1x128xf32>
    %357 = arith.mulf %355, %356 : vector<1x128xf32>
    %c6_73 = arith.constant 6 : index
    %c0_74 = arith.constant 0 : index
    %358 = vector.load %arg7[%c6_73, %c0_74] : memref<8x128xf32, #tpu.memory_space<vmem>>, vector<1x128xf32>
    tpu.vector_store %arg7[%c6_73, %c0_74], %357 {strides = array<i32>} : memref<8x128xf32, #tpu.memory_space<vmem>>, vector<1x128xf32>,
    %359 = vector.extract_strided_slice %204 {offsets = [7, 0], sizes = [1, 512], strides = [1, 1]} : vector<8x512xf32> to vector<1x512xf32>
    %360 = vector.extract_strided_slice %357 {offsets = [0, 0], sizes = [1, 16], strides = [1, 1]} : vector<1x128xf32> to vector<1x16xf32>
    %361 = arith.truncf %360 : vector<1x16xf32> to vector<1x16xbf16>
    %cst_75 = arith.constant dense<0.000000e+00> : vector<1x512xf32>
    %362 = tpu.matmul %361, %199, %cst_75 {dimension_numbers = #tpu.dot_dimension_numbers<[1], [0], [0], [1], [0, 0, 1, 1], [], []>} : vector<1x16xbf16>, vector<16x512xbf16>, vector<1x512xf32> -> vector<1x512xf32>
    %363 = arith.addf %359, %362 : vector<1x512xf32>
    %364 = vector.extract_strided_slice %363 {offsets = [0, 0], sizes = [1, 384], strides = [1, 1]} : vector<1x512xf32> to vector<1x384xf32>
    %365 = arith.negf %364 : vector<1x384xf32>
    %366 = math.exp %365 : vector<1x384xf32>
    %cst_76 = arith.constant 1.000000e+00 : f32
    %367 = vector.broadcast %cst_76 : f32 to vector<1x384xf32>
    %368 = arith.addf %367, %366 : vector<1x384xf32>
    %369 = arith.divf %367, %368 : vector<1x384xf32>
    %370 = vector.extract_strided_slice %363 {offsets = [0, 384], sizes = [1, 128], strides = [1, 1]} : vector<1x512xf32> to vector<1x128xf32>
    %371 = math.tanh %370 : vector<1x128xf32>
    %372 = vector.extract_strided_slice %369 {offsets = [0, 128], sizes = [1, 128], strides = [1, 1]} : vector<1x384xf32> to vector<1x128xf32>
    %373 = arith.mulf %372, %354 : vector<1x128xf32>
    %374 = vector.extract_strided_slice %369 {offsets = [0, 0], sizes = [1, 128], strides = [1, 1]} : vector<1x384xf32> to vector<1x128xf32>
    %375 = arith.mulf %374, %371 : vector<1x128xf32>
    %376 = arith.addf %373, %375 : vector<1x128xf32>
    %377 = vector.extract_strided_slice %369 {offsets = [0, 256], sizes = [1, 128], strides = [1, 1]} : vector<1x384xf32> to vector<1x128xf32>
    %378 = math.tanh %376 : vector<1x128xf32>
    %379 = arith.mulf %377, %378 : vector<1x128xf32>
    %c7_77 = arith.constant 7 : index
    %c0_78 = arith.constant 0 : index
    %380 = vector.load %arg7[%c7_77, %c0_78] : memref<8x128xf32, #tpu.memory_space<vmem>>, vector<1x128xf32>
    tpu.vector_store %arg7[%c7_77, %c0_78], %379 {strides = array<i32>} : memref<8x128xf32, #tpu.memory_space<vmem>>, vector<1x128xf32>,
    %c0_79 = arith.constant 0 : index
    %c0_80 = arith.constant 0 : index
    %381 = vector.load %arg7[%c0_79, %c0_80] : memref<8x128xf32, #tpu.memory_space<vmem>>, vector<8x128xf32>
    %cst_81 = arith.constant 0.000000e+00 : f32
    %382 = vector.broadcast %cst_81 : f32 to vector<8x128xf32>
    %383 = arith.maximumf %381, %382 : vector<8x128xf32>
    %c0_82 = arith.constant 0 : index
    %c0_83 = arith.constant 0 : index
    %384 = vector.load %arg7[%c0_82, %c0_83] : memref<8x128xf32, #tpu.memory_space<vmem>>, vector<8x128xf32>
    tpu.vector_store %arg7[%c0_82, %c0_83], %383 {strides = array<i32>} : memref<8x128xf32, #tpu.memory_space<vmem>>, vector<8x128xf32>,
    return
  }
}

</mosaic_0001>

<llo_original>
// kernel: forward.1
$region0: #{forward.1}
  #allocation0 [shape = 'u32[]', space=smem, size = 0x4, offset = 0x4, fixed_abs, tag = 'smem constant byte address 0x4 - core index']
  #allocation1 [shape = 'u32[72,128]{1,0:T(1,128)}', space=vmem, size = 0x9000, scoped, tag = 'internal scratch']
  %s0 = inlined_call_operand.vmem [shape: f32[8,128], index: 0, kind: input, shape index: {}]
  %s1 = inlined_call_operand.hbm [shape: bf16[128,512], index: 1, kind: input, shape index: {}]
  %s2 = inlined_call_operand.hbm [shape: bf16[32,512], index: 2, kind: input, shape index: {}]
  %s3 = inlined_call_operand.vmem [shape: f32[1,512], index: 3, kind: input, shape index: {}]
  %s4 = inlined_call_operand.hbm [shape: bf16[128,512], index: 4, kind: input, shape index: {}]
  %s5 = inlined_call_operand.vmem [shape: bf16[16,512], index: 5, kind: input, shape index: {}]
  %s6 = inlined_call_operand.vmem [shape: f32[1,512], index: 6, kind: input, shape index: {}]
  %s7 = inlined_call_operand.hbm [shape: f32[8,128], index: 7, kind: output, shape index: {}]
  %s8 = sld [smem:[#allocation0]]
  $region50: #{forward.1} parent=0
    _
  %s10 = ssub.s32 1, %s8
  %s11 = scalar_select 0, %s10, %s8
  $region1: #{forward.1} parent=0
    #allocation2 [shape = 'u8[131072]{0}', space=vmem, size = 0x20000, scoped, tag = 'input window, operand 1, single buffered']
    #allocation3 [shape = 's32[1]{0}', space=sflag, size = 0x4, scoped, tag = 'scoped memory for forward.1']
    #allocation4 [shape = 's32[1]{0}', space=sflag, size = 0x4, scoped, tag = 'scoped memory for forward.1']
    #allocation5 [shape = 'u8[32768]{0}', space=vmem, size = 0x8000, scoped, tag = 'input window, operand 2, single buffered']
    #allocation6 [shape = 's32[1]{0}', space=sflag, size = 0x4, scoped, tag = 'scoped memory for forward.1']
    #allocation7 [shape = 'u8[131072]{0}', space=vmem, size = 0x20000, scoped, tag = 'input window, operand 4, single buffered']
    #allocation8 [shape = 'u8[4096]{0}', space=vmem, size = 0x1000, scoped, tag = 'output window, operand 0, single buffered']
    %12 = vsyncpa [#allocation3], 0
    %13 = vsyncpa [#allocation6], 0
    %14 = vsyncpa [#allocation4], 0
    // Predicated region
    $region2: #{forward.1} parent=1 // pred_check
      _
    $region3: #{forward.1} parent=1 // pred_check_branch
      %16 = sbr.rel (0) target = $region5
    $region4: #{forward.1} parent=1 // pred_region
      _
    $region5: #{forward.1} parent=1 // pred_fallthru
      _
    // Predicated region
    $region6: #{forward.1} parent=1 // pred_check
      _
    $region7: #{forward.1} parent=1 // pred_check_branch
      %18 = sbr.rel (0) target = $region9
    $region8: #{forward.1} parent=1 // pred_region
      %20 = vsyncadd [#allocation3], 0
      %s21 = sshll.u32 %s1, 4
      %s22 = int_to_ptr.hbm [resolvable:$true] %s21
      %s23 = sshll.u32 [#allocation2], 4
      %s24 = int_to_ptr.vmem [resolvable:$true] %s23
      %29 = dma.hbm_to_vmem [thread:$0]  %s22, 4096, %s24, [#allocation3], 256, 256, 16
    $region9: #{forward.1} parent=1 // pred_fallthru
      _
    // Predicated region
    $region10: #{forward.1} parent=1 // pred_check
      _
    $region11: #{forward.1} parent=1 // pred_check_branch
      %31 = sbr.rel (0) target = $region13
    $region12: #{forward.1} parent=1 // pred_region
      %33 = vsyncadd [#allocation6], 0
      %s34 = sshll.u32 %s2, 4
      %s35 = int_to_ptr.hbm [resolvable:$true] %s34
      %s36 = sshll.u32 [#allocation5], 4
      %s37 = int_to_ptr.vmem [resolvable:$true] %s36
      %42 = dma.hbm_to_vmem [thread:$0]  %s35, 1024, %s37, [#allocation6], 256, 256, 16
    $region13: #{forward.1} parent=1 // pred_fallthru
      _
    // Predicated region
    $region14: #{forward.1} parent=1 // pred_check
      _
    $region15: #{forward.1} parent=1 // pred_check_branch
      %44 = sbr.rel (0) target = $region17
    $region16: #{forward.1} parent=1 // pred_region
      _
    $region17: #{forward.1} parent=1 // pred_fallthru
      _
    // Predicated region
    $region18: #{forward.1} parent=1 // pred_check
      _
    $region19: #{forward.1} parent=1 // pred_check_branch
      %46 = sbr.rel (0) target = $region21
    $region20: #{forward.1} parent=1 // pred_region
      %48 = vsyncadd [#allocation6], 0
      %s49 = sshll.u32 %s4, 4
      %s50 = int_to_ptr.hbm [resolvable:$true] %s49
      %s51 = sshll.u32 [#allocation7], 4
      %s52 = int_to_ptr.vmem [resolvable:$true] %s51
      %57 = dma.hbm_to_vmem [thread:$0]  %s50, 4096, %s52, [#allocation6], 256, 256, 16
    $region21: #{forward.1} parent=1 // pred_fallthru
      _
    // Predicated region
    $region22: #{forward.1} parent=1 // pred_check
      _
    $region23: #{forward.1} parent=1 // pred_check_branch
      %59 = sbr.rel (0) target = $region25
    $region24: #{forward.1} parent=1 // pred_region
      _
    $region25: #{forward.1} parent=1 // pred_fallthru
      _
    // Predicated region
    $region26: #{forward.1} parent=1 // pred_check
      _
    $region27: #{forward.1} parent=1 // pred_check_branch
      %61 = sbr.rel (0) target = $region29
    $region28: #{forward.1} parent=1 // pred_region
      _
    $region29: #{forward.1} parent=1 // pred_fallthru
      _
    // Predicated region
    $region30: #{forward.1} parent=1 // pred_check
      _
    $region31: #{forward.1} parent=1 // pred_check_branch
      %63 = sbr.rel (0) target = $region33
    $region32: #{forward.1} parent=1 // pred_region
      %65 = dma.done [#allocation3], 4096
    $region33: #{forward.1} parent=1 // pred_fallthru
      _
    // Predicated region
    $region34: #{forward.1} parent=1 // pred_check
      _
    $region35: #{forward.1} parent=1 // pred_check_branch
      %67 = sbr.rel (0) target = $region37
    $region36: #{forward.1} parent=1 // pred_region
      %69 = dma.done [#allocation6], 1024
    $region37: #{forward.1} parent=1 // pred_fallthru
      _
    // Predicated region
    $region38: #{forward.1} parent=1 // pred_check
      _
    $region39: #{forward.1} parent=1 // pred_check_branch
      %71 = sbr.rel (0) target = $region41
    $region40: #{forward.1} parent=1 // pred_region
      %73 = dma.done [#allocation6], 4096
    $region41: #{forward.1} parent=1 // pred_fallthru
      _
    %v75 = vld [vmem:[%s0] sm:$0xff]
    %v76 = vlaneseq
    %v77 = vand.u32 %v76, 127
    %v78 = vld [vmem:[#allocation2] sm:$0xff]
    %v79 = vld [vmem:[#allocation2 + $0x8] sm:$0xff]
    %v80 = vld [vmem:[#allocation2 + $0x10] sm:$0xff]
    %v81 = vld [vmem:[#allocation2 + $0x18] sm:$0xff]
    %v82 = vld [vmem:[#allocation2 + $0x20] sm:$0xff]
    %v83 = vld [vmem:[#allocation2 + $0x28] sm:$0xff]
    %v84 = vld [vmem:[#allocation2 + $0x30] sm:$0xff]
    %v85 = vld [vmem:[#allocation2 + $0x38] sm:$0xff]
    %v86 = vld [vmem:[#allocation2 + $0x40] sm:$0xff]
    %v87 = vld [vmem:[#allocation2 + $0x48] sm:$0xff]
    %v88 = vld [vmem:[#allocation2 + $0x50] sm:$0xff]
    %v89 = vld [vmem:[#allocation2 + $0x58] sm:$0xff]
    %v90 = vld [vmem:[#allocation2 + $0x60] sm:$0xff]
    %v91 = vld [vmem:[#allocation2 + $0x68] sm:$0xff]
    %v92 = vld [vmem:[#allocation2 + $0x70] sm:$0xff]
    %v93 = vld [vmem:[#allocation2 + $0x78] sm:$0xff]
    %v94 = vld [vmem:[#allocation2 + $0x80] sm:$0xff]
    %v95 = vld [vmem:[#allocation2 + $0x88] sm:$0xff]
    %v96 = vld [vmem:[#allocation2 + $0x90] sm:$0xff]
    %v97 = vld [vmem:[#allocation2 + $0x98] sm:$0xff]
    %v98 = vld [vmem:[#allocation2 + $0xa0] sm:$0xff]
    %v99 = vld [vmem:[#allocation2 + $0xa8] sm:$0xff]
    %v100 = vld [vmem:[#allocation2 + $0xb0] sm:$0xff]
    %v101 = vld [vmem:[#allocation2 + $0xb8] sm:$0xff]
    %v102 = vld [vmem:[#allocation2 + $0xc0] sm:$0xff]
    %v103 = vld [vmem:[#allocation2 + $0xc8] sm:$0xff]
    %v104 = vld [vmem:[#allocation2 + $0xd0] sm:$0xff]
    %v105 = vld [vmem:[#allocation2 + $0xd8] sm:$0xff]
    %v106 = vld [vmem:[#allocation2 + $0xe0] sm:$0xff]
    %v107 = vld [vmem:[#allocation2 + $0xe8] sm:$0xff]
    %v108 = vld [vmem:[#allocation2 + $0xf0] sm:$0xff]
    %v109 = vld [vmem:[#allocation2 + $0xf8] sm:$0xff]
    %v110 = vld [vmem:[#allocation5] sm:$0xff]
    %v111 = vld [vmem:[#allocation5 + $0x8] sm:$0xff]
    %v112 = vld [vmem:[#allocation5 + $0x10] sm:$0xff]
    %v113 = vld [vmem:[#allocation5 + $0x18] sm:$0xff]
    %v114 = vld [vmem:[#allocation5 + $0x20] sm:$0xff]
    %v115 = vld [vmem:[#allocation5 + $0x28] sm:$0xff]
    %v116 = vld [vmem:[#allocation5 + $0x30] sm:$0xff]
    %v117 = vld [vmem:[#allocation5 + $0x38] sm:$0xff]
    %v118 = vld [vmem:[%s3] sm:$0xf]
    %v119 = vpack.c.bf16 %v75, %v75
    %v121 = vperm.slane %v118, 0
    %v122 = vperm.slane %v118, 1
    %v123 = vperm.slane %v118, 2
    %v124 = vperm.slane %v118, 3
    %v161 = vunpack.c.l.b16 %v78
    %v162 = vunpack.c.h.b16 %v78
    %v163 = vunpack.c.l.b16 %v79
    %v164 = vunpack.c.h.b16 %v79
    %v165 = vunpack.c.l.b16 %v80
    %v166 = vunpack.c.h.b16 %v80
    %v167 = vunpack.c.l.b16 %v81
    %v168 = vunpack.c.h.b16 %v81
    %v169 = vunpack.c.l.b16 %v82
    %v170 = vunpack.c.h.b16 %v82
    %v171 = vunpack.c.l.b16 %v83
    %v172 = vunpack.c.h.b16 %v83
    %v173 = vunpack.c.l.b16 %v84
    %v174 = vunpack.c.h.b16 %v84
    %v175 = vunpack.c.l.b16 %v85
    %v176 = vunpack.c.h.b16 %v85
    %v177 = vunpack.c.l.b16 %v86
    %v178 = vunpack.c.h.b16 %v86
    %v179 = vunpack.c.l.b16 %v87
    %v180 = vunpack.c.h.b16 %v87
    %v181 = vunpack.c.l.b16 %v88
    %v182 = vunpack.c.h.b16 %v88
    %v183 = vunpack.c.l.b16 %v89
    %v184 = vunpack.c.h.b16 %v89
    %v185 = vunpack.c.l.b16 %v90
    %v186 = vunpack.c.h.b16 %v90
    %v187 = vunpack.c.l.b16 %v91
    %v188 = vunpack.c.h.b16 %v91
    %v189 = vunpack.c.l.b16 %v92
    %v190 = vunpack.c.h.b16 %v92
    %v191 = vunpack.c.l.b16 %v93
    %v192 = vunpack.c.h.b16 %v93
    %v193 = vunpack.c.l.b16 %v94
    %v194 = vunpack.c.h.b16 %v94
    %v195 = vunpack.c.l.b16 %v95
    %v196 = vunpack.c.h.b16 %v95
    %v197 = vunpack.c.l.b16 %v96
    %v198 = vunpack.c.h.b16 %v96
    %v199 = vunpack.c.l.b16 %v97
    %v200 = vunpack.c.h.b16 %v97
    %v201 = vunpack.c.l.b16 %v98
    %v202 = vunpack.c.h.b16 %v98
    %v203 = vunpack.c.l.b16 %v99
    %v204 = vunpack.c.h.b16 %v99
    %v205 = vunpack.c.l.b16 %v100
    %v206 = vunpack.c.h.b16 %v100
    %v207 = vunpack.c.l.b16 %v101
    %v208 = vunpack.c.h.b16 %v101
    %v209 = vunpack.c.l.b16 %v102
    %v210 = vunpack.c.h.b16 %v102
    %v211 = vunpack.c.l.b16 %v103
    %v212 = vunpack.c.h.b16 %v103
    %v213 = vunpack.c.l.b16 %v104
    %v214 = vunpack.c.h.b16 %v104
    %v215 = vunpack.c.l.b16 %v105
    %v216 = vunpack.c.h.b16 %v105
    %v217 = vunpack.c.l.b16 %v106
    %v218 = vunpack.c.h.b16 %v106
    %v219 = vunpack.c.l.b16 %v107
    %v220 = vunpack.c.h.b16 %v107
    %v221 = vunpack.c.l.b16 %v108
    %v222 = vunpack.c.h.b16 %v108
    %v223 = vunpack.c.l.b16 %v109
    %v224 = vunpack.c.h.b16 %v109
    %v225 = vpack.c.b16 %v165, %v161
    %v226 = vpack.c.b16 %v166, %v162
    %v227 = vpack.c.b16 %v167, %v163
    %v228 = vpack.c.b16 %v168, %v164
    %v229 = vpack.c.b16 %v173, %v169
    %v230 = vpack.c.b16 %v174, %v170
    %v231 = vpack.c.b16 %v175, %v171
    %v232 = vpack.c.b16 %v176, %v172
    %v233 = vpack.c.b16 %v181, %v177
    %v234 = vpack.c.b16 %v182, %v178
    %v235 = vpack.c.b16 %v183, %v179
    %v236 = vpack.c.b16 %v184, %v180
    %v237 = vpack.c.b16 %v189, %v185
    %v238 = vpack.c.b16 %v190, %v186
    %v239 = vpack.c.b16 %v191, %v187
    %v240 = vpack.c.b16 %v192, %v188
    %v241 = vpack.c.b16 %v197, %v193
    %v242 = vpack.c.b16 %v198, %v194
    %v243 = vpack.c.b16 %v199, %v195
    %v244 = vpack.c.b16 %v200, %v196
    %v245 = vpack.c.b16 %v205, %v201
    %v246 = vpack.c.b16 %v206, %v202
    %v247 = vpack.c.b16 %v207, %v203
    %v248 = vpack.c.b16 %v208, %v204
    %v249 = vpack.c.b16 %v213, %v209
    %v250 = vpack.c.b16 %v214, %v210
    %v251 = vpack.c.b16 %v215, %v211
    %v252 = vpack.c.b16 %v216, %v212
    %v253 = vpack.c.b16 %v221, %v217
    %v254 = vpack.c.b16 %v222, %v218
    %v255 = vpack.c.b16 %v223, %v219
    %v256 = vpack.c.b16 %v224, %v220
    %289 = vmatpush.bf16.msra.mxu0 %v253
    %290 = vmatpush.bf16.msra.mxu0 %v249
    %291 = vmatpush.bf16.msra.mxu0 %v245
    %292 = vmatpush.bf16.msra.mxu0 %v241
    %293 = vmatpush.bf16.msra.mxu0 %v237
    %294 = vmatpush.bf16.msra.mxu0 %v233
    %295 = vmatpush.bf16.msra.mxu0 %v229
    %296 = vmatpush.bf16.msra.mxu0 %v225
    %297 = vmatmul.bf16.gmra.mxu0 %v119
    %v298 = vpop.f32.mrf.mxu0
    %v299 = vadd.f32 %v121, %v298
    %v300 = vpop.f32.mrf.mxu0
    %301 = vdwg.mxu0
    %302 = vmatpush.bf16.msra.mxu0 %v254
    %303 = vmatpush.bf16.msra.mxu0 %v250
    %304 = vmatpush.bf16.msra.mxu0 %v246
    %305 = vmatpush.bf16.msra.mxu0 %v242
    %306 = vmatpush.bf16.msra.mxu0 %v238
    %307 = vmatpush.bf16.msra.mxu0 %v234
    %308 = vmatpush.bf16.msra.mxu0 %v230
    %309 = vmatpush.bf16.msra.mxu0 %v226
    %310 = vmatmul.bf16.gmra.mxu0 %v119
    %v311 = vpop.f32.mrf.mxu0
    %v312 = vadd.f32 %v122, %v311
    %v313 = vpop.f32.mrf.mxu0
    %314 = vdwg.mxu0
    %315 = vmatpush.bf16.msra.mxu0 %v255
    %316 = vmatpush.bf16.msra.mxu0 %v251
    %317 = vmatpush.bf16.msra.mxu0 %v247
    %318 = vmatpush.bf16.msra.mxu0 %v243
    %319 = vmatpush.bf16.msra.mxu0 %v239
    %320 = vmatpush.bf16.msra.mxu0 %v235
    %321 = vmatpush.bf16.msra.mxu0 %v231
    %322 = vmatpush.bf16.msra.mxu0 %v227
    %323 = vmatmul.bf16.gmra.mxu0 %v119
    %v324 = vpop.f32.mrf.mxu0
    %v325 = vadd.f32 %v123, %v324
    %v326 = vpop.f32.mrf.mxu0
    %327 = vdwg.mxu0
    %328 = vmatpush.bf16.msra.mxu0 %v256
    %329 = vmatpush.bf16.msra.mxu0 %v252
    %330 = vmatpush.bf16.msra.mxu0 %v248
    %331 = vmatpush.bf16.msra.mxu0 %v244
    %332 = vmatpush.bf16.msra.mxu0 %v240
    %333 = vmatpush.bf16.msra.mxu0 %v236
    %334 = vmatpush.bf16.msra.mxu0 %v232
    %335 = vmatpush.bf16.msra.mxu0 %v228
    %336 = vmatmul.bf16.gmra.mxu0 %v119
    %v337 = vpop.f32.mrf.mxu0
    %v338 = vadd.f32 %v124, %v337
    %v339 = vpop.f32.mrf.mxu0
    %340 = vdwg.mxu0
    %v349 = vunpack.c.l.b16 %v110
    %v350 = vunpack.c.h.b16 %v110
    %v351 = vunpack.c.l.b16 %v111
    %v352 = vunpack.c.h.b16 %v111
    %v353 = vunpack.c.l.b16 %v112
    %v354 = vunpack.c.h.b16 %v112
    %v355 = vunpack.c.l.b16 %v113
    %v356 = vunpack.c.h.b16 %v113
    %v357 = vunpack.c.l.b16 %v114
    %v358 = vunpack.c.h.b16 %v114
    %v359 = vunpack.c.l.b16 %v115
    %v360 = vunpack.c.h.b16 %v115
    %v361 = vunpack.c.l.b16 %v116
    %v362 = vunpack.c.h.b16 %v116
    %v363 = vunpack.c.l.b16 %v117
    %v364 = vunpack.c.h.b16 %v117
    %v365 = vpack.c.b16 %v353, %v349
    %v366 = vpack.c.b16 %v354, %v350
    %v367 = vpack.c.b16 %v355, %v351
    %v368 = vpack.c.b16 %v356, %v352
    %v369 = vpack.c.b16 %v361, %v357
    %v370 = vpack.c.b16 %v362, %v358
    %v371 = vpack.c.b16 %v363, %v359
    %v372 = vpack.c.b16 %v364, %v360
    %vm381 = vcmask 261120
    %v383 = vsel %vm381, 0, 0
    %385 = vmatpush.bf16.msra.mxu0 0
    %386 = vmatpush.bf16.msra.mxu0 0
    %387 = vmatpush.bf16.msra.mxu0 0
    %388 = vmatpush.bf16.msra.mxu0 0
    %389 = vmatpush.bf16.msra.mxu0 0
    %390 = vmatpush.bf16.msra.mxu0 0
    %391 = vmatpush.bf16.msra.mxu0 %v369
    %392 = vmatpush.bf16.msra.mxu0 %v365
    %393 = vmatmul.bf16.gmra.mxu0 %v383
    %v394 = vpop.f32.mrf.mxu0
    %v395 = vadd.f32 0.0, %v394
    %v396 = vpop.f32.mrf.mxu0
    %397 = vdwg.mxu0
    %398 = vmatpush.bf16.msra.mxu0 0
    %399 = vmatpush.bf16.msra.mxu0 0
    %400 = vmatpush.bf16.msra.mxu0 0
    %401 = vmatpush.bf16.msra.mxu0 0
    %402 = vmatpush.bf16.msra.mxu0 0
    %403 = vmatpush.bf16.msra.mxu0 0
    %404 = vmatpush.bf16.msra.mxu0 %v370
    %405 = vmatpush.bf16.msra.mxu0 %v366
    %406 = vmatmul.bf16.gmra.mxu0 %v383
    %v407 = vpop.f32.mrf.mxu0
    %v408 = vadd.f32 0.0, %v407
    %v409 = vpop.f32.mrf.mxu0
    %410 = vdwg.mxu0
    %411 = vmatpush.bf16.msra.mxu0 0
    %412 = vmatpush.bf16.msra.mxu0 0
    %413 = vmatpush.bf16.msra.mxu0 0
    %414 = vmatpush.bf16.msra.mxu0 0
    %415 = vmatpush.bf16.msra.mxu0 0
    %416 = vmatpush.bf16.msra.mxu0 0
    %417 = vmatpush.bf16.msra.mxu0 %v371
    %418 = vmatpush.bf16.msra.mxu0 %v367
    %419 = vmatmul.bf16.gmra.mxu0 %v383
    %v420 = vpop.f32.mrf.mxu0
    %v421 = vadd.f32 0.0, %v420
    %v422 = vpop.f32.mrf.mxu0
    %423 = vdwg.mxu0
    %424 = vmatpush.bf16.msra.mxu0 0
    %425 = vmatpush.bf16.msra.mxu0 0
    %426 = vmatpush.bf16.msra.mxu0 0
    %427 = vmatpush.bf16.msra.mxu0 0
    %428 = vmatpush.bf16.msra.mxu0 0
    %429 = vmatpush.bf16.msra.mxu0 0
    %430 = vmatpush.bf16.msra.mxu0 %v372
    %431 = vmatpush.bf16.msra.mxu0 %v368
    %432 = vmatmul.bf16.gmra.mxu0 %v383
    %v433 = vpop.f32.mrf.mxu0
    %v434 = vadd.f32 0.0, %v433
    %v435 = vpop.f32.mrf.mxu0
    %436 = vdwg.mxu0
    %v437 = vadd.f32 %v299, %v395
    %v438 = vadd.f32 %v312, %v408
    %v439 = vadd.f32 %v325, %v421
    %v440 = vadd.f32 %v338, %v434
    %v441 = vxor.u32 %v437, 2147483648
    %v442 = vxor.u32 %v438, 2147483648
    %v443 = vxor.u32 %v439, 2147483648
    %v444 = vmul.f32 %v441, 1.442695
    %v445 = vpow.pop %v444
    %v446 = vmul.f32 %v442, 1.442695
    %v447 = vpow.pop %v446
    %v448 = vmul.f32 %v443, 1.442695
    %v449 = vpow.pop %v448
    %v450 = vadd.f32 %v445, 1.0
    %v451 = vadd.f32 %v447, 1.0
    %v452 = vadd.f32 %v449, 1.0
    %v453 = vrcp.pop %v450
    %v454 = vmul.f32 %v450, %v453
    %v455 = vsub.f32 1.0, %v454
    %v456 = vmul.f32 %v453, %v455
    %v457 = vadd.f32 %v453, %v456
    %vm458 = vweird.f32 %v450
    %vm459 = vweird.f32 %v453
    %vm460 = vmor %vm458, %vm459
    %v461 = vsel %vm460, %v453, %v457
    %v462 = vand.u32 2147483647, %v450
    %vm463 = vcmp.eq.f32.partialorder %v462, 8.507059e+37
    %v464 = vand.u32 %v450, 2147483648
    %v465 = vor.u32 1.1754944e-38, %v464
    %v466 = vsel %vm463, %v465, %v461
    %v467 = vmul.f32 1.0, %v466
    %v468 = vrcp.pop %v451
    %v469 = vmul.f32 %v451, %v468
    %v470 = vsub.f32 1.0, %v469
    %v471 = vmul.f32 %v468, %v470
    %v472 = vadd.f32 %v468, %v471
    %vm473 = vweird.f32 %v451
    %vm474 = vweird.f32 %v468
    %vm475 = vmor %vm473, %vm474
    %v476 = vsel %vm475, %v468, %v472
    %v477 = vand.u32 2147483647, %v451
    %vm478 = vcmp.eq.f32.partialorder %v477, 8.507059e+37
    %v479 = vand.u32 %v451, 2147483648
    %v480 = vor.u32 1.1754944e-38, %v479
    %v481 = vsel %vm478, %v480, %v476
    %v482 = vmul.f32 1.0, %v481
    %v483 = vrcp.pop %v452
    %v484 = vmul.f32 %v452, %v483
    %v485 = vsub.f32 1.0, %v484
    %v486 = vmul.f32 %v483, %v485
    %v487 = vadd.f32 %v483, %v486
    %vm488 = vweird.f32 %v452
    %vm489 = vweird.f32 %v483
    %vm490 = vmor %vm488, %vm489
    %v491 = vsel %vm490, %v483, %v487
    %v492 = vand.u32 2147483647, %v452
    %vm493 = vcmp.eq.f32.partialorder %v492, 8.507059e+37
    %v494 = vand.u32 %v452, 2147483648
    %v495 = vor.u32 1.1754944e-38, %v494
    %v496 = vsel %vm493, %v495, %v491
    %v497 = vmul.f32 1.0, %v496
    %v498 = vtanh.pop %v440
    %v499 = vmul.f32 %v482, 0.0
    %v500 = vmul.f32 %v467, %v498
    %v501 = vadd.f32 %v499, %v500
    %v502 = vtanh.pop %v501
    %v503 = vmul.f32 %v497, %v502
    %504 = vst [vmem:[#allocation8] sm:$0x1] %v503
    %v505 = vpack.c.bf16 %v503, %v503
    %v507 = vsel %vm381, %v505, 0
    %509 = vmatpush.bf16.msra.mxu0 0
    %510 = vmatpush.bf16.msra.mxu0 0
    %511 = vmatpush.bf16.msra.mxu0 0
    %512 = vmatpush.bf16.msra.mxu0 0
    %513 = vmatpush.bf16.msra.mxu0 0
    %514 = vmatpush.bf16.msra.mxu0 0
    %515 = vmatpush.bf16.msra.mxu0 %v369
    %516 = vmatpush.bf16.msra.mxu0 %v365
    %517 = vmatmul.bf16.gmra.mxu0 %v507
    %v518 = vpop.f32.mrf.mxu0
    %v519 = vadd.f32 0.0, %v518
    %v520 = vpop.f32.mrf.mxu0
    %521 = vdwg.mxu0
    %522 = vmatpush.bf16.msra.mxu0 0
    %523 = vmatpush.bf16.msra.mxu0 0
    %524 = vmatpush.bf16.msra.mxu0 0
    %525 = vmatpush.bf16.msra.mxu0 0
    %526 = vmatpush.bf16.msra.mxu0 0
    %527 = vmatpush.bf16.msra.mxu0 0
    %528 = vmatpush.bf16.msra.mxu0 %v370
    %529 = vmatpush.bf16.msra.mxu0 %v366
    %530 = vmatmul.bf16.gmra.mxu0 %v507
    %v531 = vpop.f32.mrf.mxu0
    %v532 = vadd.f32 0.0, %v531
    %v533 = vpop.f32.mrf.mxu0
    %534 = vdwg.mxu0
    %535 = vmatpush.bf16.msra.mxu0 0
    %536 = vmatpush.bf16.msra.mxu0 0
    %537 = vmatpush.bf16.msra.mxu0 0
    %538 = vmatpush.bf16.msra.mxu0 0
    %539 = vmatpush.bf16.msra.mxu0 0
    %540 = vmatpush.bf16.msra.mxu0 0
    %541 = vmatpush.bf16.msra.mxu0 %v371
    %542 = vmatpush.bf16.msra.mxu0 %v367
    %543 = vmatmul.bf16.gmra.mxu0 %v507
    %v544 = vpop.f32.mrf.mxu0
    %v545 = vadd.f32 0.0, %v544
    %v546 = vpop.f32.mrf.mxu0
    %547 = vdwg.mxu0
    %548 = vmatpush.bf16.msra.mxu0 0
    %549 = vmatpush.bf16.msra.mxu0 0
    %550 = vmatpush.bf16.msra.mxu0 0
    %551 = vmatpush.bf16.msra.mxu0 0
    %552 = vmatpush.bf16.msra.mxu0 0
    %553 = vmatpush.bf16.msra.mxu0 0
    %554 = vmatpush.bf16.msra.mxu0 %v372
    %555 = vmatpush.bf16.msra.mxu0 %v368
    %556 = vmatmul.bf16.gmra.mxu0 %v507
    %v557 = vpop.f32.mrf.mxu0
    %v558 = vadd.f32 0.0, %v557
    %v559 = vpop.f32.mrf.mxu0
    %560 = vdwg.mxu0
    %v565 = vrot.slane %v519, 7
    %v566 = vrot.slane %v532, 7
    %v567 = vrot.slane %v545, 7
    %v568 = vrot.slane %v558, 7
    %v573 = vadd.f32 %v299, %v565
    %v574 = vadd.f32 %v312, %v566
    %v575 = vadd.f32 %v325, %v567
    %v576 = vadd.f32 %v338, %v568
    %v577 = vxor.u32 %v573, 2147483648
    %v578 = vxor.u32 %v574, 2147483648
    %v579 = vxor.u32 %v575, 2147483648
    %v580 = vmul.f32 %v577, 1.442695
    %v581 = vpow.pop %v580
    %v582 = vmul.f32 %v578, 1.442695
    %v583 = vpow.pop %v582
    %v584 = vmul.f32 %v579, 1.442695
    %v585 = vpow.pop %v584
    %v586 = vadd.f32 %v581, 1.0
    %v587 = vadd.f32 %v583, 1.0
    %v588 = vadd.f32 %v585, 1.0
    %v589 = vrcp.pop %v586
    %v590 = vmul.f32 %v586, %v589
    %v591 = vsub.f32 1.0, %v590
    %v592 = vmul.f32 %v589, %v591
    %v593 = vadd.f32 %v589, %v592
    %vm594 = vweird.f32 %v586
    %vm595 = vweird.f32 %v589
    %vm596 = vmor %vm594, %vm595
    %v597 = vsel %vm596, %v589, %v593
    %v598 = vand.u32 2147483647, %v586
    %vm599 = vcmp.eq.f32.partialorder %v598, 8.507059e+37
    %v600 = vand.u32 %v586, 2147483648
    %v601 = vor.u32 1.1754944e-38, %v600
    %v602 = vsel %vm599, %v601, %v597
    %v603 = vmul.f32 1.0, %v602
    %v604 = vrcp.pop %v587
    %v605 = vmul.f32 %v587, %v604
    %v606 = vsub.f32 1.0, %v605
    %v607 = vmul.f32 %v604, %v606
    %v608 = vadd.f32 %v604, %v607
    %vm609 = vweird.f32 %v587
    %vm610 = vweird.f32 %v604
    %vm611 = vmor %vm609, %vm610
    %v612 = vsel %vm611, %v604, %v608
    %v613 = vand.u32 2147483647, %v587
    %vm614 = vcmp.eq.f32.partialorder %v613, 8.507059e+37
    %v615 = vand.u32 %v587, 2147483648
    %v616 = vor.u32 1.1754944e-38, %v615
    %v617 = vsel %vm614, %v616, %v612
    %v618 = vmul.f32 1.0, %v617
    %v619 = vrcp.pop %v588
    %v620 = vmul.f32 %v588, %v619
    %v621 = vsub.f32 1.0, %v620
    %v622 = vmul.f32 %v619, %v621
    %v623 = vadd.f32 %v619, %v622
    %vm624 = vweird.f32 %v588
    %vm625 = vweird.f32 %v619
    %vm626 = vmor %vm624, %vm625
    %v627 = vsel %vm626, %v619, %v623
    %v628 = vand.u32 2147483647, %v588
    %vm629 = vcmp.eq.f32.partialorder %v628, 8.507059e+37
    %v630 = vand.u32 %v588, 2147483648
    %v631 = vor.u32 1.1754944e-38, %v630
    %v632 = vsel %vm629, %v631, %v627
    %v633 = vmul.f32 1.0, %v632
    %v634 = vtanh.pop %v576
    %v636 = vrot.slane %v501, 7
    %v638 = vmul.f32 %v618, %v636
    %v639 = vmul.f32 %v603, %v634
    %v640 = vadd.f32 %v638, %v639
    %v641 = vtanh.pop %v640
    %v642 = vmul.f32 %v633, %v641
    %643 = vst [vmem:[#allocation8] sm:$0x2] %v642
    %v644 = vpack.c.bf16 %v642, %v642
    %v646 = vshrl.u32 %v644, 16
    %v649 = vsel %vm381, %v646, 0
    %651 = vmatpush.bf16.msra.mxu0 0
    %652 = vmatpush.bf16.msra.mxu0 0
    %653 = vmatpush.bf16.msra.mxu0 0
    %654 = vmatpush.bf16.msra.mxu0 0
    %655 = vmatpush.bf16.msra.mxu0 0
    %656 = vmatpush.bf16.msra.mxu0 0
    %657 = vmatpush.bf16.msra.mxu0 %v369
    %658 = vmatpush.bf16.msra.mxu0 %v365
    %659 = vmatmul.bf16.gmra.mxu0 %v649
    %v660 = vpop.f32.mrf.mxu0
    %v661 = vadd.f32 0.0, %v660
    %v662 = vpop.f32.mrf.mxu0
    %663 = vdwg.mxu0
    %664 = vmatpush.bf16.msra.mxu0 0
    %665 = vmatpush.bf16.msra.mxu0 0
    %666 = vmatpush.bf16.msra.mxu0 0
    %667 = vmatpush.bf16.msra.mxu0 0
    %668 = vmatpush.bf16.msra.mxu0 0
    %669 = vmatpush.bf16.msra.mxu0 0
    %670 = vmatpush.bf16.msra.mxu0 %v370
    %671 = vmatpush.bf16.msra.mxu0 %v366
    %672 = vmatmul.bf16.gmra.mxu0 %v649
    %v673 = vpop.f32.mrf.mxu0
    %v674 = vadd.f32 0.0, %v673
    %v675 = vpop.f32.mrf.mxu0
    %676 = vdwg.mxu0
    %677 = vmatpush.bf16.msra.mxu0 0
    %678 = vmatpush.bf16.msra.mxu0 0
    %679 = vmatpush.bf16.msra.mxu0 0
    %680 = vmatpush.bf16.msra.mxu0 0
    %681 = vmatpush.bf16.msra.mxu0 0
    %682 = vmatpush.bf16.msra.mxu0 0
    %683 = vmatpush.bf16.msra.mxu0 %v371
    %684 = vmatpush.bf16.msra.mxu0 %v367
    %685 = vmatmul.bf16.gmra.mxu0 %v649
    %v686 = vpop.f32.mrf.mxu0
    %v687 = vadd.f32 0.0, %v686
    %v688 = vpop.f32.mrf.mxu0
    %689 = vdwg.mxu0
    %690 = vmatpush.bf16.msra.mxu0 0
    %691 = vmatpush.bf16.msra.mxu0 0
    %692 = vmatpush.bf16.msra.mxu0 0
    %693 = vmatpush.bf16.msra.mxu0 0
    %694 = vmatpush.bf16.msra.mxu0 0
    %695 = vmatpush.bf16.msra.mxu0 0
    %696 = vmatpush.bf16.msra.mxu0 %v372
    %697 = vmatpush.bf16.msra.mxu0 %v368
    %698 = vmatmul.bf16.gmra.mxu0 %v649
    %v699 = vpop.f32.mrf.mxu0
    %v700 = vadd.f32 0.0, %v699
    %v701 = vpop.f32.mrf.mxu0
    %702 = vdwg.mxu0
    %v707 = vrot.slane %v661, 6
    %v708 = vrot.slane %v674, 6
    %v709 = vrot.slane %v687, 6
    %v710 = vrot.slane %v700, 6
    %v715 = vadd.f32 %v299, %v707
    %v716 = vadd.f32 %v312, %v708
    %v717 = vadd.f32 %v325, %v709
    %v718 = vadd.f32 %v338, %v710
    %v719 = vxor.u32 %v715, 2147483648
    %v720 = vxor.u32 %v716, 2147483648
    %v721 = vxor.u32 %v717, 2147483648
    %v722 = vmul.f32 %v719, 1.442695
    %v723 = vpow.pop %v722
    %v724 = vmul.f32 %v720, 1.442695
    %v725 = vpow.pop %v724
    %v726 = vmul.f32 %v721, 1.442695
    %v727 = vpow.pop %v726
    %v728 = vadd.f32 %v723, 1.0
    %v729 = vadd.f32 %v725, 1.0
    %v730 = vadd.f32 %v727, 1.0
    %v731 = vrcp.pop %v728
    %v732 = vmul.f32 %v728, %v731
    %v733 = vsub.f32 1.0, %v732
    %v734 = vmul.f32 %v731, %v733
    %v735 = vadd.f32 %v731, %v734
    %vm736 = vweird.f32 %v728
    %vm737 = vweird.f32 %v731
    %vm738 = vmor %vm736, %vm737
    %v739 = vsel %vm738, %v731, %v735
    %v740 = vand.u32 2147483647, %v728
    %vm741 = vcmp.eq.f32.partialorder %v740, 8.507059e+37
    %v742 = vand.u32 %v728, 2147483648
    %v743 = vor.u32 1.1754944e-38, %v742
    %v744 = vsel %vm741, %v743, %v739
    %v745 = vmul.f32 1.0, %v744
    %v746 = vrcp.pop %v729
    %v747 = vmul.f32 %v729, %v746
    %v748 = vsub.f32 1.0, %v747
    %v749 = vmul.f32 %v746, %v748
    %v750 = vadd.f32 %v746, %v749
    %vm751 = vweird.f32 %v729
    %vm752 = vweird.f32 %v746
    %vm753 = vmor %vm751, %vm752
    %v754 = vsel %vm753, %v746, %v750
    %v755 = vand.u32 2147483647, %v729
    %vm756 = vcmp.eq.f32.partialorder %v755, 8.507059e+37
    %v757 = vand.u32 %v729, 2147483648
    %v758 = vor.u32 1.1754944e-38, %v757
    %v759 = vsel %vm756, %v758, %v754
    %v760 = vmul.f32 1.0, %v759
    %v761 = vrcp.pop %v730
    %v762 = vmul.f32 %v730, %v761
    %v763 = vsub.f32 1.0, %v762
    %v764 = vmul.f32 %v761, %v763
    %v765 = vadd.f32 %v761, %v764
    %vm766 = vweird.f32 %v730
    %vm767 = vweird.f32 %v761
    %vm768 = vmor %vm766, %vm767
    %v769 = vsel %vm768, %v761, %v765
    %v770 = vand.u32 2147483647, %v730
    %vm771 = vcmp.eq.f32.partialorder %v770, 8.507059e+37
    %v772 = vand.u32 %v730, 2147483648
    %v773 = vor.u32 1.1754944e-38, %v772
    %v774 = vsel %vm771, %v773, %v769
    %v775 = vmul.f32 1.0, %v774
    %v776 = vtanh.pop %v718
    %v778 = vrot.slane %v640, 7
    %v780 = vmul.f32 %v760, %v778
    %v781 = vmul.f32 %v745, %v776
    %v782 = vadd.f32 %v780, %v781
    %v783 = vtanh.pop %v782
    %v784 = vmul.f32 %v775, %v783
    %785 = vst [vmem:[#allocation8] sm:$0x4] %v784
    %v786 = vpack.c.bf16 %v784, %v784
    %v788 = vrot.slane %v786, 1
    %v790 = vsel %vm381, %v788, 0
    %792 = vmatpush.bf16.msra.mxu0 0
    %793 = vmatpush.bf16.msra.mxu0 0
    %794 = vmatpush.bf16.msra.mxu0 0
    %795 = vmatpush.bf16.msra.mxu0 0
    %796 = vmatpush.bf16.msra.mxu0 0
    %797 = vmatpush.bf16.msra.mxu0 0
    %798 = vmatpush.bf16.msra.mxu0 %v369
    %799 = vmatpush.bf16.msra.mxu0 %v365
    %800 = vmatmul.bf16.gmra.mxu0 %v790
    %v801 = vpop.f32.mrf.mxu0
    %v802 = vadd.f32 0.0, %v801
    %v803 = vpop.f32.mrf.mxu0
    %804 = vdwg.mxu0
    %805 = vmatpush.bf16.msra.mxu0 0
    %806 = vmatpush.bf16.msra.mxu0 0
    %807 = vmatpush.bf16.msra.mxu0 0
    %808 = vmatpush.bf16.msra.mxu0 0
    %809 = vmatpush.bf16.msra.mxu0 0
    %810 = vmatpush.bf16.msra.mxu0 0
    %811 = vmatpush.bf16.msra.mxu0 %v370
    %812 = vmatpush.bf16.msra.mxu0 %v366
    %813 = vmatmul.bf16.gmra.mxu0 %v790
    %v814 = vpop.f32.mrf.mxu0
    %v815 = vadd.f32 0.0, %v814
    %v816 = vpop.f32.mrf.mxu0
    %817 = vdwg.mxu0
    %818 = vmatpush.bf16.msra.mxu0 0
    %819 = vmatpush.bf16.msra.mxu0 0
    %820 = vmatpush.bf16.msra.mxu0 0
    %821 = vmatpush.bf16.msra.mxu0 0
    %822 = vmatpush.bf16.msra.mxu0 0
    %823 = vmatpush.bf16.msra.mxu0 0
    %824 = vmatpush.bf16.msra.mxu0 %v371
    %825 = vmatpush.bf16.msra.mxu0 %v367
    %826 = vmatmul.bf16.gmra.mxu0 %v790
    %v827 = vpop.f32.mrf.mxu0
    %v828 = vadd.f32 0.0, %v827
    %v829 = vpop.f32.mrf.mxu0
    %830 = vdwg.mxu0
    %831 = vmatpush.bf16.msra.mxu0 0
    %832 = vmatpush.bf16.msra.mxu0 0
    %833 = vmatpush.bf16.msra.mxu0 0
    %834 = vmatpush.bf16.msra.mxu0 0
    %835 = vmatpush.bf16.msra.mxu0 0
    %836 = vmatpush.bf16.msra.mxu0 0
    %837 = vmatpush.bf16.msra.mxu0 %v372
    %838 = vmatpush.bf16.msra.mxu0 %v368
    %839 = vmatmul.bf16.gmra.mxu0 %v790
    %v840 = vpop.f32.mrf.mxu0
    %v841 = vadd.f32 0.0, %v840
    %v842 = vpop.f32.mrf.mxu0
    %843 = vdwg.mxu0
    %v848 = vrot.slane %v802, 5
    %v849 = vrot.slane %v815, 5
    %v850 = vrot.slane %v828, 5
    %v851 = vrot.slane %v841, 5
    %v856 = vadd.f32 %v299, %v848
    %v857 = vadd.f32 %v312, %v849
    %v858 = vadd.f32 %v325, %v850
    %v859 = vadd.f32 %v338, %v851
    %v860 = vxor.u32 %v856, 2147483648
    %v861 = vxor.u32 %v857, 2147483648
    %v862 = vxor.u32 %v858, 2147483648
    %v863 = vmul.f32 %v860, 1.442695
    %v864 = vpow.pop %v863
    %v865 = vmul.f32 %v861, 1.442695
    %v866 = vpow.pop %v865
    %v867 = vmul.f32 %v862, 1.442695
    %v868 = vpow.pop %v867
    %v869 = vadd.f32 %v864, 1.0
    %v870 = vadd.f32 %v866, 1.0
    %v871 = vadd.f32 %v868, 1.0
    %v872 = vrcp.pop %v869
    %v873 = vmul.f32 %v869, %v872
    %v874 = vsub.f32 1.0, %v873
    %v875 = vmul.f32 %v872, %v874
    %v876 = vadd.f32 %v872, %v875
    %vm877 = vweird.f32 %v869
    %vm878 = vweird.f32 %v872
    %vm879 = vmor %vm877, %vm878
    %v880 = vsel %vm879, %v872, %v876
    %v881 = vand.u32 2147483647, %v869
    %vm882 = vcmp.eq.f32.partialorder %v881, 8.507059e+37
    %v883 = vand.u32 %v869, 2147483648
    %v884 = vor.u32 1.1754944e-38, %v883
    %v885 = vsel %vm882, %v884, %v880
    %v886 = vmul.f32 1.0, %v885
    %v887 = vrcp.pop %v870
    %v888 = vmul.f32 %v870, %v887
    %v889 = vsub.f32 1.0, %v888
    %v890 = vmul.f32 %v887, %v889
    %v891 = vadd.f32 %v887, %v890
    %vm892 = vweird.f32 %v870
    %vm893 = vweird.f32 %v887
    %vm894 = vmor %vm892, %vm893
    %v895 = vsel %vm894, %v887, %v891
    %v896 = vand.u32 2147483647, %v870
    %vm897 = vcmp.eq.f32.partialorder %v896, 8.507059e+37
    %v898 = vand.u32 %v870, 2147483648
    %v899 = vor.u32 1.1754944e-38, %v898
    %v900 = vsel %vm897, %v899, %v895
    %v901 = vmul.f32 1.0, %v900
    %v902 = vrcp.pop %v871
    %v903 = vmul.f32 %v871, %v902
    %v904 = vsub.f32 1.0, %v903
    %v905 = vmul.f32 %v902, %v904
    %v906 = vadd.f32 %v902, %v905
    %vm907 = vweird.f32 %v871
    %vm908 = vweird.f32 %v902
    %vm909 = vmor %vm907, %vm908
    %v910 = vsel %vm909, %v902, %v906
    %v911 = vand.u32 2147483647, %v871
    %vm912 = vcmp.eq.f32.partialorder %v911, 8.507059e+37
    %v913 = vand.u32 %v871, 2147483648
    %v914 = vor.u32 1.1754944e-38, %v913
    %v915 = vsel %vm912, %v914, %v910
    %v916 = vmul.f32 1.0, %v915
    %v917 = vtanh.pop %v859
    %v919 = vrot.slane %v782, 7
    %v921 = vmul.f32 %v901, %v919
    %v922 = vmul.f32 %v886, %v917
    %v923 = vadd.f32 %v921, %v922
    %v924 = vtanh.pop %v923
    %v925 = vmul.f32 %v916, %v924
    %926 = vst [vmem:[#allocation8] sm:$0x8] %v925
    %v927 = vpack.c.bf16 %v925, %v925
    %v929 = vshrl.u32 %v927, 16
    %v931 = vrot.slane %v929, 1
    %v933 = vsel %vm381, %v931, 0
    %935 = vmatpush.bf16.msra.mxu0 0
    %936 = vmatpush.bf16.msra.mxu0 0
    %937 = vmatpush.bf16.msra.mxu0 0
    %938 = vmatpush.bf16.msra.mxu0 0
    %939 = vmatpush.bf16.msra.mxu0 0
    %940 = vmatpush.bf16.msra.mxu0 0
    %941 = vmatpush.bf16.msra.mxu0 %v369
    %942 = vmatpush.bf16.msra.mxu0 %v365
    %943 = vmatmul.bf16.gmra.mxu0 %v933
    %v944 = vpop.f32.mrf.mxu0
    %v945 = vadd.f32 0.0, %v944
    %v946 = vpop.f32.mrf.mxu0
    %947 = vdwg.mxu0
    %948 = vmatpush.bf16.msra.mxu0 0
    %949 = vmatpush.bf16.msra.mxu0 0
    %950 = vmatpush.bf16.msra.mxu0 0
    %951 = vmatpush.bf16.msra.mxu0 0
    %952 = vmatpush.bf16.msra.mxu0 0
    %953 = vmatpush.bf16.msra.mxu0 0
    %954 = vmatpush.bf16.msra.mxu0 %v370
    %955 = vmatpush.bf16.msra.mxu0 %v366
    %956 = vmatmul.bf16.gmra.mxu0 %v933
    %v957 = vpop.f32.mrf.mxu0
    %v958 = vadd.f32 0.0, %v957
    %v959 = vpop.f32.mrf.mxu0
    %960 = vdwg.mxu0
    %961 = vmatpush.bf16.msra.mxu0 0
    %962 = vmatpush.bf16.msra.mxu0 0
    %963 = vmatpush.bf16.msra.mxu0 0
    %964 = vmatpush.bf16.msra.mxu0 0
    %965 = vmatpush.bf16.msra.mxu0 0
    %966 = vmatpush.bf16.msra.mxu0 0
    %967 = vmatpush.bf16.msra.mxu0 %v371
    %968 = vmatpush.bf16.msra.mxu0 %v367
    %969 = vmatmul.bf16.gmra.mxu0 %v933
    %v970 = vpop.f32.mrf.mxu0
    %v971 = vadd.f32 0.0, %v970
    %v972 = vpop.f32.mrf.mxu0
    %973 = vdwg.mxu0
    %974 = vmatpush.bf16.msra.mxu0 0
    %975 = vmatpush.bf16.msra.mxu0 0
    %976 = vmatpush.bf16.msra.mxu0 0
    %977 = vmatpush.bf16.msra.mxu0 0
    %978 = vmatpush.bf16.msra.mxu0 0
    %979 = vmatpush.bf16.msra.mxu0 0
    %980 = vmatpush.bf16.msra.mxu0 %v372
    %981 = vmatpush.bf16.msra.mxu0 %v368
    %982 = vmatmul.bf16.gmra.mxu0 %v933
    %v983 = vpop.f32.mrf.mxu0
    %v984 = vadd.f32 0.0, %v983
    %v985 = vpop.f32.mrf.mxu0
    %986 = vdwg.mxu0
    %v991 = vrot.slane %v945, 4
    %v992 = vrot.slane %v958, 4
    %v993 = vrot.slane %v971, 4
    %v994 = vrot.slane %v984, 4
    %v999 = vadd.f32 %v299, %v991
    %v1000 = vadd.f32 %v312, %v992
    %v1001 = vadd.f32 %v325, %v993
    %v1002 = vadd.f32 %v338, %v994
    %v1003 = vxor.u32 %v999, 2147483648
    %v1004 = vxor.u32 %v1000, 2147483648
    %v1005 = vxor.u32 %v1001, 2147483648
    %v1006 = vmul.f32 %v1003, 1.442695
    %v1007 = vpow.pop %v1006
    %v1008 = vmul.f32 %v1004, 1.442695
    %v1009 = vpow.pop %v1008
    %v1010 = vmul.f32 %v1005, 1.442695
    %v1011 = vpow.pop %v1010
    %v1012 = vadd.f32 %v1007, 1.0
    %v1013 = vadd.f32 %v1009, 1.0
    %v1014 = vadd.f32 %v1011, 1.0
    %v1015 = vrcp.pop %v1012
    %v1016 = vmul.f32 %v1012, %v1015
    %v1017 = vsub.f32 1.0, %v1016
    %v1018 = vmul.f32 %v1015, %v1017
    %v1019 = vadd.f32 %v1015, %v1018
    %vm1020 = vweird.f32 %v1012
    %vm1021 = vweird.f32 %v1015
    %vm1022 = vmor %vm1020, %vm1021
    %v1023 = vsel %vm1022, %v1015, %v1019
    %v1024 = vand.u32 2147483647, %v1012
    %vm1025 = vcmp.eq.f32.partialorder %v1024, 8.507059e+37
    %v1026 = vand.u32 %v1012, 2147483648
    %v1027 = vor.u32 1.1754944e-38, %v1026
    %v1028 = vsel %vm1025, %v1027, %v1023
    %v1029 = vmul.f32 1.0, %v1028
    %v1030 = vrcp.pop %v1013
    %v1031 = vmul.f32 %v1013, %v1030
    %v1032 = vsub.f32 1.0, %v1031
    %v1033 = vmul.f32 %v1030, %v1032
    %v1034 = vadd.f32 %v1030, %v1033
    %vm1035 = vweird.f32 %v1013
    %vm1036 = vweird.f32 %v1030
    %vm1037 = vmor %vm1035, %vm1036
    %v1038 = vsel %vm1037, %v1030, %v1034
    %v1039 = vand.u32 2147483647, %v1013
    %vm1040 = vcmp.eq.f32.partialorder %v1039, 8.507059e+37
    %v1041 = vand.u32 %v1013, 2147483648
    %v1042 = vor.u32 1.1754944e-38, %v1041
    %v1043 = vsel %vm1040, %v1042, %v1038
    %v1044 = vmul.f32 1.0, %v1043
    %v1045 = vrcp.pop %v1014
    %v1046 = vmul.f32 %v1014, %v1045
    %v1047 = vsub.f32 1.0, %v1046
    %v1048 = vmul.f32 %v1045, %v1047
    %v1049 = vadd.f32 %v1045, %v1048
    %vm1050 = vweird.f32 %v1014
    %vm1051 = vweird.f32 %v1045
    %vm1052 = vmor %vm1050, %vm1051
    %v1053 = vsel %vm1052, %v1045, %v1049
    %v1054 = vand.u32 2147483647, %v1014
    %vm1055 = vcmp.eq.f32.partialorder %v1054, 8.507059e+37
    %v1056 = vand.u32 %v1014, 2147483648
    %v1057 = vor.u32 1.1754944e-38, %v1056
    %v1058 = vsel %vm1055, %v1057, %v1053
    %v1059 = vmul.f32 1.0, %v1058
    %v1060 = vtanh.pop %v1002
    %v1062 = vrot.slane %v923, 7
    %v1064 = vmul.f32 %v1044, %v1062
    %v1065 = vmul.f32 %v1029, %v1060
    %v1066 = vadd.f32 %v1064, %v1065
    %v1067 = vtanh.pop %v1066
    %v1068 = vmul.f32 %v1059, %v1067
    %1069 = vst [vmem:[#allocation8] sm:$0x10] %v1068
    %v1070 = vpack.c.bf16 %v1068, %v1068
    %v1072 = vrot.slane %v1070, 2
    %v1074 = vsel %vm381, %v1072, 0
    %1076 = vmatpush.bf16.msra.mxu0 0
    %1077 = vmatpush.bf16.msra.mxu0 0
    %1078 = vmatpush.bf16.msra.mxu0 0
    %1079 = vmatpush.bf16.msra.mxu0 0
    %1080 = vmatpush.bf16.msra.mxu0 0
    %1081 = vmatpush.bf16.msra.mxu0 0
    %1082 = vmatpush.bf16.msra.mxu0 %v369
    %1083 = vmatpush.bf16.msra.mxu0 %v365
    %1084 = vmatmul.bf16.gmra.mxu0 %v1074
    %v1085 = vpop.f32.mrf.mxu0
    %v1086 = vadd.f32 0.0, %v1085
    %v1087 = vpop.f32.mrf.mxu0
    %1088 = vdwg.mxu0
    %1089 = vmatpush.bf16.msra.mxu0 0
    %1090 = vmatpush.bf16.msra.mxu0 0
    %1091 = vmatpush.bf16.msra.mxu0 0
    %1092 = vmatpush.bf16.msra.mxu0 0
    %1093 = vmatpush.bf16.msra.mxu0 0
    %1094 = vmatpush.bf16.msra.mxu0 0
    %1095 = vmatpush.bf16.msra.mxu0 %v370
    %1096 = vmatpush.bf16.msra.mxu0 %v366
    %1097 = vmatmul.bf16.gmra.mxu0 %v1074
    %v1098 = vpop.f32.mrf.mxu0
    %v1099 = vadd.f32 0.0, %v1098
    %v1100 = vpop.f32.mrf.mxu0
    %1101 = vdwg.mxu0
    %1102 = vmatpush.bf16.msra.mxu0 0
    %1103 = vmatpush.bf16.msra.mxu0 0
    %1104 = vmatpush.bf16.msra.mxu0 0
    %1105 = vmatpush.bf16.msra.mxu0 0
    %1106 = vmatpush.bf16.msra.mxu0 0
    %1107 = vmatpush.bf16.msra.mxu0 0
    %1108 = vmatpush.bf16.msra.mxu0 %v371
    %1109 = vmatpush.bf16.msra.mxu0 %v367
    %1110 = vmatmul.bf16.gmra.mxu0 %v1074
    %v1111 = vpop.f32.mrf.mxu0
    %v1112 = vadd.f32 0.0, %v1111
    %v1113 = vpop.f32.mrf.mxu0
    %1114 = vdwg.mxu0
    %1115 = vmatpush.bf16.msra.mxu0 0
    %1116 = vmatpush.bf16.msra.mxu0 0
    %1117 = vmatpush.bf16.msra.mxu0 0
    %1118 = vmatpush.bf16.msra.mxu0 0
    %1119 = vmatpush.bf16.msra.mxu0 0
    %1120 = vmatpush.bf16.msra.mxu0 0
    %1121 = vmatpush.bf16.msra.mxu0 %v372
    %1122 = vmatpush.bf16.msra.mxu0 %v368
    %1123 = vmatmul.bf16.gmra.mxu0 %v1074
    %v1124 = vpop.f32.mrf.mxu0
    %v1125 = vadd.f32 0.0, %v1124
    %v1126 = vpop.f32.mrf.mxu0
    %1127 = vdwg.mxu0
    %v1132 = vrot.slane %v1086, 3
    %v1133 = vrot.slane %v1099, 3
    %v1134 = vrot.slane %v1112, 3
    %v1135 = vrot.slane %v1125, 3
    %v1140 = vadd.f32 %v299, %v1132
    %v1141 = vadd.f32 %v312, %v1133
    %v1142 = vadd.f32 %v325, %v1134
    %v1143 = vadd.f32 %v338, %v1135
    %v1144 = vxor.u32 %v1140, 2147483648
    %v1145 = vxor.u32 %v1141, 2147483648
    %v1146 = vxor.u32 %v1142, 2147483648
    %v1147 = vmul.f32 %v1144, 1.442695
    %v1148 = vpow.pop %v1147
    %v1149 = vmul.f32 %v1145, 1.442695
    %v1150 = vpow.pop %v1149
    %v1151 = vmul.f32 %v1146, 1.442695
    %v1152 = vpow.pop %v1151
    %v1153 = vadd.f32 %v1148, 1.0
    %v1154 = vadd.f32 %v1150, 1.0
    %v1155 = vadd.f32 %v1152, 1.0
    %v1156 = vrcp.pop %v1153
    %v1157 = vmul.f32 %v1153, %v1156
    %v1158 = vsub.f32 1.0, %v1157
    %v1159 = vmul.f32 %v1156, %v1158
    %v1160 = vadd.f32 %v1156, %v1159
    %vm1161 = vweird.f32 %v1153
    %vm1162 = vweird.f32 %v1156
    %vm1163 = vmor %vm1161, %vm1162
    %v1164 = vsel %vm1163, %v1156, %v1160
    %v1165 = vand.u32 2147483647, %v1153
    %vm1166 = vcmp.eq.f32.partialorder %v1165, 8.507059e+37
    %v1167 = vand.u32 %v1153, 2147483648
    %v1168 = vor.u32 1.1754944e-38, %v1167
    %v1169 = vsel %vm1166, %v1168, %v1164
    %v1170 = vmul.f32 1.0, %v1169
    %v1171 = vrcp.pop %v1154
    %v1172 = vmul.f32 %v1154, %v1171
    %v1173 = vsub.f32 1.0, %v1172
    %v1174 = vmul.f32 %v1171, %v1173
    %v1175 = vadd.f32 %v1171, %v1174
    %vm1176 = vweird.f32 %v1154
    %vm1177 = vweird.f32 %v1171
    %vm1178 = vmor %vm1176, %vm1177
    %v1179 = vsel %vm1178, %v1171, %v1175
    %v1180 = vand.u32 2147483647, %v1154
    %vm1181 = vcmp.eq.f32.partialorder %v1180, 8.507059e+37
    %v1182 = vand.u32 %v1154, 2147483648
    %v1183 = vor.u32 1.1754944e-38, %v1182
    %v1184 = vsel %vm1181, %v1183, %v1179
    %v1185 = vmul.f32 1.0, %v1184
    %v1186 = vrcp.pop %v1155
    %v1187 = vmul.f32 %v1155, %v1186
    %v1188 = vsub.f32 1.0, %v1187
    %v1189 = vmul.f32 %v1186, %v1188
    %v1190 = vadd.f32 %v1186, %v1189
    %vm1191 = vweird.f32 %v1155
    %vm1192 = vweird.f32 %v1186
    %vm1193 = vmor %vm1191, %vm1192
    %v1194 = vsel %vm1193, %v1186, %v1190
    %v1195 = vand.u32 2147483647, %v1155
    %vm1196 = vcmp.eq.f32.partialorder %v1195, 8.507059e+37
    %v1197 = vand.u32 %v1155, 2147483648
    %v1198 = vor.u32 1.1754944e-38, %v1197
    %v1199 = vsel %vm1196, %v1198, %v1194
    %v1200 = vmul.f32 1.0, %v1199
    %v1201 = vtanh.pop %v1143
    %v1203 = vrot.slane %v1066, 7
    %v1205 = vmul.f32 %v1185, %v1203
    %v1206 = vmul.f32 %v1170, %v1201
    %v1207 = vadd.f32 %v1205, %v1206
    %v1208 = vtanh.pop %v1207
    %v1209 = vmul.f32 %v1200, %v1208
    %1210 = vst [vmem:[#allocation8] sm:$0x20] %v1209
    %v1211 = vpack.c.bf16 %v1209, %v1209
    %v1213 = vshrl.u32 %v1211, 16
    %v1215 = vrot.slane %v1213, 2
    %v1217 = vsel %vm381, %v1215, 0
    %1219 = vmatpush.bf16.msra.mxu0 0
    %1220 = vmatpush.bf16.msra.mxu0 0
    %1221 = vmatpush.bf16.msra.mxu0 0
    %1222 = vmatpush.bf16.msra.mxu0 0
    %1223 = vmatpush.bf16.msra.mxu0 0
    %1224 = vmatpush.bf16.msra.mxu0 0
    %1225 = vmatpush.bf16.msra.mxu0 %v369
    %1226 = vmatpush.bf16.msra.mxu0 %v365
    %1227 = vmatmul.bf16.gmra.mxu0 %v1217
    %v1228 = vpop.f32.mrf.mxu0
    %v1229 = vadd.f32 0.0, %v1228
    %v1230 = vpop.f32.mrf.mxu0
    %1231 = vdwg.mxu0
    %1232 = vmatpush.bf16.msra.mxu0 0
    %1233 = vmatpush.bf16.msra.mxu0 0
    %1234 = vmatpush.bf16.msra.mxu0 0
    %1235 = vmatpush.bf16.msra.mxu0 0
    %1236 = vmatpush.bf16.msra.mxu0 0
    %1237 = vmatpush.bf16.msra.mxu0 0
    %1238 = vmatpush.bf16.msra.mxu0 %v370
    %1239 = vmatpush.bf16.msra.mxu0 %v366
    %1240 = vmatmul.bf16.gmra.mxu0 %v1217
    %v1241 = vpop.f32.mrf.mxu0
    %v1242 = vadd.f32 0.0, %v1241
    %v1243 = vpop.f32.mrf.mxu0
    %1244 = vdwg.mxu0
    %1245 = vmatpush.bf16.msra.mxu0 0
    %1246 = vmatpush.bf16.msra.mxu0 0
    %1247 = vmatpush.bf16.msra.mxu0 0
    %1248 = vmatpush.bf16.msra.mxu0 0
    %1249 = vmatpush.bf16.msra.mxu0 0
    %1250 = vmatpush.bf16.msra.mxu0 0
    %1251 = vmatpush.bf16.msra.mxu0 %v371
    %1252 = vmatpush.bf16.msra.mxu0 %v367
    %1253 = vmatmul.bf16.gmra.mxu0 %v1217
    %v1254 = vpop.f32.mrf.mxu0
    %v1255 = vadd.f32 0.0, %v1254
    %v1256 = vpop.f32.mrf.mxu0
    %1257 = vdwg.mxu0
    %1258 = vmatpush.bf16.msra.mxu0 0
    %1259 = vmatpush.bf16.msra.mxu0 0
    %1260 = vmatpush.bf16.msra.mxu0 0
    %1261 = vmatpush.bf16.msra.mxu0 0
    %1262 = vmatpush.bf16.msra.mxu0 0
    %1263 = vmatpush.bf16.msra.mxu0 0
    %1264 = vmatpush.bf16.msra.mxu0 %v372
    %1265 = vmatpush.bf16.msra.mxu0 %v368
    %1266 = vmatmul.bf16.gmra.mxu0 %v1217
    %v1267 = vpop.f32.mrf.mxu0
    %v1268 = vadd.f32 0.0, %v1267
    %v1269 = vpop.f32.mrf.mxu0
    %1270 = vdwg.mxu0
    %v1275 = vrot.slane %v1229, 2
    %v1276 = vrot.slane %v1242, 2
    %v1277 = vrot.slane %v1255, 2
    %v1278 = vrot.slane %v1268, 2
    %v1283 = vadd.f32 %v299, %v1275
    %v1284 = vadd.f32 %v312, %v1276
    %v1285 = vadd.f32 %v325, %v1277
    %v1286 = vadd.f32 %v338, %v1278
    %v1287 = vxor.u32 %v1283, 2147483648
    %v1288 = vxor.u32 %v1284, 2147483648
    %v1289 = vxor.u32 %v1285, 2147483648
    %v1290 = vmul.f32 %v1287, 1.442695
    %v1291 = vpow.pop %v1290
    %v1292 = vmul.f32 %v1288, 1.442695
    %v1293 = vpow.pop %v1292
    %v1294 = vmul.f32 %v1289, 1.442695
    %v1295 = vpow.pop %v1294
    %v1296 = vadd.f32 %v1291, 1.0
    %v1297 = vadd.f32 %v1293, 1.0
    %v1298 = vadd.f32 %v1295, 1.0
    %v1299 = vrcp.pop %v1296
    %v1300 = vmul.f32 %v1296, %v1299
    %v1301 = vsub.f32 1.0, %v1300
    %v1302 = vmul.f32 %v1299, %v1301
    %v1303 = vadd.f32 %v1299, %v1302
    %vm1304 = vweird.f32 %v1296
    %vm1305 = vweird.f32 %v1299
    %vm1306 = vmor %vm1304, %vm1305
    %v1307 = vsel %vm1306, %v1299, %v1303
    %v1308 = vand.u32 2147483647, %v1296
    %vm1309 = vcmp.eq.f32.partialorder %v1308, 8.507059e+37
    %v1310 = vand.u32 %v1296, 2147483648
    %v1311 = vor.u32 1.1754944e-38, %v1310
    %v1312 = vsel %vm1309, %v1311, %v1307
    %v1313 = vmul.f32 1.0, %v1312
    %v1314 = vrcp.pop %v1297
    %v1315 = vmul.f32 %v1297, %v1314
    %v1316 = vsub.f32 1.0, %v1315
    %v1317 = vmul.f32 %v1314, %v1316
    %v1318 = vadd.f32 %v1314, %v1317
    %vm1319 = vweird.f32 %v1297
    %vm1320 = vweird.f32 %v1314
    %vm1321 = vmor %vm1319, %vm1320
    %v1322 = vsel %vm1321, %v1314, %v1318
    %v1323 = vand.u32 2147483647, %v1297
    %vm1324 = vcmp.eq.f32.partialorder %v1323, 8.507059e+37
    %v1325 = vand.u32 %v1297, 2147483648
    %v1326 = vor.u32 1.1754944e-38, %v1325
    %v1327 = vsel %vm1324, %v1326, %v1322
    %v1328 = vmul.f32 1.0, %v1327
    %v1329 = vrcp.pop %v1298
    %v1330 = vmul.f32 %v1298, %v1329
    %v1331 = vsub.f32 1.0, %v1330
    %v1332 = vmul.f32 %v1329, %v1331
    %v1333 = vadd.f32 %v1329, %v1332
    %vm1334 = vweird.f32 %v1298
    %vm1335 = vweird.f32 %v1329
    %vm1336 = vmor %vm1334, %vm1335
    %v1337 = vsel %vm1336, %v1329, %v1333
    %v1338 = vand.u32 2147483647, %v1298
    %vm1339 = vcmp.eq.f32.partialorder %v1338, 8.507059e+37
    %v1340 = vand.u32 %v1298, 2147483648
    %v1341 = vor.u32 1.1754944e-38, %v1340
    %v1342 = vsel %vm1339, %v1341, %v1337
    %v1343 = vmul.f32 1.0, %v1342
    %v1344 = vtanh.pop %v1286
    %v1346 = vrot.slane %v1207, 7
    %v1348 = vmul.f32 %v1328, %v1346
    %v1349 = vmul.f32 %v1313, %v1344
    %v1350 = vadd.f32 %v1348, %v1349
    %v1351 = vtanh.pop %v1350
    %v1352 = vmul.f32 %v1343, %v1351
    %1353 = vst [vmem:[#allocation8] sm:$0x40] %v1352
    %v1354 = vpack.c.bf16 %v1352, %v1352
    %v1356 = vrot.slane %v1354, 3
    %v1358 = vsel %vm381, %v1356, 0
    %1360 = vmatpush.bf16.msra.mxu0 0
    %1361 = vmatpush.bf16.msra.mxu0 0
    %1362 = vmatpush.bf16.msra.mxu0 0
    %1363 = vmatpush.bf16.msra.mxu0 0
    %1364 = vmatpush.bf16.msra.mxu0 0
    %1365 = vmatpush.bf16.msra.mxu0 0
    %1366 = vmatpush.bf16.msra.mxu0 %v369
    %1367 = vmatpush.bf16.msra.mxu0 %v365
    %1368 = vmatmul.bf16.gmra.mxu0 %v1358
    %v1369 = vpop.f32.mrf.mxu0
    %v1370 = vadd.f32 0.0, %v1369
    %v1371 = vpop.f32.mrf.mxu0
    %1372 = vdwg.mxu0
    %1373 = vmatpush.bf16.msra.mxu0 0
    %1374 = vmatpush.bf16.msra.mxu0 0
    %1375 = vmatpush.bf16.msra.mxu0 0
    %1376 = vmatpush.bf16.msra.mxu0 0
    %1377 = vmatpush.bf16.msra.mxu0 0
    %1378 = vmatpush.bf16.msra.mxu0 0
    %1379 = vmatpush.bf16.msra.mxu0 %v370
    %1380 = vmatpush.bf16.msra.mxu0 %v366
    %1381 = vmatmul.bf16.gmra.mxu0 %v1358
    %v1382 = vpop.f32.mrf.mxu0
    %v1383 = vadd.f32 0.0, %v1382
    %v1384 = vpop.f32.mrf.mxu0
    %1385 = vdwg.mxu0
    %1386 = vmatpush.bf16.msra.mxu0 0
    %1387 = vmatpush.bf16.msra.mxu0 0
    %1388 = vmatpush.bf16.msra.mxu0 0
    %1389 = vmatpush.bf16.msra.mxu0 0
    %1390 = vmatpush.bf16.msra.mxu0 0
    %1391 = vmatpush.bf16.msra.mxu0 0
    %1392 = vmatpush.bf16.msra.mxu0 %v371
    %1393 = vmatpush.bf16.msra.mxu0 %v367
    %1394 = vmatmul.bf16.gmra.mxu0 %v1358
    %v1395 = vpop.f32.mrf.mxu0
    %v1396 = vadd.f32 0.0, %v1395
    %v1397 = vpop.f32.mrf.mxu0
    %1398 = vdwg.mxu0
    %1399 = vmatpush.bf16.msra.mxu0 0
    %1400 = vmatpush.bf16.msra.mxu0 0
    %1401 = vmatpush.bf16.msra.mxu0 0
    %1402 = vmatpush.bf16.msra.mxu0 0
    %1403 = vmatpush.bf16.msra.mxu0 0
    %1404 = vmatpush.bf16.msra.mxu0 0
    %1405 = vmatpush.bf16.msra.mxu0 %v372
    %1406 = vmatpush.bf16.msra.mxu0 %v368
    %1407 = vmatmul.bf16.gmra.mxu0 %v1358
    %v1408 = vpop.f32.mrf.mxu0
    %v1409 = vadd.f32 0.0, %v1408
    %v1410 = vpop.f32.mrf.mxu0
    %1411 = vdwg.mxu0
    %v1416 = vrot.slane %v1370, 1
    %v1417 = vrot.slane %v1383, 1
    %v1418 = vrot.slane %v1396, 1
    %v1419 = vrot.slane %v1409, 1
    %v1424 = vadd.f32 %v299, %v1416
    %v1425 = vadd.f32 %v312, %v1417
    %v1426 = vadd.f32 %v325, %v1418
    %v1427 = vadd.f32 %v338, %v1419
    %v1428 = vxor.u32 %v1424, 2147483648
    %v1429 = vxor.u32 %v1425, 2147483648
    %v1430 = vxor.u32 %v1426, 2147483648
    %v1431 = vmul.f32 %v1428, 1.442695
    %v1432 = vpow.pop %v1431
    %v1433 = vmul.f32 %v1429, 1.442695
    %v1434 = vpow.pop %v1433
    %v1435 = vmul.f32 %v1430, 1.442695
    %v1436 = vpow.pop %v1435
    %v1437 = vadd.f32 %v1432, 1.0
    %v1438 = vadd.f32 %v1434, 1.0
    %v1439 = vadd.f32 %v1436, 1.0
    %v1440 = vrcp.pop %v1437
    %v1441 = vmul.f32 %v1437, %v1440
    %v1442 = vsub.f32 1.0, %v1441
    %v1443 = vmul.f32 %v1440, %v1442
    %v1444 = vadd.f32 %v1440, %v1443
    %vm1445 = vweird.f32 %v1437
    %vm1446 = vweird.f32 %v1440
    %vm1447 = vmor %vm1445, %vm1446
    %v1448 = vsel %vm1447, %v1440, %v1444
    %v1449 = vand.u32 2147483647, %v1437
    %vm1450 = vcmp.eq.f32.partialorder %v1449, 8.507059e+37
    %v1451 = vand.u32 %v1437, 2147483648
    %v1452 = vor.u32 1.1754944e-38, %v1451
    %v1453 = vsel %vm1450, %v1452, %v1448
    %v1454 = vmul.f32 1.0, %v1453
    %v1455 = vrcp.pop %v1438
    %v1456 = vmul.f32 %v1438, %v1455
    %v1457 = vsub.f32 1.0, %v1456
    %v1458 = vmul.f32 %v1455, %v1457
    %v1459 = vadd.f32 %v1455, %v1458
    %vm1460 = vweird.f32 %v1438
    %vm1461 = vweird.f32 %v1455
    %vm1462 = vmor %vm1460, %vm1461
    %v1463 = vsel %vm1462, %v1455, %v1459
    %v1464 = vand.u32 2147483647, %v1438
    %vm1465 = vcmp.eq.f32.partialorder %v1464, 8.507059e+37
    %v1466 = vand.u32 %v1438, 2147483648
    %v1467 = vor.u32 1.1754944e-38, %v1466
    %v1468 = vsel %vm1465, %v1467, %v1463
    %v1469 = vmul.f32 1.0, %v1468
    %v1470 = vrcp.pop %v1439
    %v1471 = vmul.f32 %v1439, %v1470
    %v1472 = vsub.f32 1.0, %v1471
    %v1473 = vmul.f32 %v1470, %v1472
    %v1474 = vadd.f32 %v1470, %v1473
    %vm1475 = vweird.f32 %v1439
    %vm1476 = vweird.f32 %v1470
    %vm1477 = vmor %vm1475, %vm1476
    %v1478 = vsel %vm1477, %v1470, %v1474
    %v1479 = vand.u32 2147483647, %v1439
    %vm1480 = vcmp.eq.f32.partialorder %v1479, 8.507059e+37
    %v1481 = vand.u32 %v1439, 2147483648
    %v1482 = vor.u32 1.1754944e-38, %v1481
    %v1483 = vsel %vm1480, %v1482, %v1478
    %v1484 = vmul.f32 1.0, %v1483
    %v1485 = vtanh.pop %v1427
    %v1487 = vrot.slane %v1350, 7
    %v1489 = vmul.f32 %v1469, %v1487
    %v1490 = vmul.f32 %v1454, %v1485
    %v1491 = vadd.f32 %v1489, %v1490
    %v1492 = vtanh.pop %v1491
    %v1493 = vmul.f32 %v1484, %v1492
    %1494 = vst [vmem:[#allocation8] sm:$0x80] %v1493
    %v1495 = vld [vmem:[#allocation8] sm:$0xff]
    %v1496 = vmax.f32 %v1495, 0.0
    %vm1497 = vcmp.lt.s32.totalorder %v77, 16
    %v1498 = vsel %vm1497, %v1493, 0.0
    %v1499 = vsel %vm1497, %v1491, 0.0
    %v1500 = vld [vmem:[#allocation7] sm:$0xff]
    %v1501 = vld [vmem:[#allocation7 + $0x8] sm:$0xff]
    %v1502 = vld [vmem:[#allocation7 + $0x10] sm:$0xff]
    %v1503 = vld [vmem:[#allocation7 + $0x18] sm:$0xff]
    %v1504 = vld [vmem:[#allocation7 + $0x20] sm:$0xff]
    %v1505 = vld [vmem:[#allocation7 + $0x28] sm:$0xff]
    %v1506 = vld [vmem:[#allocation7 + $0x30] sm:$0xff]
    %v1507 = vld [vmem:[#allocation7 + $0x38] sm:$0xff]
    %v1508 = vld [vmem:[#allocation7 + $0x40] sm:$0xff]
    %v1509 = vld [vmem:[#allocation7 + $0x48] sm:$0xff]
    %v1510 = vld [vmem:[#allocation7 + $0x50] sm:$0xff]
    %v1511 = vld [vmem:[#allocation7 + $0x58] sm:$0xff]
    %v1512 = vld [vmem:[#allocation7 + $0x60] sm:$0xff]
    %v1513 = vld [vmem:[#allocation7 + $0x68] sm:$0xff]
    %v1514 = vld [vmem:[#allocation7 + $0x70] sm:$0xff]
    %v1515 = vld [vmem:[#allocation7 + $0x78] sm:$0xff]
    %v1516 = vld [vmem:[#allocation7 + $0x80] sm:$0xff]
    %v1517 = vld [vmem:[#allocation7 + $0x88] sm:$0xff]
    %v1518 = vld [vmem:[#allocation7 + $0x90] sm:$0xff]
    %v1519 = vld [vmem:[#allocation7 + $0x98] sm:$0xff]
    %v1520 = vld [vmem:[#allocation7 + $0xa0] sm:$0xff]
    %v1521 = vld [vmem:[#allocation7 + $0xa8] sm:$0xff]
    %v1522 = vld [vmem:[#allocation7 + $0xb0] sm:$0xff]
    %v1523 = vld [vmem:[#allocation7 + $0xb8] sm:$0xff]
    %v1524 = vld [vmem:[#allocation7 + $0xc0] sm:$0xff]
    %v1525 = vld [vmem:[#allocation7 + $0xc8] sm:$0xff]
    %v1526 = vld [vmem:[#allocation7 + $0xd0] sm:$0xff]
    %v1527 = vld [vmem:[#allocation7 + $0xd8] sm:$0xff]
    %v1528 = vld [vmem:[#allocation7 + $0xe0] sm:$0xff]
    %v1529 = vld [vmem:[#allocation7 + $0xe8] sm:$0xff]
    %v1530 = vld [vmem:[#allocation7 + $0xf0] sm:$0xff]
    %v1531 = vld [vmem:[#allocation7 + $0xf8] sm:$0xff]
    %v1532 = vld [vmem:[%s5] sm:$0xff]
    %v1533 = vld [vmem:[%s5 + $0x8] sm:$0xff]
    %v1534 = vld [vmem:[%s5 + $0x10] sm:$0xff]
    %v1535 = vld [vmem:[%s5 + $0x18] sm:$0xff]
    %v1536 = vld [vmem:[%s6] sm:$0xf]
    %v1537 = vpack.c.bf16 %v1496, %v1496
    %v1539 = vperm.slane %v1536, 0
    %v1540 = vperm.slane %v1536, 1
    %v1541 = vperm.slane %v1536, 2
    %v1542 = vperm.slane %v1536, 3
    %v1579 = vunpack.c.l.b16 %v1500
    %v1580 = vunpack.c.h.b16 %v1500
    %v1581 = vunpack.c.l.b16 %v1501
    %v1582 = vunpack.c.h.b16 %v1501
    %v1583 = vunpack.c.l.b16 %v1502
    %v1584 = vunpack.c.h.b16 %v1502
    %v1585 = vunpack.c.l.b16 %v1503
    %v1586 = vunpack.c.h.b16 %v1503
    %v1587 = vunpack.c.l.b16 %v1504
    %v1588 = vunpack.c.h.b16 %v1504
    %v1589 = vunpack.c.l.b16 %v1505
    %v1590 = vunpack.c.h.b16 %v1505
    %v1591 = vunpack.c.l.b16 %v1506
    %v1592 = vunpack.c.h.b16 %v1506
    %v1593 = vunpack.c.l.b16 %v1507
    %v1594 = vunpack.c.h.b16 %v1507
    %v1595 = vunpack.c.l.b16 %v1508
    %v1596 = vunpack.c.h.b16 %v1508
    %v1597 = vunpack.c.l.b16 %v1509
    %v1598 = vunpack.c.h.b16 %v1509
    %v1599 = vunpack.c.l.b16 %v1510
    %v1600 = vunpack.c.h.b16 %v1510
    %v1601 = vunpack.c.l.b16 %v1511
    %v1602 = vunpack.c.h.b16 %v1511
    %v1603 = vunpack.c.l.b16 %v1512
    %v1604 = vunpack.c.h.b16 %v1512
    %v1605 = vunpack.c.l.b16 %v1513
    %v1606 = vunpack.c.h.b16 %v1513
    %v1607 = vunpack.c.l.b16 %v1514
    %v1608 = vunpack.c.h.b16 %v1514
    %v1609 = vunpack.c.l.b16 %v1515
    %v1610 = vunpack.c.h.b16 %v1515
    %v1611 = vunpack.c.l.b16 %v1516
    %v1612 = vunpack.c.h.b16 %v1516
    %v1613 = vunpack.c.l.b16 %v1517
    %v1614 = vunpack.c.h.b16 %v1517
    %v1615 = vunpack.c.l.b16 %v1518
    %v1616 = vunpack.c.h.b16 %v1518
    %v1617 = vunpack.c.l.b16 %v1519
    %v1618 = vunpack.c.h.b16 %v1519
    %v1619 = vunpack.c.l.b16 %v1520
    %v1620 = vunpack.c.h.b16 %v1520
    %v1621 = vunpack.c.l.b16 %v1521
    %v1622 = vunpack.c.h.b16 %v1521
    %v1623 = vunpack.c.l.b16 %v1522
    %v1624 = vunpack.c.h.b16 %v1522
    %v1625 = vunpack.c.l.b16 %v1523
    %v1626 = vunpack.c.h.b16 %v1523
    %v1627 = vunpack.c.l.b16 %v1524
    %v1628 = vunpack.c.h.b16 %v1524
    %v1629 = vunpack.c.l.b16 %v1525
    %v1630 = vunpack.c.h.b16 %v1525
    %v1631 = vunpack.c.l.b16 %v1526
    %v1632 = vunpack.c.h.b16 %v1526
    %v1633 = vunpack.c.l.b16 %v1527
    %v1634 = vunpack.c.h.b16 %v1527
    %v1635 = vunpack.c.l.b16 %v1528
    %v1636 = vunpack.c.h.b16 %v1528
    %v1637 = vunpack.c.l.b16 %v1529
    %v1638 = vunpack.c.h.b16 %v1529
    %v1639 = vunpack.c.l.b16 %v1530
    %v1640 = vunpack.c.h.b16 %v1530
    %v1641 = vunpack.c.l.b16 %v1531
    %v1642 = vunpack.c.h.b16 %v1531
    %v1643 = vpack.c.b16 %v1583, %v1579
    %v1644 = vpack.c.b16 %v1584, %v1580
    %v1645 = vpack.c.b16 %v1585, %v1581
    %v1646 = vpack.c.b16 %v1586, %v1582
    %v1647 = vpack.c.b16 %v1591, %v1587
    %v1648 = vpack.c.b16 %v1592, %v1588
    %v1649 = vpack.c.b16 %v1593, %v1589
    %v1650 = vpack.c.b16 %v1594, %v1590
    %v1651 = vpack.c.b16 %v1599, %v1595
    %v1652 = vpack.c.b16 %v1600, %v1596
    %v1653 = vpack.c.b16 %v1601, %v1597
    %v1654 = vpack.c.b16 %v1602, %v1598
    %v1655 = vpack.c.b16 %v1607, %v1603
    %v1656 = vpack.c.b16 %v1608, %v1604
    %v1657 = vpack.c.b16 %v1609, %v1605
    %v1658 = vpack.c.b16 %v1610, %v1606
    %v1659 = vpack.c.b16 %v1615, %v1611
    %v1660 = vpack.c.b16 %v1616, %v1612
    %v1661 = vpack.c.b16 %v1617, %v1613
    %v1662 = vpack.c.b16 %v1618, %v1614
    %v1663 = vpack.c.b16 %v1623, %v1619
    %v1664 = vpack.c.b16 %v1624, %v1620
    %v1665 = vpack.c.b16 %v1625, %v1621
    %v1666 = vpack.c.b16 %v1626, %v1622
    %v1667 = vpack.c.b16 %v1631, %v1627
    %v1668 = vpack.c.b16 %v1632, %v1628
    %v1669 = vpack.c.b16 %v1633, %v1629
    %v1670 = vpack.c.b16 %v1634, %v1630
    %v1671 = vpack.c.b16 %v1639, %v1635
    %v1672 = vpack.c.b16 %v1640, %v1636
    %v1673 = vpack.c.b16 %v1641, %v1637
    %v1674 = vpack.c.b16 %v1642, %v1638
    %1707 = vmatpush.bf16.msra.mxu0 %v1671
    %1708 = vmatpush.bf16.msra.mxu0 %v1667
    %1709 = vmatpush.bf16.msra.mxu0 %v1663
    %1710 = vmatpush.bf16.msra.mxu0 %v1659
    %1711 = vmatpush.bf16.msra.mxu0 %v1655
    %1712 = vmatpush.bf16.msra.mxu0 %v1651
    %1713 = vmatpush.bf16.msra.mxu0 %v1647
    %1714 = vmatpush.bf16.msra.mxu0 %v1643
    %1715 = vmatmul.bf16.gmra.mxu0 %v1537
    %v1716 = vpop.f32.mrf.mxu0
    %v1717 = vadd.f32 %v1539, %v1716
    %v1718 = vpop.f32.mrf.mxu0
    %1719 = vdwg.mxu0
    %1720 = vmatpush.bf16.msra.mxu0 %v1672
    %1721 = vmatpush.bf16.msra.mxu0 %v1668
    %1722 = vmatpush.bf16.msra.mxu0 %v1664
    %1723 = vmatpush.bf16.msra.mxu0 %v1660
    %1724 = vmatpush.bf16.msra.mxu0 %v1656
    %1725 = vmatpush.bf16.msra.mxu0 %v1652
    %1726 = vmatpush.bf16.msra.mxu0 %v1648
    %1727 = vmatpush.bf16.msra.mxu0 %v1644
    %1728 = vmatmul.bf16.gmra.mxu0 %v1537
    %v1729 = vpop.f32.mrf.mxu0
    %v1730 = vadd.f32 %v1540, %v1729
    %v1731 = vpop.f32.mrf.mxu0
    %1732 = vdwg.mxu0
    %1733 = vmatpush.bf16.msra.mxu0 %v1673
    %1734 = vmatpush.bf16.msra.mxu0 %v1669
    %1735 = vmatpush.bf16.msra.mxu0 %v1665
    %1736 = vmatpush.bf16.msra.mxu0 %v1661
    %1737 = vmatpush.bf16.msra.mxu0 %v1657
    %1738 = vmatpush.bf16.msra.mxu0 %v1653
    %1739 = vmatpush.bf16.msra.mxu0 %v1649
    %1740 = vmatpush.bf16.msra.mxu0 %v1645
    %1741 = vmatmul.bf16.gmra.mxu0 %v1537
    %v1742 = vpop.f32.mrf.mxu0
    %v1743 = vadd.f32 %v1541, %v1742
    %v1744 = vpop.f32.mrf.mxu0
    %1745 = vdwg.mxu0
    %1746 = vmatpush.bf16.msra.mxu0 %v1674
    %1747 = vmatpush.bf16.msra.mxu0 %v1670
    %1748 = vmatpush.bf16.msra.mxu0 %v1666
    %1749 = vmatpush.bf16.msra.mxu0 %v1662
    %1750 = vmatpush.bf16.msra.mxu0 %v1658
    %1751 = vmatpush.bf16.msra.mxu0 %v1654
    %1752 = vmatpush.bf16.msra.mxu0 %v1650
    %1753 = vmatpush.bf16.msra.mxu0 %v1646
    %1754 = vmatmul.bf16.gmra.mxu0 %v1537
    %v1755 = vpop.f32.mrf.mxu0
    %v1756 = vadd.f32 %v1542, %v1755
    %v1757 = vpop.f32.mrf.mxu0
    %1758 = vdwg.mxu0
    %v1759 = vpack.c.bf16 %v1498, %v1498
    %v1761 = vshrl.u32 %v1759, 16
    %v1763 = vrot.slane %v1761, 3
    %v1768 = vunpack.c.l.b16 %v1532
    %v1769 = vunpack.c.h.b16 %v1532
    %v1770 = vunpack.c.l.b16 %v1533
    %v1771 = vunpack.c.h.b16 %v1533
    %v1772 = vunpack.c.l.b16 %v1534
    %v1773 = vunpack.c.h.b16 %v1534
    %v1774 = vunpack.c.l.b16 %v1535
    %v1775 = vunpack.c.h.b16 %v1535
    %v1776 = vpack.c.b16 %v1772, %v1768
    %v1777 = vpack.c.b16 %v1773, %v1769
    %v1778 = vpack.c.b16 %v1774, %v1770
    %v1779 = vpack.c.b16 %v1775, %v1771
    %vm1784 = vcmask 130048
    %v1786 = vsel %vm1784, %v1763, 0
    %1788 = vmatpush.bf16.msra.mxu0 0
    %1789 = vmatpush.bf16.msra.mxu0 0
    %1790 = vmatpush.bf16.msra.mxu0 0
    %1791 = vmatpush.bf16.msra.mxu0 0
    %1792 = vmatpush.bf16.msra.mxu0 0
    %1793 = vmatpush.bf16.msra.mxu0 0
    %1794 = vmatpush.bf16.msra.mxu0 0
    %1795 = vmatpush.bf16.msra.mxu0 %v1776
    %1796 = vmatmul.bf16.gmra.mxu0 %v1786
    %v1797 = vpop.f32.mrf.mxu0
    %v1798 = vadd.f32 0.0, %v1797
    %v1799 = vpop.f32.mrf.mxu0
    %1800 = vdwg.mxu0
    %1801 = vmatpush.bf16.msra.mxu0 0
    %1802 = vmatpush.bf16.msra.mxu0 0
    %1803 = vmatpush.bf16.msra.mxu0 0
    %1804 = vmatpush.bf16.msra.mxu0 0
    %1805 = vmatpush.bf16.msra.mxu0 0
    %1806 = vmatpush.bf16.msra.mxu0 0
    %1807 = vmatpush.bf16.msra.mxu0 0
    %1808 = vmatpush.bf16.msra.mxu0 %v1777
    %1809 = vmatmul.bf16.gmra.mxu0 %v1786
    %v1810 = vpop.f32.mrf.mxu0
    %v1811 = vadd.f32 0.0, %v1810
    %v1812 = vpop.f32.mrf.mxu0
    %1813 = vdwg.mxu0
    %1814 = vmatpush.bf16.msra.mxu0 0
    %1815 = vmatpush.bf16.msra.mxu0 0
    %1816 = vmatpush.bf16.msra.mxu0 0
    %1817 = vmatpush.bf16.msra.mxu0 0
    %1818 = vmatpush.bf16.msra.mxu0 0
    %1819 = vmatpush.bf16.msra.mxu0 0
    %1820 = vmatpush.bf16.msra.mxu0 0
    %1821 = vmatpush.bf16.msra.mxu0 %v1778
    %1822 = vmatmul.bf16.gmra.mxu0 %v1786
    %v1823 = vpop.f32.mrf.mxu0
    %v1824 = vadd.f32 0.0, %v1823
    %v1825 = vpop.f32.mrf.mxu0
    %1826 = vdwg.mxu0
    %1827 = vmatpush.bf16.msra.mxu0 0
    %1828 = vmatpush.bf16.msra.mxu0 0
    %1829 = vmatpush.bf16.msra.mxu0 0
    %1830 = vmatpush.bf16.msra.mxu0 0
    %1831 = vmatpush.bf16.msra.mxu0 0
    %1832 = vmatpush.bf16.msra.mxu0 0
    %1833 = vmatpush.bf16.msra.mxu0 0
    %1834 = vmatpush.bf16.msra.mxu0 %v1779
    %1835 = vmatmul.bf16.gmra.mxu0 %v1786
    %v1836 = vpop.f32.mrf.mxu0
    %v1837 = vadd.f32 0.0, %v1836
    %v1838 = vpop.f32.mrf.mxu0
    %1839 = vdwg.mxu0
    %v1840 = vadd.f32 %v1717, %v1798
    %v1841 = vadd.f32 %v1730, %v1811
    %v1842 = vadd.f32 %v1743, %v1824
    %v1843 = vadd.f32 %v1756, %v1837
    %v1844 = vxor.u32 %v1840, 2147483648
    %v1845 = vxor.u32 %v1841, 2147483648
    %v1846 = vxor.u32 %v1842, 2147483648
    %v1847 = vmul.f32 %v1844, 1.442695
    %v1848 = vpow.pop %v1847
    %v1849 = vmul.f32 %v1845, 1.442695
    %v1850 = vpow.pop %v1849
    %v1851 = vmul.f32 %v1846, 1.442695
    %v1852 = vpow.pop %v1851
    %v1853 = vadd.f32 %v1848, 1.0
    %v1854 = vadd.f32 %v1850, 1.0
    %v1855 = vadd.f32 %v1852, 1.0
    %v1856 = vrcp.pop %v1853
    %v1857 = vmul.f32 %v1853, %v1856
    %v1858 = vsub.f32 1.0, %v1857
    %v1859 = vmul.f32 %v1856, %v1858
    %v1860 = vadd.f32 %v1856, %v1859
    %vm1861 = vweird.f32 %v1853
    %vm1862 = vweird.f32 %v1856
    %vm1863 = vmor %vm1861, %vm1862
    %v1864 = vsel %vm1863, %v1856, %v1860
    %v1865 = vand.u32 2147483647, %v1853
    %vm1866 = vcmp.eq.f32.partialorder %v1865, 8.507059e+37
    %v1867 = vand.u32 %v1853, 2147483648
    %v1868 = vor.u32 1.1754944e-38, %v1867
    %v1869 = vsel %vm1866, %v1868, %v1864
    %v1870 = vmul.f32 1.0, %v1869
    %v1871 = vrcp.pop %v1854
    %v1872 = vmul.f32 %v1854, %v1871
    %v1873 = vsub.f32 1.0, %v1872
    %v1874 = vmul.f32 %v1871, %v1873
    %v1875 = vadd.f32 %v1871, %v1874
    %vm1876 = vweird.f32 %v1854
    %vm1877 = vweird.f32 %v1871
    %vm1878 = vmor %vm1876, %vm1877
    %v1879 = vsel %vm1878, %v1871, %v1875
    %v1880 = vand.u32 2147483647, %v1854
    %vm1881 = vcmp.eq.f32.partialorder %v1880, 8.507059e+37
    %v1882 = vand.u32 %v1854, 2147483648
    %v1883 = vor.u32 1.1754944e-38, %v1882
    %v1884 = vsel %vm1881, %v1883, %v1879
    %v1885 = vmul.f32 1.0, %v1884
    %v1886 = vrcp.pop %v1855
    %v1887 = vmul.f32 %v1855, %v1886
    %v1888 = vsub.f32 1.0, %v1887
    %v1889 = vmul.f32 %v1886, %v1888
    %v1890 = vadd.f32 %v1886, %v1889
    %vm1891 = vweird.f32 %v1855
    %vm1892 = vweird.f32 %v1886
    %vm1893 = vmor %vm1891, %vm1892
    %v1894 = vsel %vm1893, %v1886, %v1890
    %v1895 = vand.u32 2147483647, %v1855
    %vm1896 = vcmp.eq.f32.partialorder %v1895, 8.507059e+37
    %v1897 = vand.u32 %v1855, 2147483648
    %v1898 = vor.u32 1.1754944e-38, %v1897
    %v1899 = vsel %vm1896, %v1898, %v1894
    %v1900 = vmul.f32 1.0, %v1899
    %v1901 = vtanh.pop %v1843
    %v1903 = vrot.slane %v1499, 7
    %v1905 = vmul.f32 %v1885, %v1903
    %v1906 = vmul.f32 %v1870, %v1901
    %v1907 = vadd.f32 %v1905, %v1906
    %v1908 = vtanh.pop %v1907
    %v1909 = vmul.f32 %v1900, %v1908
    %1910 = vst [vmem:[#allocation8] sm:$0x1] %v1909
    %v1911 = vpack.c.bf16 %v1909, %v1909
    %v1913 = vsel %vm1784, %v1911, 0
    %1915 = vmatpush.bf16.msra.mxu0 0
    %1916 = vmatpush.bf16.msra.mxu0 0
    %1917 = vmatpush.bf16.msra.mxu0 0
    %1918 = vmatpush.bf16.msra.mxu0 0
    %1919 = vmatpush.bf16.msra.mxu0 0
    %1920 = vmatpush.bf16.msra.mxu0 0
    %1921 = vmatpush.bf16.msra.mxu0 0
    %1922 = vmatpush.bf16.msra.mxu0 %v1776
    %1923 = vmatmul.bf16.gmra.mxu0 %v1913
    %v1924 = vpop.f32.mrf.mxu0
    %v1925 = vadd.f32 0.0, %v1924
    %v1926 = vpop.f32.mrf.mxu0
    %1927 = vdwg.mxu0
    %1928 = vmatpush.bf16.msra.mxu0 0
    %1929 = vmatpush.bf16.msra.mxu0 0
    %1930 = vmatpush.bf16.msra.mxu0 0
    %1931 = vmatpush.bf16.msra.mxu0 0
    %1932 = vmatpush.bf16.msra.mxu0 0
    %1933 = vmatpush.bf16.msra.mxu0 0
    %1934 = vmatpush.bf16.msra.mxu0 0
    %1935 = vmatpush.bf16.msra.mxu0 %v1777
    %1936 = vmatmul.bf16.gmra.mxu0 %v1913
    %v1937 = vpop.f32.mrf.mxu0
    %v1938 = vadd.f32 0.0, %v1937
    %v1939 = vpop.f32.mrf.mxu0
    %1940 = vdwg.mxu0
    %1941 = vmatpush.bf16.msra.mxu0 0
    %1942 = vmatpush.bf16.msra.mxu0 0
    %1943 = vmatpush.bf16.msra.mxu0 0
    %1944 = vmatpush.bf16.msra.mxu0 0
    %1945 = vmatpush.bf16.msra.mxu0 0
    %1946 = vmatpush.bf16.msra.mxu0 0
    %1947 = vmatpush.bf16.msra.mxu0 0
    %1948 = vmatpush.bf16.msra.mxu0 %v1778
    %1949 = vmatmul.bf16.gmra.mxu0 %v1913
    %v1950 = vpop.f32.mrf.mxu0
    %v1951 = vadd.f32 0.0, %v1950
    %v1952 = vpop.f32.mrf.mxu0
    %1953 = vdwg.mxu0
    %1954 = vmatpush.bf16.msra.mxu0 0
    %1955 = vmatpush.bf16.msra.mxu0 0
    %1956 = vmatpush.bf16.msra.mxu0 0
    %1957 = vmatpush.bf16.msra.mxu0 0
    %1958 = vmatpush.bf16.msra.mxu0 0
    %1959 = vmatpush.bf16.msra.mxu0 0
    %1960 = vmatpush.bf16.msra.mxu0 0
    %1961 = vmatpush.bf16.msra.mxu0 %v1779
    %1962 = vmatmul.bf16.gmra.mxu0 %v1913
    %v1963 = vpop.f32.mrf.mxu0
    %v1964 = vadd.f32 0.0, %v1963
    %v1965 = vpop.f32.mrf.mxu0
    %1966 = vdwg.mxu0
    %v1971 = vrot.slane %v1925, 7
    %v1972 = vrot.slane %v1938, 7
    %v1973 = vrot.slane %v1951, 7
    %v1974 = vrot.slane %v1964, 7
    %v1979 = vadd.f32 %v1717, %v1971
    %v1980 = vadd.f32 %v1730, %v1972
    %v1981 = vadd.f32 %v1743, %v1973
    %v1982 = vadd.f32 %v1756, %v1974
    %v1983 = vxor.u32 %v1979, 2147483648
    %v1984 = vxor.u32 %v1980, 2147483648
    %v1985 = vxor.u32 %v1981, 2147483648
    %v1986 = vmul.f32 %v1983, 1.442695
    %v1987 = vpow.pop %v1986
    %v1988 = vmul.f32 %v1984, 1.442695
    %v1989 = vpow.pop %v1988
    %v1990 = vmul.f32 %v1985, 1.442695
    %v1991 = vpow.pop %v1990
    %v1992 = vadd.f32 %v1987, 1.0
    %v1993 = vadd.f32 %v1989, 1.0
    %v1994 = vadd.f32 %v1991, 1.0
    %v1995 = vrcp.pop %v1992
    %v1996 = vmul.f32 %v1992, %v1995
    %v1997 = vsub.f32 1.0, %v1996
    %v1998 = vmul.f32 %v1995, %v1997
    %v1999 = vadd.f32 %v1995, %v1998
    %vm2000 = vweird.f32 %v1992
    %vm2001 = vweird.f32 %v1995
    %vm2002 = vmor %vm2000, %vm2001
    %v2003 = vsel %vm2002, %v1995, %v1999
    %v2004 = vand.u32 2147483647, %v1992
    %vm2005 = vcmp.eq.f32.partialorder %v2004, 8.507059e+37
    %v2006 = vand.u32 %v1992, 2147483648
    %v2007 = vor.u32 1.1754944e-38, %v2006
    %v2008 = vsel %vm2005, %v2007, %v2003
    %v2009 = vmul.f32 1.0, %v2008
    %v2010 = vrcp.pop %v1993
    %v2011 = vmul.f32 %v1993, %v2010
    %v2012 = vsub.f32 1.0, %v2011
    %v2013 = vmul.f32 %v2010, %v2012
    %v2014 = vadd.f32 %v2010, %v2013
    %vm2015 = vweird.f32 %v1993
    %vm2016 = vweird.f32 %v2010
    %vm2017 = vmor %vm2015, %vm2016
    %v2018 = vsel %vm2017, %v2010, %v2014
    %v2019 = vand.u32 2147483647, %v1993
    %vm2020 = vcmp.eq.f32.partialorder %v2019, 8.507059e+37
    %v2021 = vand.u32 %v1993, 2147483648
    %v2022 = vor.u32 1.1754944e-38, %v2021
    %v2023 = vsel %vm2020, %v2022, %v2018
    %v2024 = vmul.f32 1.0, %v2023
    %v2025 = vrcp.pop %v1994
    %v2026 = vmul.f32 %v1994, %v2025
    %v2027 = vsub.f32 1.0, %v2026
    %v2028 = vmul.f32 %v2025, %v2027
    %v2029 = vadd.f32 %v2025, %v2028
    %vm2030 = vweird.f32 %v1994
    %vm2031 = vweird.f32 %v2025
    %vm2032 = vmor %vm2030, %vm2031
    %v2033 = vsel %vm2032, %v2025, %v2029
    %v2034 = vand.u32 2147483647, %v1994
    %vm2035 = vcmp.eq.f32.partialorder %v2034, 8.507059e+37
    %v2036 = vand.u32 %v1994, 2147483648
    %v2037 = vor.u32 1.1754944e-38, %v2036
    %v2038 = vsel %vm2035, %v2037, %v2033
    %v2039 = vmul.f32 1.0, %v2038
    %v2040 = vtanh.pop %v1982
    %v2042 = vrot.slane %v1907, 7
    %v2044 = vmul.f32 %v2024, %v2042
    %v2045 = vmul.f32 %v2009, %v2040
    %v2046 = vadd.f32 %v2044, %v2045
    %v2047 = vtanh.pop %v2046
    %v2048 = vmul.f32 %v2039, %v2047
    %2049 = vst [vmem:[#allocation8] sm:$0x2] %v2048
    %v2050 = vpack.c.bf16 %v2048, %v2048
    %v2052 = vshrl.u32 %v2050, 16
    %v2055 = vsel %vm1784, %v2052, 0
    %2057 = vmatpush.bf16.msra.mxu0 0
    %2058 = vmatpush.bf16.msra.mxu0 0
    %2059 = vmatpush.bf16.msra.mxu0 0
    %2060 = vmatpush.bf16.msra.mxu0 0
    %2061 = vmatpush.bf16.msra.mxu0 0
    %2062 = vmatpush.bf16.msra.mxu0 0
    %2063 = vmatpush.bf16.msra.mxu0 0
    %2064 = vmatpush.bf16.msra.mxu0 %v1776
    %2065 = vmatmul.bf16.gmra.mxu0 %v2055
    %v2066 = vpop.f32.mrf.mxu0
    %v2067 = vadd.f32 0.0, %v2066
    %v2068 = vpop.f32.mrf.mxu0
    %2069 = vdwg.mxu0
    %2070 = vmatpush.bf16.msra.mxu0 0
    %2071 = vmatpush.bf16.msra.mxu0 0
    %2072 = vmatpush.bf16.msra.mxu0 0
    %2073 = vmatpush.bf16.msra.mxu0 0
    %2074 = vmatpush.bf16.msra.mxu0 0
    %2075 = vmatpush.bf16.msra.mxu0 0
    %2076 = vmatpush.bf16.msra.mxu0 0
    %2077 = vmatpush.bf16.msra.mxu0 %v1777
    %2078 = vmatmul.bf16.gmra.mxu0 %v2055
    %v2079 = vpop.f32.mrf.mxu0
    %v2080 = vadd.f32 0.0, %v2079
    %v2081 = vpop.f32.mrf.mxu0
    %2082 = vdwg.mxu0
    %2083 = vmatpush.bf16.msra.mxu0 0
    %2084 = vmatpush.bf16.msra.mxu0 0
    %2085 = vmatpush.bf16.msra.mxu0 0
    %2086 = vmatpush.bf16.msra.mxu0 0
    %2087 = vmatpush.bf16.msra.mxu0 0
    %2088 = vmatpush.bf16.msra.mxu0 0
    %2089 = vmatpush.bf16.msra.mxu0 0
    %2090 = vmatpush.bf16.msra.mxu0 %v1778
    %2091 = vmatmul.bf16.gmra.mxu0 %v2055
    %v2092 = vpop.f32.mrf.mxu0
    %v2093 = vadd.f32 0.0, %v2092
    %v2094 = vpop.f32.mrf.mxu0
    %2095 = vdwg.mxu0
    %2096 = vmatpush.bf16.msra.mxu0 0
    %2097 = vmatpush.bf16.msra.mxu0 0
    %2098 = vmatpush.bf16.msra.mxu0 0
    %2099 = vmatpush.bf16.msra.mxu0 0
    %2100 = vmatpush.bf16.msra.mxu0 0
    %2101 = vmatpush.bf16.msra.mxu0 0
    %2102 = vmatpush.bf16.msra.mxu0 0
    %2103 = vmatpush.bf16.msra.mxu0 %v1779
    %2104 = vmatmul.bf16.gmra.mxu0 %v2055
    %v2105 = vpop.f32.mrf.mxu0
    %v2106 = vadd.f32 0.0, %v2105
    %v2107 = vpop.f32.mrf.mxu0
    %2108 = vdwg.mxu0
    %v2113 = vrot.slane %v2067, 6
    %v2114 = vrot.slane %v2080, 6
    %v2115 = vrot.slane %v2093, 6
    %v2116 = vrot.slane %v2106, 6
    %v2121 = vadd.f32 %v1717, %v2113
    %v2122 = vadd.f32 %v1730, %v2114
    %v2123 = vadd.f32 %v1743, %v2115
    %v2124 = vadd.f32 %v1756, %v2116
    %v2125 = vxor.u32 %v2121, 2147483648
    %v2126 = vxor.u32 %v2122, 2147483648
    %v2127 = vxor.u32 %v2123, 2147483648
    %v2128 = vmul.f32 %v2125, 1.442695
    %v2129 = vpow.pop %v2128
    %v2130 = vmul.f32 %v2126, 1.442695
    %v2131 = vpow.pop %v2130
    %v2132 = vmul.f32 %v2127, 1.442695
    %v2133 = vpow.pop %v2132
    %v2134 = vadd.f32 %v2129, 1.0
    %v2135 = vadd.f32 %v2131, 1.0
    %v2136 = vadd.f32 %v2133, 1.0
    %v2137 = vrcp.pop %v2134
    %v2138 = vmul.f32 %v2134, %v2137
    %v2139 = vsub.f32 1.0, %v2138
    %v2140 = vmul.f32 %v2137, %v2139
    %v2141 = vadd.f32 %v2137, %v2140
    %vm2142 = vweird.f32 %v2134
    %vm2143 = vweird.f32 %v2137
    %vm2144 = vmor %vm2142, %vm2143
    %v2145 = vsel %vm2144, %v2137, %v2141
    %v2146 = vand.u32 2147483647, %v2134
    %vm2147 = vcmp.eq.f32.partialorder %v2146, 8.507059e+37
    %v2148 = vand.u32 %v2134, 2147483648
    %v2149 = vor.u32 1.1754944e-38, %v2148
    %v2150 = vsel %vm2147, %v2149, %v2145
    %v2151 = vmul.f32 1.0, %v2150
    %v2152 = vrcp.pop %v2135
    %v2153 = vmul.f32 %v2135, %v2152
    %v2154 = vsub.f32 1.0, %v2153
    %v2155 = vmul.f32 %v2152, %v2154
    %v2156 = vadd.f32 %v2152, %v2155
    %vm2157 = vweird.f32 %v2135
    %vm2158 = vweird.f32 %v2152
    %vm2159 = vmor %vm2157, %vm2158
    %v2160 = vsel %vm2159, %v2152, %v2156
    %v2161 = vand.u32 2147483647, %v2135
    %vm2162 = vcmp.eq.f32.partialorder %v2161, 8.507059e+37
    %v2163 = vand.u32 %v2135, 2147483648
    %v2164 = vor.u32 1.1754944e-38, %v2163
    %v2165 = vsel %vm2162, %v2164, %v2160
    %v2166 = vmul.f32 1.0, %v2165
    %v2167 = vrcp.pop %v2136
    %v2168 = vmul.f32 %v2136, %v2167
    %v2169 = vsub.f32 1.0, %v2168
    %v2170 = vmul.f32 %v2167, %v2169
    %v2171 = vadd.f32 %v2167, %v2170
    %vm2172 = vweird.f32 %v2136
    %vm2173 = vweird.f32 %v2167
    %vm2174 = vmor %vm2172, %vm2173
    %v2175 = vsel %vm2174, %v2167, %v2171
    %v2176 = vand.u32 2147483647, %v2136
    %vm2177 = vcmp.eq.f32.partialorder %v2176, 8.507059e+37
    %v2178 = vand.u32 %v2136, 2147483648
    %v2179 = vor.u32 1.1754944e-38, %v2178
    %v2180 = vsel %vm2177, %v2179, %v2175
    %v2181 = vmul.f32 1.0, %v2180
    %v2182 = vtanh.pop %v2124
    %v2184 = vrot.slane %v2046, 7
    %v2186 = vmul.f32 %v2166, %v2184
    %v2187 = vmul.f32 %v2151, %v2182
    %v2188 = vadd.f32 %v2186, %v2187
    %v2189 = vtanh.pop %v2188
    %v2190 = vmul.f32 %v2181, %v2189
    %2191 = vst [vmem:[#allocation8] sm:$0x4] %v2190
    %v2192 = vpack.c.bf16 %v2190, %v2190
    %v2194 = vrot.slane %v2192, 1
    %v2196 = vsel %vm1784, %v2194, 0
    %2198 = vmatpush.bf16.msra.mxu0 0
    %2199 = vmatpush.bf16.msra.mxu0 0
    %2200 = vmatpush.bf16.msra.mxu0 0
    %2201 = vmatpush.bf16.msra.mxu0 0
    %2202 = vmatpush.bf16.msra.mxu0 0
    %2203 = vmatpush.bf16.msra.mxu0 0
    %2204 = vmatpush.bf16.msra.mxu0 0
    %2205 = vmatpush.bf16.msra.mxu0 %v1776
    %2206 = vmatmul.bf16.gmra.mxu0 %v2196
    %v2207 = vpop.f32.mrf.mxu0
    %v2208 = vadd.f32 0.0, %v2207
    %v2209 = vpop.f32.mrf.mxu0
    %2210 = vdwg.mxu0
    %2211 = vmatpush.bf16.msra.mxu0 0
    %2212 = vmatpush.bf16.msra.mxu0 0
    %2213 = vmatpush.bf16.msra.mxu0 0
    %2214 = vmatpush.bf16.msra.mxu0 0
    %2215 = vmatpush.bf16.msra.mxu0 0
    %2216 = vmatpush.bf16.msra.mxu0 0
    %2217 = vmatpush.bf16.msra.mxu0 0
    %2218 = vmatpush.bf16.msra.mxu0 %v1777
    %2219 = vmatmul.bf16.gmra.mxu0 %v2196
    %v2220 = vpop.f32.mrf.mxu0
    %v2221 = vadd.f32 0.0, %v2220
    %v2222 = vpop.f32.mrf.mxu0
    %2223 = vdwg.mxu0
    %2224 = vmatpush.bf16.msra.mxu0 0
    %2225 = vmatpush.bf16.msra.mxu0 0
    %2226 = vmatpush.bf16.msra.mxu0 0
    %2227 = vmatpush.bf16.msra.mxu0 0
    %2228 = vmatpush.bf16.msra.mxu0 0
    %2229 = vmatpush.bf16.msra.mxu0 0
    %2230 = vmatpush.bf16.msra.mxu0 0
    %2231 = vmatpush.bf16.msra.mxu0 %v1778
    %2232 = vmatmul.bf16.gmra.mxu0 %v2196
    %v2233 = vpop.f32.mrf.mxu0
    %v2234 = vadd.f32 0.0, %v2233
    %v2235 = vpop.f32.mrf.mxu0
    %2236 = vdwg.mxu0
    %2237 = vmatpush.bf16.msra.mxu0 0
    %2238 = vmatpush.bf16.msra.mxu0 0
    %2239 = vmatpush.bf16.msra.mxu0 0
    %2240 = vmatpush.bf16.msra.mxu0 0
    %2241 = vmatpush.bf16.msra.mxu0 0
    %2242 = vmatpush.bf16.msra.mxu0 0
    %2243 = vmatpush.bf16.msra.mxu0 0
    %2244 = vmatpush.bf16.msra.mxu0 %v1779
    %2245 = vmatmul.bf16.gmra.mxu0 %v2196
    %v2246 = vpop.f32.mrf.mxu0
    %v2247 = vadd.f32 0.0, %v2246
    %v2248 = vpop.f32.mrf.mxu0
    %2249 = vdwg.mxu0
    %v2254 = vrot.slane %v2208, 5
    %v2255 = vrot.slane %v2221, 5
    %v2256 = vrot.slane %v2234, 5
    %v2257 = vrot.slane %v2247, 5
    %v2262 = vadd.f32 %v1717, %v2254
    %v2263 = vadd.f32 %v1730, %v2255
    %v2264 = vadd.f32 %v1743, %v2256
    %v2265 = vadd.f32 %v1756, %v2257
    %v2266 = vxor.u32 %v2262, 2147483648
    %v2267 = vxor.u32 %v2263, 2147483648
    %v2268 = vxor.u32 %v2264, 2147483648
    %v2269 = vmul.f32 %v2266, 1.442695
    %v2270 = vpow.pop %v2269
    %v2271 = vmul.f32 %v2267, 1.442695
    %v2272 = vpow.pop %v2271
    %v2273 = vmul.f32 %v2268, 1.442695
    %v2274 = vpow.pop %v2273
    %v2275 = vadd.f32 %v2270, 1.0
    %v2276 = vadd.f32 %v2272, 1.0
    %v2277 = vadd.f32 %v2274, 1.0
    %v2278 = vrcp.pop %v2275
    %v2279 = vmul.f32 %v2275, %v2278
    %v2280 = vsub.f32 1.0, %v2279
    %v2281 = vmul.f32 %v2278, %v2280
    %v2282 = vadd.f32 %v2278, %v2281
    %vm2283 = vweird.f32 %v2275
    %vm2284 = vweird.f32 %v2278
    %vm2285 = vmor %vm2283, %vm2284
    %v2286 = vsel %vm2285, %v2278, %v2282
    %v2287 = vand.u32 2147483647, %v2275
    %vm2288 = vcmp.eq.f32.partialorder %v2287, 8.507059e+37
    %v2289 = vand.u32 %v2275, 2147483648
    %v2290 = vor.u32 1.1754944e-38, %v2289
    %v2291 = vsel %vm2288, %v2290, %v2286
    %v2292 = vmul.f32 1.0, %v2291
    %v2293 = vrcp.pop %v2276
    %v2294 = vmul.f32 %v2276, %v2293
    %v2295 = vsub.f32 1.0, %v2294
    %v2296 = vmul.f32 %v2293, %v2295
    %v2297 = vadd.f32 %v2293, %v2296
    %vm2298 = vweird.f32 %v2276
    %vm2299 = vweird.f32 %v2293
    %vm2300 = vmor %vm2298, %vm2299
    %v2301 = vsel %vm2300, %v2293, %v2297
    %v2302 = vand.u32 2147483647, %v2276
    %vm2303 = vcmp.eq.f32.partialorder %v2302, 8.507059e+37
    %v2304 = vand.u32 %v2276, 2147483648
    %v2305 = vor.u32 1.1754944e-38, %v2304
    %v2306 = vsel %vm2303, %v2305, %v2301
    %v2307 = vmul.f32 1.0, %v2306
    %v2308 = vrcp.pop %v2277
    %v2309 = vmul.f32 %v2277, %v2308
    %v2310 = vsub.f32 1.0, %v2309
    %v2311 = vmul.f32 %v2308, %v2310
    %v2312 = vadd.f32 %v2308, %v2311
    %vm2313 = vweird.f32 %v2277
    %vm2314 = vweird.f32 %v2308
    %vm2315 = vmor %vm2313, %vm2314
    %v2316 = vsel %vm2315, %v2308, %v2312
    %v2317 = vand.u32 2147483647, %v2277
    %vm2318 = vcmp.eq.f32.partialorder %v2317, 8.507059e+37
    %v2319 = vand.u32 %v2277, 2147483648
    %v2320 = vor.u32 1.1754944e-38, %v2319
    %v2321 = vsel %vm2318, %v2320, %v2316
    %v2322 = vmul.f32 1.0, %v2321
    %v2323 = vtanh.pop %v2265
    %v2325 = vrot.slane %v2188, 7
    %v2327 = vmul.f32 %v2307, %v2325
    %v2328 = vmul.f32 %v2292, %v2323
    %v2329 = vadd.f32 %v2327, %v2328
    %v2330 = vtanh.pop %v2329
    %v2331 = vmul.f32 %v2322, %v2330
    %2332 = vst [vmem:[#allocation8] sm:$0x8] %v2331
    %v2333 = vpack.c.bf16 %v2331, %v2331
    %v2335 = vshrl.u32 %v2333, 16
    %v2337 = vrot.slane %v2335, 1
    %v2339 = vsel %vm1784, %v2337, 0
    %2341 = vmatpush.bf16.msra.mxu0 0
    %2342 = vmatpush.bf16.msra.mxu0 0
    %2343 = vmatpush.bf16.msra.mxu0 0
    %2344 = vmatpush.bf16.msra.mxu0 0
    %2345 = vmatpush.bf16.msra.mxu0 0
    %2346 = vmatpush.bf16.msra.mxu0 0
    %2347 = vmatpush.bf16.msra.mxu0 0
    %2348 = vmatpush.bf16.msra.mxu0 %v1776
    %2349 = vmatmul.bf16.gmra.mxu0 %v2339
    %v2350 = vpop.f32.mrf.mxu0
    %v2351 = vadd.f32 0.0, %v2350
    %v2352 = vpop.f32.mrf.mxu0
    %2353 = vdwg.mxu0
    %2354 = vmatpush.bf16.msra.mxu0 0
    %2355 = vmatpush.bf16.msra.mxu0 0
    %2356 = vmatpush.bf16.msra.mxu0 0
    %2357 = vmatpush.bf16.msra.mxu0 0
    %2358 = vmatpush.bf16.msra.mxu0 0
    %2359 = vmatpush.bf16.msra.mxu0 0
    %2360 = vmatpush.bf16.msra.mxu0 0
    %2361 = vmatpush.bf16.msra.mxu0 %v1777
    %2362 = vmatmul.bf16.gmra.mxu0 %v2339
    %v2363 = vpop.f32.mrf.mxu0
    %v2364 = vadd.f32 0.0, %v2363
    %v2365 = vpop.f32.mrf.mxu0
    %2366 = vdwg.mxu0
    %2367 = vmatpush.bf16.msra.mxu0 0
    %2368 = vmatpush.bf16.msra.mxu0 0
    %2369 = vmatpush.bf16.msra.mxu0 0
    %2370 = vmatpush.bf16.msra.mxu0 0
    %2371 = vmatpush.bf16.msra.mxu0 0
    %2372 = vmatpush.bf16.msra.mxu0 0
    %2373 = vmatpush.bf16.msra.mxu0 0
    %2374 = vmatpush.bf16.msra.mxu0 %v1778
    %2375 = vmatmul.bf16.gmra.mxu0 %v2339
    %v2376 = vpop.f32.mrf.mxu0
    %v2377 = vadd.f32 0.0, %v2376
    %v2378 = vpop.f32.mrf.mxu0
    %2379 = vdwg.mxu0
    %2380 = vmatpush.bf16.msra.mxu0 0
    %2381 = vmatpush.bf16.msra.mxu0 0
    %2382 = vmatpush.bf16.msra.mxu0 0
    %2383 = vmatpush.bf16.msra.mxu0 0
    %2384 = vmatpush.bf16.msra.mxu0 0
    %2385 = vmatpush.bf16.msra.mxu0 0
    %2386 = vmatpush.bf16.msra.mxu0 0
    %2387 = vmatpush.bf16.msra.mxu0 %v1779
    %2388 = vmatmul.bf16.gmra.mxu0 %v2339
    %v2389 = vpop.f32.mrf.mxu0
    %v2390 = vadd.f32 0.0, %v2389
    %v2391 = vpop.f32.mrf.mxu0
    %2392 = vdwg.mxu0
    %v2397 = vrot.slane %v2351, 4
    %v2398 = vrot.slane %v2364, 4
    %v2399 = vrot.slane %v2377, 4
    %v2400 = vrot.slane %v2390, 4
    %v2405 = vadd.f32 %v1717, %v2397
    %v2406 = vadd.f32 %v1730, %v2398
    %v2407 = vadd.f32 %v1743, %v2399
    %v2408 = vadd.f32 %v1756, %v2400
    %v2409 = vxor.u32 %v2405, 2147483648
    %v2410 = vxor.u32 %v2406, 2147483648
    %v2411 = vxor.u32 %v2407, 2147483648
    %v2412 = vmul.f32 %v2409, 1.442695
    %v2413 = vpow.pop %v2412
    %v2414 = vmul.f32 %v2410, 1.442695
    %v2415 = vpow.pop %v2414
    %v2416 = vmul.f32 %v2411, 1.442695
    %v2417 = vpow.pop %v2416
    %v2418 = vadd.f32 %v2413, 1.0
    %v2419 = vadd.f32 %v2415, 1.0
    %v2420 = vadd.f32 %v2417, 1.0
    %v2421 = vrcp.pop %v2418
    %v2422 = vmul.f32 %v2418, %v2421
    %v2423 = vsub.f32 1.0, %v2422
    %v2424 = vmul.f32 %v2421, %v2423
    %v2425 = vadd.f32 %v2421, %v2424
    %vm2426 = vweird.f32 %v2418
    %vm2427 = vweird.f32 %v2421
    %vm2428 = vmor %vm2426, %vm2427
    %v2429 = vsel %vm2428, %v2421, %v2425
    %v2430 = vand.u32 2147483647, %v2418
    %vm2431 = vcmp.eq.f32.partialorder %v2430, 8.507059e+37
    %v2432 = vand.u32 %v2418, 2147483648
    %v2433 = vor.u32 1.1754944e-38, %v2432
    %v2434 = vsel %vm2431, %v2433, %v2429
    %v2435 = vmul.f32 1.0, %v2434
    %v2436 = vrcp.pop %v2419
    %v2437 = vmul.f32 %v2419, %v2436
    %v2438 = vsub.f32 1.0, %v2437
    %v2439 = vmul.f32 %v2436, %v2438
    %v2440 = vadd.f32 %v2436, %v2439
    %vm2441 = vweird.f32 %v2419
    %vm2442 = vweird.f32 %v2436
    %vm2443 = vmor %vm2441, %vm2442
    %v2444 = vsel %vm2443, %v2436, %v2440
    %v2445 = vand.u32 2147483647, %v2419
    %vm2446 = vcmp.eq.f32.partialorder %v2445, 8.507059e+37
    %v2447 = vand.u32 %v2419, 2147483648
    %v2448 = vor.u32 1.1754944e-38, %v2447
    %v2449 = vsel %vm2446, %v2448, %v2444
    %v2450 = vmul.f32 1.0, %v2449
    %v2451 = vrcp.pop %v2420
    %v2452 = vmul.f32 %v2420, %v2451
    %v2453 = vsub.f32 1.0, %v2452
    %v2454 = vmul.f32 %v2451, %v2453
    %v2455 = vadd.f32 %v2451, %v2454
    %vm2456 = vweird.f32 %v2420
    %vm2457 = vweird.f32 %v2451
    %vm2458 = vmor %vm2456, %vm2457
    %v2459 = vsel %vm2458, %v2451, %v2455
    %v2460 = vand.u32 2147483647, %v2420
    %vm2461 = vcmp.eq.f32.partialorder %v2460, 8.507059e+37
    %v2462 = vand.u32 %v2420, 2147483648
    %v2463 = vor.u32 1.1754944e-38, %v2462
    %v2464 = vsel %vm2461, %v2463, %v2459
    %v2465 = vmul.f32 1.0, %v2464
    %v2466 = vtanh.pop %v2408
    %v2468 = vrot.slane %v2329, 7
    %v2470 = vmul.f32 %v2450, %v2468
    %v2471 = vmul.f32 %v2435, %v2466
    %v2472 = vadd.f32 %v2470, %v2471
    %v2473 = vtanh.pop %v2472
    %v2474 = vmul.f32 %v2465, %v2473
    %2475 = vst [vmem:[#allocation8] sm:$0x10] %v2474
    %v2476 = vpack.c.bf16 %v2474, %v2474
    %v2478 = vrot.slane %v2476, 2
    %v2480 = vsel %vm1784, %v2478, 0
    %2482 = vmatpush.bf16.msra.mxu0 0
    %2483 = vmatpush.bf16.msra.mxu0 0
    %2484 = vmatpush.bf16.msra.mxu0 0
    %2485 = vmatpush.bf16.msra.mxu0 0
    %2486 = vmatpush.bf16.msra.mxu0 0
    %2487 = vmatpush.bf16.msra.mxu0 0
    %2488 = vmatpush.bf16.msra.mxu0 0
    %2489 = vmatpush.bf16.msra.mxu0 %v1776
    %2490 = vmatmul.bf16.gmra.mxu0 %v2480
    %v2491 = vpop.f32.mrf.mxu0
    %v2492 = vadd.f32 0.0, %v2491
    %v2493 = vpop.f32.mrf.mxu0
    %2494 = vdwg.mxu0
    %2495 = vmatpush.bf16.msra.mxu0 0
    %2496 = vmatpush.bf16.msra.mxu0 0
    %2497 = vmatpush.bf16.msra.mxu0 0
    %2498 = vmatpush.bf16.msra.mxu0 0
    %2499 = vmatpush.bf16.msra.mxu0 0
    %2500 = vmatpush.bf16.msra.mxu0 0
    %2501 = vmatpush.bf16.msra.mxu0 0
    %2502 = vmatpush.bf16.msra.mxu0 %v1777
    %2503 = vmatmul.bf16.gmra.mxu0 %v2480
    %v2504 = vpop.f32.mrf.mxu0
    %v2505 = vadd.f32 0.0, %v2504
    %v2506 = vpop.f32.mrf.mxu0
    %2507 = vdwg.mxu0
    %2508 = vmatpush.bf16.msra.mxu0 0
    %2509 = vmatpush.bf16.msra.mxu0 0
    %2510 = vmatpush.bf16.msra.mxu0 0
    %2511 = vmatpush.bf16.msra.mxu0 0
    %2512 = vmatpush.bf16.msra.mxu0 0
    %2513 = vmatpush.bf16.msra.mxu0 0
    %2514 = vmatpush.bf16.msra.mxu0 0
    %2515 = vmatpush.bf16.msra.mxu0 %v1778
    %2516 = vmatmul.bf16.gmra.mxu0 %v2480
    %v2517 = vpop.f32.mrf.mxu0
    %v2518 = vadd.f32 0.0, %v2517
    %v2519 = vpop.f32.mrf.mxu0
    %2520 = vdwg.mxu0
    %2521 = vmatpush.bf16.msra.mxu0 0
    %2522 = vmatpush.bf16.msra.mxu0 0
    %2523 = vmatpush.bf16.msra.mxu0 0
    %2524 = vmatpush.bf16.msra.mxu0 0
    %2525 = vmatpush.bf16.msra.mxu0 0
    %2526 = vmatpush.bf16.msra.mxu0 0
    %2527 = vmatpush.bf16.msra.mxu0 0
    %2528 = vmatpush.bf16.msra.mxu0 %v1779
    %2529 = vmatmul.bf16.gmra.mxu0 %v2480
    %v2530 = vpop.f32.mrf.mxu0
    %v2531 = vadd.f32 0.0, %v2530
    %v2532 = vpop.f32.mrf.mxu0
    %2533 = vdwg.mxu0
    %v2538 = vrot.slane %v2492, 3
    %v2539 = vrot.slane %v2505, 3
    %v2540 = vrot.slane %v2518, 3
    %v2541 = vrot.slane %v2531, 3
    %v2546 = vadd.f32 %v1717, %v2538
    %v2547 = vadd.f32 %v1730, %v2539
    %v2548 = vadd.f32 %v1743, %v2540
    %v2549 = vadd.f32 %v1756, %v2541
    %v2550 = vxor.u32 %v2546, 2147483648
    %v2551 = vxor.u32 %v2547, 2147483648
    %v2552 = vxor.u32 %v2548, 2147483648
    %v2553 = vmul.f32 %v2550, 1.442695
    %v2554 = vpow.pop %v2553
    %v2555 = vmul.f32 %v2551, 1.442695
    %v2556 = vpow.pop %v2555
    %v2557 = vmul.f32 %v2552, 1.442695
    %v2558 = vpow.pop %v2557
    %v2559 = vadd.f32 %v2554, 1.0
    %v2560 = vadd.f32 %v2556, 1.0
    %v2561 = vadd.f32 %v2558, 1.0
    %v2562 = vrcp.pop %v2559
    %v2563 = vmul.f32 %v2559, %v2562
    %v2564 = vsub.f32 1.0, %v2563
    %v2565 = vmul.f32 %v2562, %v2564
    %v2566 = vadd.f32 %v2562, %v2565
    %vm2567 = vweird.f32 %v2559
    %vm2568 = vweird.f32 %v2562
    %vm2569 = vmor %vm2567, %vm2568
    %v2570 = vsel %vm2569, %v2562, %v2566
    %v2571 = vand.u32 2147483647, %v2559
    %vm2572 = vcmp.eq.f32.partialorder %v2571, 8.507059e+37
    %v2573 = vand.u32 %v2559, 2147483648
    %v2574 = vor.u32 1.1754944e-38, %v2573
    %v2575 = vsel %vm2572, %v2574, %v2570
    %v2576 = vmul.f32 1.0, %v2575
    %v2577 = vrcp.pop %v2560
    %v2578 = vmul.f32 %v2560, %v2577
    %v2579 = vsub.f32 1.0, %v2578
    %v2580 = vmul.f32 %v2577, %v2579
    %v2581 = vadd.f32 %v2577, %v2580
    %vm2582 = vweird.f32 %v2560
    %vm2583 = vweird.f32 %v2577
    %vm2584 = vmor %vm2582, %vm2583
    %v2585 = vsel %vm2584, %v2577, %v2581
    %v2586 = vand.u32 2147483647, %v2560
    %vm2587 = vcmp.eq.f32.partialorder %v2586, 8.507059e+37
    %v2588 = vand.u32 %v2560, 2147483648
    %v2589 = vor.u32 1.1754944e-38, %v2588
    %v2590 = vsel %vm2587, %v2589, %v2585
    %v2591 = vmul.f32 1.0, %v2590
    %v2592 = vrcp.pop %v2561
    %v2593 = vmul.f32 %v2561, %v2592
    %v2594 = vsub.f32 1.0, %v2593
    %v2595 = vmul.f32 %v2592, %v2594
    %v2596 = vadd.f32 %v2592, %v2595
    %vm2597 = vweird.f32 %v2561
    %vm2598 = vweird.f32 %v2592
    %vm2599 = vmor %vm2597, %vm2598
    %v2600 = vsel %vm2599, %v2592, %v2596
    %v2601 = vand.u32 2147483647, %v2561
    %vm2602 = vcmp.eq.f32.partialorder %v2601, 8.507059e+37
    %v2603 = vand.u32 %v2561, 2147483648
    %v2604 = vor.u32 1.1754944e-38, %v2603
    %v2605 = vsel %vm2602, %v2604, %v2600
    %v2606 = vmul.f32 1.0, %v2605
    %v2607 = vtanh.pop %v2549
    %v2609 = vrot.slane %v2472, 7
    %v2611 = vmul.f32 %v2591, %v2609
    %v2612 = vmul.f32 %v2576, %v2607
    %v2613 = vadd.f32 %v2611, %v2612
    %v2614 = vtanh.pop %v2613
    %v2615 = vmul.f32 %v2606, %v2614
    %2616 = vst [vmem:[#allocation8] sm:$0x20] %v2615
    %v2617 = vpack.c.bf16 %v2615, %v2615
    %v2619 = vshrl.u32 %v2617, 16
    %v2621 = vrot.slane %v2619, 2
    %v2623 = vsel %vm1784, %v2621, 0
    %2625 = vmatpush.bf16.msra.mxu0 0
    %2626 = vmatpush.bf16.msra.mxu0 0
    %2627 = vmatpush.bf16.msra.mxu0 0
    %2628 = vmatpush.bf16.msra.mxu0 0
    %2629 = vmatpush.bf16.msra.mxu0 0
    %2630 = vmatpush.bf16.msra.mxu0 0
    %2631 = vmatpush.bf16.msra.mxu0 0
    %2632 = vmatpush.bf16.msra.mxu0 %v1776
    %2633 = vmatmul.bf16.gmra.mxu0 %v2623
    %v2634 = vpop.f32.mrf.mxu0
    %v2635 = vadd.f32 0.0, %v2634
    %v2636 = vpop.f32.mrf.mxu0
    %2637 = vdwg.mxu0
    %2638 = vmatpush.bf16.msra.mxu0 0
    %2639 = vmatpush.bf16.msra.mxu0 0
    %2640 = vmatpush.bf16.msra.mxu0 0
    %2641 = vmatpush.bf16.msra.mxu0 0
    %2642 = vmatpush.bf16.msra.mxu0 0
    %2643 = vmatpush.bf16.msra.mxu0 0
    %2644 = vmatpush.bf16.msra.mxu0 0
    %2645 = vmatpush.bf16.msra.mxu0 %v1777
    %2646 = vmatmul.bf16.gmra.mxu0 %v2623
    %v2647 = vpop.f32.mrf.mxu0
    %v2648 = vadd.f32 0.0, %v2647
    %v2649 = vpop.f32.mrf.mxu0
    %2650 = vdwg.mxu0
    %2651 = vmatpush.bf16.msra.mxu0 0
    %2652 = vmatpush.bf16.msra.mxu0 0
    %2653 = vmatpush.bf16.msra.mxu0 0
    %2654 = vmatpush.bf16.msra.mxu0 0
    %2655 = vmatpush.bf16.msra.mxu0 0
    %2656 = vmatpush.bf16.msra.mxu0 0
    %2657 = vmatpush.bf16.msra.mxu0 0
    %2658 = vmatpush.bf16.msra.mxu0 %v1778
    %2659 = vmatmul.bf16.gmra.mxu0 %v2623
    %v2660 = vpop.f32.mrf.mxu0
    %v2661 = vadd.f32 0.0, %v2660
    %v2662 = vpop.f32.mrf.mxu0
    %2663 = vdwg.mxu0
    %2664 = vmatpush.bf16.msra.mxu0 0
    %2665 = vmatpush.bf16.msra.mxu0 0
    %2666 = vmatpush.bf16.msra.mxu0 0
    %2667 = vmatpush.bf16.msra.mxu0 0
    %2668 = vmatpush.bf16.msra.mxu0 0
    %2669 = vmatpush.bf16.msra.mxu0 0
    %2670 = vmatpush.bf16.msra.mxu0 0
    %2671 = vmatpush.bf16.msra.mxu0 %v1779
    %2672 = vmatmul.bf16.gmra.mxu0 %v2623
    %v2673 = vpop.f32.mrf.mxu0
    %v2674 = vadd.f32 0.0, %v2673
    %v2675 = vpop.f32.mrf.mxu0
    %2676 = vdwg.mxu0
    %v2681 = vrot.slane %v2635, 2
    %v2682 = vrot.slane %v2648, 2
    %v2683 = vrot.slane %v2661, 2
    %v2684 = vrot.slane %v2674, 2
    %v2689 = vadd.f32 %v1717, %v2681
    %v2690 = vadd.f32 %v1730, %v2682
    %v2691 = vadd.f32 %v1743, %v2683
    %v2692 = vadd.f32 %v1756, %v2684
    %v2693 = vxor.u32 %v2689, 2147483648
    %v2694 = vxor.u32 %v2690, 2147483648
    %v2695 = vxor.u32 %v2691, 2147483648
    %v2696 = vmul.f32 %v2693, 1.442695
    %v2697 = vpow.pop %v2696
    %v2698 = vmul.f32 %v2694, 1.442695
    %v2699 = vpow.pop %v2698
    %v2700 = vmul.f32 %v2695, 1.442695
    %v2701 = vpow.pop %v2700
    %v2702 = vadd.f32 %v2697, 1.0
    %v2703 = vadd.f32 %v2699, 1.0
    %v2704 = vadd.f32 %v2701, 1.0
    %v2705 = vrcp.pop %v2702
    %v2706 = vmul.f32 %v2702, %v2705
    %v2707 = vsub.f32 1.0, %v2706
    %v2708 = vmul.f32 %v2705, %v2707
    %v2709 = vadd.f32 %v2705, %v2708
    %vm2710 = vweird.f32 %v2702
    %vm2711 = vweird.f32 %v2705
    %vm2712 = vmor %vm2710, %vm2711
    %v2713 = vsel %vm2712, %v2705, %v2709
    %v2714 = vand.u32 2147483647, %v2702
    %vm2715 = vcmp.eq.f32.partialorder %v2714, 8.507059e+37
    %v2716 = vand.u32 %v2702, 2147483648
    %v2717 = vor.u32 1.1754944e-38, %v2716
    %v2718 = vsel %vm2715, %v2717, %v2713
    %v2719 = vmul.f32 1.0, %v2718
    %v2720 = vrcp.pop %v2703
    %v2721 = vmul.f32 %v2703, %v2720
    %v2722 = vsub.f32 1.0, %v2721
    %v2723 = vmul.f32 %v2720, %v2722
    %v2724 = vadd.f32 %v2720, %v2723
    %vm2725 = vweird.f32 %v2703
    %vm2726 = vweird.f32 %v2720
    %vm2727 = vmor %vm2725, %vm2726
    %v2728 = vsel %vm2727, %v2720, %v2724
    %v2729 = vand.u32 2147483647, %v2703
    %vm2730 = vcmp.eq.f32.partialorder %v2729, 8.507059e+37
    %v2731 = vand.u32 %v2703, 2147483648
    %v2732 = vor.u32 1.1754944e-38, %v2731
    %v2733 = vsel %vm2730, %v2732, %v2728
    %v2734 = vmul.f32 1.0, %v2733
    %v2735 = vrcp.pop %v2704
    %v2736 = vmul.f32 %v2704, %v2735
    %v2737 = vsub.f32 1.0, %v2736
    %v2738 = vmul.f32 %v2735, %v2737
    %v2739 = vadd.f32 %v2735, %v2738
    %vm2740 = vweird.f32 %v2704
    %vm2741 = vweird.f32 %v2735
    %vm2742 = vmor %vm2740, %vm2741
    %v2743 = vsel %vm2742, %v2735, %v2739
    %v2744 = vand.u32 2147483647, %v2704
    %vm2745 = vcmp.eq.f32.partialorder %v2744, 8.507059e+37
    %v2746 = vand.u32 %v2704, 2147483648
    %v2747 = vor.u32 1.1754944e-38, %v2746
    %v2748 = vsel %vm2745, %v2747, %v2743
    %v2749 = vmul.f32 1.0, %v2748
    %v2750 = vtanh.pop %v2692
    %v2752 = vrot.slane %v2613, 7
    %v2754 = vmul.f32 %v2734, %v2752
    %v2755 = vmul.f32 %v2719, %v2750
    %v2756 = vadd.f32 %v2754, %v2755
    %v2757 = vtanh.pop %v2756
    %v2758 = vmul.f32 %v2749, %v2757
    %2759 = vst [vmem:[#allocation8] sm:$0x40] %v2758
    %v2760 = vpack.c.bf16 %v2758, %v2758
    %v2762 = vrot.slane %v2760, 3
    %v2764 = vsel %vm1784, %v2762, 0
    %2766 = vmatpush.bf16.msra.mxu0 0
    %2767 = vmatpush.bf16.msra.mxu0 0
    %2768 = vmatpush.bf16.msra.mxu0 0
    %2769 = vmatpush.bf16.msra.mxu0 0
    %2770 = vmatpush.bf16.msra.mxu0 0
    %2771 = vmatpush.bf16.msra.mxu0 0
    %2772 = vmatpush.bf16.msra.mxu0 0
    %2773 = vmatpush.bf16.msra.mxu0 %v1776
    %2774 = vmatmul.bf16.gmra.mxu0 %v2764
    %v2775 = vpop.f32.mrf.mxu0
    %v2776 = vadd.f32 0.0, %v2775
    %v2777 = vpop.f32.mrf.mxu0
    %2778 = vdwg.mxu0
    %2779 = vmatpush.bf16.msra.mxu0 0
    %2780 = vmatpush.bf16.msra.mxu0 0
    %2781 = vmatpush.bf16.msra.mxu0 0
    %2782 = vmatpush.bf16.msra.mxu0 0
    %2783 = vmatpush.bf16.msra.mxu0 0
    %2784 = vmatpush.bf16.msra.mxu0 0
    %2785 = vmatpush.bf16.msra.mxu0 0
    %2786 = vmatpush.bf16.msra.mxu0 %v1777
    %2787 = vmatmul.bf16.gmra.mxu0 %v2764
    %v2788 = vpop.f32.mrf.mxu0
    %v2789 = vadd.f32 0.0, %v2788
    %v2790 = vpop.f32.mrf.mxu0
    %2791 = vdwg.mxu0
    %2792 = vmatpush.bf16.msra.mxu0 0
    %2793 = vmatpush.bf16.msra.mxu0 0
    %2794 = vmatpush.bf16.msra.mxu0 0
    %2795 = vmatpush.bf16.msra.mxu0 0
    %2796 = vmatpush.bf16.msra.mxu0 0
    %2797 = vmatpush.bf16.msra.mxu0 0
    %2798 = vmatpush.bf16.msra.mxu0 0
    %2799 = vmatpush.bf16.msra.mxu0 %v1778
    %2800 = vmatmul.bf16.gmra.mxu0 %v2764
    %v2801 = vpop.f32.mrf.mxu0
    %v2802 = vadd.f32 0.0, %v2801
    %v2803 = vpop.f32.mrf.mxu0
    %2804 = vdwg.mxu0
    %2805 = vmatpush.bf16.msra.mxu0 0
    %2806 = vmatpush.bf16.msra.mxu0 0
    %2807 = vmatpush.bf16.msra.mxu0 0
    %2808 = vmatpush.bf16.msra.mxu0 0
    %2809 = vmatpush.bf16.msra.mxu0 0
    %2810 = vmatpush.bf16.msra.mxu0 0
    %2811 = vmatpush.bf16.msra.mxu0 0
    %2812 = vmatpush.bf16.msra.mxu0 %v1779
    %2813 = vmatmul.bf16.gmra.mxu0 %v2764
    %v2814 = vpop.f32.mrf.mxu0
    %v2815 = vadd.f32 0.0, %v2814
    %v2816 = vpop.f32.mrf.mxu0
    %2817 = vdwg.mxu0
    %v2822 = vrot.slane %v2776, 1
    %v2823 = vrot.slane %v2789, 1
    %v2824 = vrot.slane %v2802, 1
    %v2825 = vrot.slane %v2815, 1
    %v2830 = vadd.f32 %v1717, %v2822
    %v2831 = vadd.f32 %v1730, %v2823
    %v2832 = vadd.f32 %v1743, %v2824
    %v2833 = vadd.f32 %v1756, %v2825
    %v2834 = vxor.u32 %v2830, 2147483648
    %v2835 = vxor.u32 %v2831, 2147483648
    %v2836 = vxor.u32 %v2832, 2147483648
    %v2837 = vmul.f32 %v2834, 1.442695
    %v2838 = vpow.pop %v2837
    %v2839 = vmul.f32 %v2835, 1.442695
    %v2840 = vpow.pop %v2839
    %v2841 = vmul.f32 %v2836, 1.442695
    %v2842 = vpow.pop %v2841
    %v2843 = vadd.f32 %v2838, 1.0
    %v2844 = vadd.f32 %v2840, 1.0
    %v2845 = vadd.f32 %v2842, 1.0
    %v2846 = vrcp.pop %v2843
    %v2847 = vmul.f32 %v2843, %v2846
    %v2848 = vsub.f32 1.0, %v2847
    %v2849 = vmul.f32 %v2846, %v2848
    %v2850 = vadd.f32 %v2846, %v2849
    %vm2851 = vweird.f32 %v2843
    %vm2852 = vweird.f32 %v2846
    %vm2853 = vmor %vm2851, %vm2852
    %v2854 = vsel %vm2853, %v2846, %v2850
    %v2855 = vand.u32 2147483647, %v2843
    %vm2856 = vcmp.eq.f32.partialorder %v2855, 8.507059e+37
    %v2857 = vand.u32 %v2843, 2147483648
    %v2858 = vor.u32 1.1754944e-38, %v2857
    %v2859 = vsel %vm2856, %v2858, %v2854
    %v2860 = vmul.f32 1.0, %v2859
    %v2861 = vrcp.pop %v2844
    %v2862 = vmul.f32 %v2844, %v2861
    %v2863 = vsub.f32 1.0, %v2862
    %v2864 = vmul.f32 %v2861, %v2863
    %v2865 = vadd.f32 %v2861, %v2864
    %vm2866 = vweird.f32 %v2844
    %vm2867 = vweird.f32 %v2861
    %vm2868 = vmor %vm2866, %vm2867
    %v2869 = vsel %vm2868, %v2861, %v2865
    %v2870 = vand.u32 2147483647, %v2844
    %vm2871 = vcmp.eq.f32.partialorder %v2870, 8.507059e+37
    %v2872 = vand.u32 %v2844, 2147483648
    %v2873 = vor.u32 1.1754944e-38, %v2872
    %v2874 = vsel %vm2871, %v2873, %v2869
    %v2875 = vmul.f32 1.0, %v2874
    %v2876 = vrcp.pop %v2845
    %v2877 = vmul.f32 %v2845, %v2876
    %v2878 = vsub.f32 1.0, %v2877
    %v2879 = vmul.f32 %v2876, %v2878
    %v2880 = vadd.f32 %v2876, %v2879
    %vm2881 = vweird.f32 %v2845
    %vm2882 = vweird.f32 %v2876
    %vm2883 = vmor %vm2881, %vm2882
    %v2884 = vsel %vm2883, %v2876, %v2880
    %v2885 = vand.u32 2147483647, %v2845
    %vm2886 = vcmp.eq.f32.partialorder %v2885, 8.507059e+37
    %v2887 = vand.u32 %v2845, 2147483648
    %v2888 = vor.u32 1.1754944e-38, %v2887
    %v2889 = vsel %vm2886, %v2888, %v2884
    %v2890 = vmul.f32 1.0, %v2889
    %v2891 = vtanh.pop %v2833
    %v2893 = vrot.slane %v2756, 7
    %v2895 = vmul.f32 %v2875, %v2893
    %v2896 = vmul.f32 %v2860, %v2891
    %v2897 = vadd.f32 %v2895, %v2896
    %v2898 = vtanh.pop %v2897
    %v2899 = vmul.f32 %v2890, %v2898
    %2900 = vst [vmem:[#allocation8] sm:$0x80] %v2899
    %v2901 = vld [vmem:[#allocation8] sm:$0xff]
    %v2902 = vmax.f32 %v2901, 0.0
    %2903 = vst [vmem:[#allocation8] sm:$0xff] %v2902
    // Predicated region
    $region42: #{forward.1} parent=1 // pred_check
      _
    $region43: #{forward.1} parent=1 // pred_check_branch
      %2905 = sbr.rel (0) target = $region45
    $region44: #{forward.1} parent=1 // pred_region
      %2907 = vsyncadd [#allocation4], 0
      %s2909 = sshll.u32 [#allocation8], 4
      %s2910 = int_to_ptr.vmem [resolvable:$true] %s2909
      %s2911 = sshll.u32 %s7, 4
      %s2912 = int_to_ptr.hbm [resolvable:$true] %s2911
      %2914 = dma.vmem_to_hbm [thread:$0]  %s2910, 128, %s2912, [#allocation4]
    $region45: #{forward.1} parent=1 // pred_fallthru
      _
    // Predicated region
    $region46: #{forward.1} parent=1 // pred_check
      _
    $region47: #{forward.1} parent=1 // pred_check_branch
      %2916 = sbr.rel (0) target = $region49
    $region48: #{forward.1} parent=1 // pred_region
      %2918 = dma.done [#allocation4], 128
    $region49: #{forward.1} parent=1 // pred_fallthru
      _
    %2919 = vsyncpa [#allocation3], 1
    %2920 = vsyncpa [#allocation6], 1
    %2921 = vsyncpa [#allocation4], 1

</llo_original>
